<compile_context>
chip_gen: v6e
topology: v6e:2x2x1
jax: 0.10.0
libtpu: 0.0.40
codegen_flags: <defaults>
</compile_context>

<pallas_src>
import jax
import jax.numpy as jnp
import numpy as np
from jax.experimental import pallas as pl
from jax.experimental.pallas import tpu as pltpu


# ----------------------------------------------------------------------------
# Kernel
# ----------------------------------------------------------------------------
def _fpn_kernel(x_ref, sc_ref, wlat_ref, blat_ref, w3_ref, shift_ref,
                out_ref, pad_ref):
    # x_ref    : (1, H, W, C)      top-down feature, NOT upsampled (NHWC)
    # sc_ref   : (1, H2*W2, Cin)   shortcut feature, spatially flattened
    # wlat_ref : (Cin, C)          1x1 lateral conv weight
    # blat_ref : (1, C)            1x1 lateral conv bias
    # w3_ref   : (9*C, C)          3x3 conv weight (tap-major), BN scale folded
    # shift_ref: (1, C)            folded BatchNorm shift
    # out_ref  : (1, H2*W2, C)
    # pad_ref  : VMEM scratch (H2+2, W2+2, C) f32, zero-padded conv input
    H, W, C = x_ref.shape[1], x_ref.shape[2], x_ref.shape[3]
    H2, W2 = 2 * H, 2 * W

    # Zero the padded scratch only once.  It persists across grid steps and
    # only its interior is rewritten below, so the 1-pixel border stays zero.
    # (The batch axis is "arbitrary", so program_id==0 is always executed
    # before any other step that relies on the zero border.)
    @pl.when(pl.program_id(0) == 0)
    def _():
        pad_ref[...] = jnp.zeros(pad_ref.shape, pad_ref.dtype)

    # ---- lateral 1x1 conv: channels matmul on the MXU + bias ----
    sc = sc_ref[0]                                           # (H2*W2, Cin)
    lat = jnp.dot(sc.astype(wlat_ref.dtype), wlat_ref[...],
                  preferred_element_type=jnp.float32)
    lat = (lat + blat_ref[...]).reshape(H2, W2, C)           # (H2, W2, C)

    # ---- in-kernel nearest 2x upsample of the top-down map, fused add ----
    x = x_ref[0].astype(jnp.float32)                         # (H, W, C)
    xw = jnp.broadcast_to(x[:, :, None, :], (H, W, 2, C)).reshape(H, W2, C)
    up = jnp.broadcast_to(xw[:, None, :, :], (H, 2, W2, C)).reshape(H2, W2, C)
    y = up + lat                                             # f32 (H2, W2, C)

    # ---- 3x3 conv (pad=1, no bias) as ONE im2col matmul with K = 9*C ----
    pad_ref[1:H2 + 1, 1:W2 + 1, :] = y
    taps = [pad_ref[ky:ky + H2, kx:kx + W2, :]               # each (H2, W2, C)
            for ky in range(3) for kx in range(3)]
    im2col = jnp.concatenate(taps, axis=-1).reshape(H2 * W2, 9 * C)
    acc = jnp.dot(im2col.astype(w3_ref.dtype), w3_ref[...],
                  preferred_element_type=jnp.float32)        # (H2*W2, C)

    # ---- BatchNorm (scale already folded into w3) + shift + ReLU ----
    out_ref[0] = jnp.maximum(acc + shift_ref[...], 0.0).astype(out_ref.dtype)


# ----------------------------------------------------------------------------
# Parameter handling (PyTorch state_dict layouts -> kernel layouts)
# ----------------------------------------------------------------------------
def init_fpn_params(key, in_channels, out_channels):
    """Deterministic synthetic parameters in PyTorch layouts."""
    ks = jax.random.split(key, 7)
    return {
        "lateral.weight": 0.3 * jax.random.normal(
            ks[0], (out_channels, in_channels, 1, 1), jnp.float32),
        "lateral.bias": 0.1 * jax.random.normal(
            ks[1], (out_channels,), jnp.float32),
        "conv.0.weight": 0.15 * jax.random.normal(
            ks[2], (out_channels, out_channels, 3, 3), jnp.float32),
        "conv.1.weight": 1.0 + 0.1 * jax.random.normal(          # gamma
            ks[3], (out_channels,), jnp.float32),
        "conv.1.bias": 0.1 * jax.random.normal(                  # beta
            ks[4], (out_channels,), jnp.float32),
        "conv.1.running_mean": 0.1 * jax.random.normal(
            ks[5], (out_channels,), jnp.float32),
        "conv.1.running_var": jnp.abs(jax.random.normal(
            ks[6], (out_channels,), jnp.float32)) + 0.5,
    }


def _fold_params(p, eps=1e-5, matmul_dtype=jnp.float32):
    c_out = p["lateral.weight"].shape[0]
    w_lat = p["lateral.weight"][:, :, 0, 0].T.astype(matmul_dtype)   # (Cin, C)
    b_lat = p["lateral.bias"].reshape(1, c_out).astype(jnp.float32)
    scale = p["conv.1.weight"] / jnp.sqrt(p["conv.1.running_var"] + eps)
    shift = (p["conv.1.bias"] - p["conv.1.running_mean"] * scale)
    # (C_out, C_in, 3, 3) -> (kh, kw, C_in, C_out) -> (9*C_in, C_out);
    # fold the per-output-channel BN scale into the (bias-free) conv weight.
    w3 = jnp.transpose(p["conv.0.weight"], (2, 3, 1, 0)).reshape(9 * c_out, c_out)
    w3 = (w3 * scale[None, :]).astype(matmul_dtype)
    return w_lat, b_lat, w3, shift.reshape(1, c_out).astype(jnp.float32)


# ----------------------------------------------------------------------------
# Wrapper
# ----------------------------------------------------------------------------
def fpn_pallas(x_nchw, shortcut_nchw, params, *, eps=1e-5,
               matmul_dtype=jnp.float32):
    """Forward pass matching the PyTorch Fpn module (inference)."""
    w_lat, b_lat, w3, shift = _fold_params(params, eps=eps,
                                           matmul_dtype=matmul_dtype)

    B, C, H, W = x_nchw.shape
    Cin = shortcut_nchw.shape[1]
    H2, W2 = 2 * H, 2 * W
    assert shortcut_nchw.shape == (B, Cin, H2, W2)

    # NCHW -> NHWC (channels on lanes); shortcut spatially flattened (free
    # contiguous reshape).  TODO(synk): drop these transposes when the
    # surrounding pipeline is already NHWC.
    x = jnp.transpose(x_nchw, (0, 2, 3, 1))                        # (B, H, W, C)
    s = jnp.transpose(shortcut_nchw, (0, 2, 3, 1)).reshape(B, H2 * W2, Cin)

    itemsize = 4
    flops = 2 * B * H2 * W2 * (Cin * C + 9 * C * C) + 5 * B * H2 * W2 * C
    bytes_accessed = itemsize * (B * H * W * C + B * H2 * W2 * Cin
                                 + B * H2 * W2 * C
                                 + int(w_lat.size) + int(w3.size) + 2 * C)

    grid_spec = pltpu.PrefetchScalarGridSpec(
        num_scalar_prefetch=0,
        grid=(B,),
        in_specs=[
            pl.BlockSpec((1, H, W, C), lambda b: (b, 0, 0, 0)),
            pl.BlockSpec((1, H2 * W2, Cin), lambda b: (b, 0, 0)),
            pl.BlockSpec((Cin, C), lambda b: (0, 0)),
            pl.BlockSpec((1, C), lambda b: (0, 0)),
            pl.BlockSpec((9 * C, C), lambda b: (0, 0)),
            pl.BlockSpec((1, C), lambda b: (0, 0)),
        ],
        out_specs=pl.BlockSpec((1, H2 * W2, C), lambda b: (b, 0, 0)),
        scratch_shapes=[pltpu.VMEM((H2 + 2, W2 + 2, C), jnp.float32)],
    )

    out = pl.pallas_call(
        _fpn_kernel,
        out_shape=jax.ShapeDtypeStruct((B, H2 * W2, C), jnp.float32),
        grid_spec=grid_spec,
        compiler_params=pltpu.CompilerParams(
            # "arbitrary": the scratch is zeroed once at program_id==0 and its
            # zero border is reused by later steps (cross-step dependence).
            dimension_semantics=("arbitrary",),
            vmem_limit_bytes=32 * 1024 * 1024,
        ),
        cost_estimate=pl.CostEstimate(flops=flops, transcendentals=0,
                                      bytes_accessed=bytes_accessed),
    )(x, s, w_lat, b_lat, w3, shift)

    # (B, H2*W2, C) -> NCHW for PyTorch parity.
    return jnp.transpose(out.reshape(B, H2, W2, C), (0, 3, 1, 2))


# ----------------------------------------------------------------------------
# Pure-JAX reference (un-fused math, PyTorch layouts) for correctness check
# ----------------------------------------------------------------------------
def fpn_reference(x_nchw, shortcut_nchw, params, eps=1e-5):
    up = jnp.repeat(jnp.repeat(x_nchw, 2, axis=2), 2, axis=3)
    lat = jnp.einsum('bihw,oi->bohw', shortcut_nchw,
                     params["lateral.weight"][:, :, 0, 0])
    lat = lat + params["lateral.bias"][None, :, None, None]
    y = up + lat
    H2, W2 = y.shape[2], y.shape[3]
    yp = jnp.pad(y, ((0, 0), (0, 0), (1, 1), (1, 1)))
    w = params["conv.0.weight"]
    conv = jnp.zeros_like(y)
    for ky in range(3):
        for kx in range(3):
            conv = conv + jnp.einsum('bihw,oi->bohw',
                                     yp[:, :, ky:ky + H2, kx:kx + W2],
                                     w[:, :, ky, kx])
    scale = params["conv.1.weight"] / jnp.sqrt(params["conv.1.running_var"] + eps)
    shift = params["conv.1.bias"] - params["conv.1.running_mean"] * scale
    out = conv * scale[None, :, None, None] + shift[None, :, None, None]
    return jnp.maximum(out, 0.0)


if __name__ == "__main__":
    in_channels, out_channels = 4, 8
    B, H, W = 2, 8, 8                      # top-down (input) spatial size
    H2, W2 = 2 * H, 2 * W                  # shortcut / output spatial size

    key = jax.random.PRNGKey(0)
    kx, ks, kp = jax.random.split(key, 3)
    # PyTorch-convention NCHW inputs
    x = jax.random.normal(kx, (B, out_channels, H, W), jnp.float32)          # `input`
    shortcut = jax.random.normal(ks, (B, in_channels, H2, W2), jnp.float32)  # `shortcut`
    params = init_fpn_params(kp, in_channels, out_channels)

    out = jax.block_until_ready(fpn_pallas(x, shortcut, params))
    ref = jax.block_until_ready(fpn_reference(x, shortcut, params))

    assert out.shape == (B, out_channels, H2, W2)
    np.testing.assert_allclose(np.asarray(out), np.asarray(ref),
                               rtol=1e-4, atol=1e-4)
    print("KERNEL_OK")
</pallas_src>

<mosaic_0001>
module attributes {stable_mosaic.version = 11 : i64} {
  func.func @_fpn_kernel(%arg0: i32, %arg1: memref<1x8x8x8xf32, #tpu.memory_space<vmem>>, %arg2: memref<1x256x4xf32, #tpu.memory_space<vmem>>, %arg3: memref<4x8xf32, #tpu.memory_space<vmem>>, %arg4: memref<1x8xf32, #tpu.memory_space<vmem>>, %arg5: memref<72x8xf32, #tpu.memory_space<vmem>>, %arg6: memref<1x8xf32, #tpu.memory_space<vmem>>, %arg7: memref<1x256x8xf32, #tpu.memory_space<vmem>>, %arg8: memref<18x18x8xf32, #tpu.memory_space<vmem>>) attributes {dimension_semantics = [#tpu.dimension_semantics<arbitrary>], iteration_bounds = array<i64: 2>, scalar_prefetch = 0 : i64, scratch_operands = 1 : i64, tpu.core_type = #tpu.core_type<tc>, window_params = [{transform_indices = @transform_0, window_bounds = array<i64: 1, 8, 8, 8>}, {transform_indices = @transform_1, window_bounds = array<i64: 1, 256, 4>}, {pipeline_mode = #tpu.pipeline_mode<synchronous>, transform_indices = @transform_2, window_bounds = array<i64: 4, 8>}, {pipeline_mode = #tpu.pipeline_mode<synchronous>, transform_indices = @transform_3, window_bounds = array<i64: 1, 8>}, {pipeline_mode = #tpu.pipeline_mode<synchronous>, transform_indices = @transform_4, window_bounds = array<i64: 72, 8>}, {pipeline_mode = #tpu.pipeline_mode<synchronous>, transform_indices = @transform_5, window_bounds = array<i64: 1, 8>}, {transform_indices = @transform_6, window_bounds = array<i64: 1, 256, 8>}]} {
    %c0_i32 = arith.constant 0 : i32
    %0 = arith.cmpi eq, %arg0, %c0_i32 : i32
    %1 = arith.extui %0 : i1 to i32
    %c0_i32_0 = arith.constant 0 : i32
    %2 = arith.cmpi ne, %1, %c0_i32_0 : i32
    scf.if %2 {
      %cst_48 = arith.constant 0.000000e+00 : f32
      %44 = vector.broadcast %cst_48 : f32 to vector<18x18x8xf32>
      %c0_49 = arith.constant 0 : index
      %c0_50 = arith.constant 0 : index
      %c0_51 = arith.constant 0 : index
      %45 = vector.load %arg8[%c0_49, %c0_50, %c0_51] : memref<18x18x8xf32, #tpu.memory_space<vmem>>, vector<18x18x8xf32>
      tpu.vector_store %arg8[%c0_49, %c0_50, %c0_51], %44 {strides = array<i32>} : memref<18x18x8xf32, #tpu.memory_space<vmem>>, vector<18x18x8xf32>,
    } else {
    }
    %c0 = arith.constant 0 : index
    %c0_1 = arith.constant 0 : index
    %c0_2 = arith.constant 0 : index
    %3 = vector.load %arg2[%c0, %c0_1, %c0_2] : memref<1x256x4xf32, #tpu.memory_space<vmem>>, vector<1x256x4xf32>
    %4 = vector.shape_cast %3 : vector<1x256x4xf32> to vector<256x4xf32>
    %c0_3 = arith.constant 0 : index
    %c0_4 = arith.constant 0 : index
    %5 = vector.load %arg3[%c0_3, %c0_4] : memref<4x8xf32, #tpu.memory_space<vmem>>, vector<4x8xf32>
    %cst = arith.constant dense<0.000000e+00> : vector<256x8xf32>
    %6 = tpu.matmul %4, %5, %cst {dimension_numbers = #tpu.dot_dimension_numbers<[1], [0], [0], [1], [0, 0, 1, 1], [], []>} : vector<256x4xf32>, vector<4x8xf32>, vector<256x8xf32> -> vector<256x8xf32>
    %c0_5 = arith.constant 0 : index
    %c0_6 = arith.constant 0 : index
    %7 = vector.load %arg4[%c0_5, %c0_6] : memref<1x8xf32, #tpu.memory_space<vmem>>, vector<1x8xf32>
    %8 = vector.broadcast %7 : vector<1x8xf32> to vector<256x8xf32>
    %9 = arith.addf %6, %8 : vector<256x8xf32>
    %10 = vector.shape_cast %9 : vector<256x8xf32> to vector<16x16x8xf32>
    %c0_7 = arith.constant 0 : index
    %c0_8 = arith.constant 0 : index
    %c0_9 = arith.constant 0 : index
    %c0_10 = arith.constant 0 : index
    %11 = vector.load %arg1[%c0_7, %c0_8, %c0_9, %c0_10] : memref<1x8x8x8xf32, #tpu.memory_space<vmem>>, vector<1x8x8x8xf32>
    %12 = vector.shape_cast %11 : vector<1x8x8x8xf32> to vector<8x8x8xf32>
    %13 = vector.shape_cast %12 : vector<8x8x8xf32> to vector<8x8x1x8xf32>
    %14 = vector.shape_cast %13 : vector<8x8x1x8xf32> to vector<8x8x1x8xf32>
    %15 = vector.broadcast %14 : vector<8x8x1x8xf32> to vector<8x8x2x8xf32>
    %16 = vector.shape_cast %15 : vector<8x8x2x8xf32> to vector<8x16x8xf32>
    %17 = vector.shape_cast %16 : vector<8x16x8xf32> to vector<8x1x16x8xf32>
    %18 = vector.shape_cast %17 : vector<8x1x16x8xf32> to vector<8x1x16x8xf32>
    %19 = vector.broadcast %18 : vector<8x1x16x8xf32> to vector<8x2x16x8xf32>
    %20 = vector.shape_cast %19 : vector<8x2x16x8xf32> to vector<16x16x8xf32>
    %21 = arith.addf %20, %10 : vector<16x16x8xf32>
    %c1 = arith.constant 1 : index
    %c1_11 = arith.constant 1 : index
    %c0_12 = arith.constant 0 : index
    %22 = vector.load %arg8[%c1, %c1_11, %c0_12] : memref<18x18x8xf32, #tpu.memory_space<vmem>>, vector<16x16x8xf32>
    tpu.vector_store %arg8[%c1, %c1_11, %c0_12], %21 {strides = array<i32>} : memref<18x18x8xf32, #tpu.memory_space<vmem>>, vector<16x16x8xf32>,
    %c0_13 = arith.constant 0 : index
    %c0_14 = arith.constant 0 : index
    %c0_15 = arith.constant 0 : index
    %23 = vector.load %arg8[%c0_13, %c0_14, %c0_15] : memref<18x18x8xf32, #tpu.memory_space<vmem>>, vector<16x16x8xf32>
    %c0_16 = arith.constant 0 : index
    %c1_17 = arith.constant 1 : index
    %c0_18 = arith.constant 0 : index
    %24 = vector.load %arg8[%c0_16, %c1_17, %c0_18] : memref<18x18x8xf32, #tpu.memory_space<vmem>>, vector<16x16x8xf32>
    %c0_19 = arith.constant 0 : index
    %c2 = arith.constant 2 : index
    %c0_20 = arith.constant 0 : index
    %25 = vector.load %arg8[%c0_19, %c2, %c0_20] : memref<18x18x8xf32, #tpu.memory_space<vmem>>, vector<16x16x8xf32>
    %c1_21 = arith.constant 1 : index
    %c0_22 = arith.constant 0 : index
    %c0_23 = arith.constant 0 : index
    %26 = vector.load %arg8[%c1_21, %c0_22, %c0_23] : memref<18x18x8xf32, #tpu.memory_space<vmem>>, vector<16x16x8xf32>
    %c1_24 = arith.constant 1 : index
    %c1_25 = arith.constant 1 : index
    %c0_26 = arith.constant 0 : index
    %27 = vector.load %arg8[%c1_24, %c1_25, %c0_26] : memref<18x18x8xf32, #tpu.memory_space<vmem>>, vector<16x16x8xf32>
    %c1_27 = arith.constant 1 : index
    %c2_28 = arith.constant 2 : index
    %c0_29 = arith.constant 0 : index
    %28 = vector.load %arg8[%c1_27, %c2_28, %c0_29] : memref<18x18x8xf32, #tpu.memory_space<vmem>>, vector<16x16x8xf32>
    %c2_30 = arith.constant 2 : index
    %c0_31 = arith.constant 0 : index
    %c0_32 = arith.constant 0 : index
    %29 = vector.load %arg8[%c2_30, %c0_31, %c0_32] : memref<18x18x8xf32, #tpu.memory_space<vmem>>, vector<16x16x8xf32>
    %c2_33 = arith.constant 2 : index
    %c1_34 = arith.constant 1 : index
    %c0_35 = arith.constant 0 : index
    %30 = vector.load %arg8[%c2_33, %c1_34, %c0_35] : memref<18x18x8xf32, #tpu.memory_space<vmem>>, vector<16x16x8xf32>
    %c2_36 = arith.constant 2 : index
    %c2_37 = arith.constant 2 : index
    %c0_38 = arith.constant 0 : index
    %31 = vector.load %arg8[%c2_36, %c2_37, %c0_38] : memref<18x18x8xf32, #tpu.memory_space<vmem>>, vector<16x16x8xf32>
    %32 = tpu.concatenate %23, %24, %25, %26, %27, %28, %29, %30, %31 in 2 : vector<16x16x8xf32>, vector<16x16x8xf32>, vector<16x16x8xf32>, vector<16x16x8xf32>, vector<16x16x8xf32>, vector<16x16x8xf32>, vector<16x16x8xf32>, vector<16x16x8xf32>, vector<16x16x8xf32> -> vector<16x16x72xf32>
    %33 = vector.shape_cast %32 : vector<16x16x72xf32> to vector<256x72xf32>
    %c0_39 = arith.constant 0 : index
    %c0_40 = arith.constant 0 : index
    %34 = vector.load %arg5[%c0_39, %c0_40] : memref<72x8xf32, #tpu.memory_space<vmem>>, vector<72x8xf32>
    %cst_41 = arith.constant dense<0.000000e+00> : vector<256x8xf32>
    %35 = tpu.matmul %33, %34, %cst_41 {dimension_numbers = #tpu.dot_dimension_numbers<[1], [0], [0], [1], [0, 0, 1, 1], [], []>} : vector<256x72xf32>, vector<72x8xf32>, vector<256x8xf32> -> vector<256x8xf32>
    %c0_42 = arith.constant 0 : index
    %c0_43 = arith.constant 0 : index
    %36 = vector.load %arg6[%c0_42, %c0_43] : memref<1x8xf32, #tpu.memory_space<vmem>>, vector<1x8xf32>
    %37 = vector.broadcast %36 : vector<1x8xf32> to vector<256x8xf32>
    %38 = arith.addf %35, %37 : vector<256x8xf32>
    %cst_44 = arith.constant 0.000000e+00 : f32
    %39 = vector.broadcast %cst_44 : f32 to vector<256x8xf32>
    %40 = arith.maximumf %38, %39 : vector<256x8xf32>
    %c0_45 = arith.constant 0 : index
    %c0_46 = arith.constant 0 : index
    %c0_47 = arith.constant 0 : index
    %41 = vector.load %arg7[%c0_45, %c0_46, %c0_47] : memref<1x256x8xf32, #tpu.memory_space<vmem>>, vector<1x256x8xf32>
    %42 = vector.shape_cast %41 : vector<1x256x8xf32> to vector<256x8xf32>
    %43 = vector.shape_cast %40 : vector<256x8xf32> to vector<1x256x8xf32>
    tpu.vector_store %arg7[%c0_45, %c0_46, %c0_47], %43 {strides = array<i32>} : memref<1x256x8xf32, #tpu.memory_space<vmem>>, vector<1x256x8xf32>,
    return
  }
  func.func @transform_0(%arg0: i32) -> (i32, i32, i32, i32) {
    %c0_i32 = arith.constant 0 : i32
    %c0_i32_0 = arith.constant 0 : i32
    %c0_i32_1 = arith.constant 0 : i32
    %c0_i32_2 = arith.constant 0 : i32
    return %arg0, %c0_i32, %c0_i32_0, %c0_i32_1 : i32, i32, i32, i32
  }
  func.func @transform_1(%arg0: i32) -> (i32, i32, i32) {
    %c0_i32 = arith.constant 0 : i32
    %c0_i32_0 = arith.constant 0 : i32
    %c0_i32_1 = arith.constant 0 : i32
    return %arg0, %c0_i32, %c0_i32_0 : i32, i32, i32
  }
  func.func @transform_2(%arg0: i32) -> (i32, i32) {
    %c0_i32 = arith.constant 0 : i32
    %c0_i32_0 = arith.constant 0 : i32
    %c0_i32_1 = arith.constant 0 : i32
    return %c0_i32, %c0_i32_0 : i32, i32
  }
  func.func @transform_3(%arg0: i32) -> (i32, i32) {
    %c0_i32 = arith.constant 0 : i32
    %c0_i32_0 = arith.constant 0 : i32
    %c0_i32_1 = arith.constant 0 : i32
    return %c0_i32, %c0_i32_0 : i32, i32
  }
  func.func @transform_4(%arg0: i32) -> (i32, i32) {
    %c0_i32 = arith.constant 0 : i32
    %c0_i32_0 = arith.constant 0 : i32
    %c0_i32_1 = arith.constant 0 : i32
    return %c0_i32, %c0_i32_0 : i32, i32
  }
  func.func @transform_5(%arg0: i32) -> (i32, i32) {
    %c0_i32 = arith.constant 0 : i32
    %c0_i32_0 = arith.constant 0 : i32
    %c0_i32_1 = arith.constant 0 : i32
    return %c0_i32, %c0_i32_0 : i32, i32
  }
  func.func @transform_6(%arg0: i32) -> (i32, i32, i32) {
    %c0_i32 = arith.constant 0 : i32
    %c0_i32_0 = arith.constant 0 : i32
    %c0_i32_1 = arith.constant 0 : i32
    return %arg0, %c0_i32, %c0_i32_0 : i32, i32, i32
  }
}

</mosaic_0001>

<llo_original>
// kernel: tpu_custom_call.1
$region0: #{tpu_custom_call.1}
  #allocation0 [shape = 'u32[]', space=smem, size = 0x4, offset = 0x4, fixed_abs, tag = 'smem constant byte address 0x4 - core index']
  #allocation1 [shape = 'u32[144,128]{1,0:T(1,128)}', space=vmem, size = 0x12000, scoped, tag = 'internal scratch']
  #allocation2 [shape = 'f32[18,18,8]{2,1,0:T(8,128)}', space=vmem, size = 0x36000, scoped, tag = 'scratch operand']
  %s0 = inlined_call_operand.vmem [shape: f32[2,8,8,8], index: 0, kind: input, shape index: {}]
  %s1 = inlined_call_operand.vmem [shape: f32[2,256,4], index: 1, kind: input, shape index: {}]
  %s2 = inlined_call_operand.vmem [shape: f32[4,8], index: 2, kind: input, shape index: {}]
  %s3 = inlined_call_operand.vmem [shape: f32[1,8], index: 3, kind: input, shape index: {}]
  %s4 = inlined_call_operand.vmem [shape: f32[72,8], index: 4, kind: input, shape index: {}]
  %s5 = inlined_call_operand.vmem [shape: f32[1,8], index: 5, kind: input, shape index: {}]
  %s6 = inlined_call_operand.vmem [shape: f32[2,256,8], index: 6, kind: output, shape index: {}]
  %s7 = sld [smem:[#allocation0]]
  $region61: #{tpu_custom_call.1} parent=0
    _
  %s9 = ssub.s32 1, %s7
  %s10 = scalar_select 0, %s9, %s7
  loop: start=0, step=1, limit=4
  $region2: #{tpu_custom_call.1} parent=0 // loop_pre_header
    _
  $region3: #{tpu_custom_call.1} parent=0 // loop_header
    %s12 = sphi 0, %s16
    %p13 = scmp.ge.s32.totalorder %s12, 4
    %s22 = sphi 0, %s24
    %s25 = sphi 0, %s22
    %s26 = sphi 0, %s25
    %s42 = sphi 0, %s26
    %s48 = sphi 0, %s50
    %s51 = sphi 0, %s48
    %s52 = sphi 0, %s51
    %s68 = sphi 0, %s52
    %s72 = sphi 0, %s72
    %s74 = sphi 0, %s72
    %s75 = sphi 0, %s74
    %s89 = sphi 0, %s75
    %s93 = sphi 0, %s93
    %s95 = sphi 0, %s93
    %s96 = sphi 0, %s95
    %s110 = sphi 0, %s96
    %s114 = sphi 0, %s114
    %s116 = sphi 0, %s114
    %s117 = sphi 0, %s116
    %s131 = sphi 0, %s117
    %s135 = sphi 0, %s135
    %s137 = sphi 0, %s135
    %s138 = sphi 0, %s137
    %s152 = sphi 0, %s138
    %s158 = sphi 0, %s160
    %s161 = sphi 0, %s158
    %s162 = sphi 0, %s161
    %s178 = sphi 0, %s162
  $region4: #{tpu_custom_call.1} parent=0 // loop_header_branch
    %15 = sbr.rel (%p13) target = $region8
  $region5: #{tpu_custom_call.1} parent=0 // loop_body
    %s17 = ssub.s32 %s12, 1
    %s18 = ssub.s32 %s12, 2
    %s19 = sadd.s32 %s12, 1
    %s20 = ssub.s32 %s12, %s19
    %p21 = scmp.eq.s32.totalorder %s20, 0
    %s23 = sadd.s32 %s22, 1
    %s24 = scalar_select %p21, %s22, %s23
    %p27 = pneg %p21
    %p28 = scmp.eq.s32.totalorder %s12, 1
    %p29 = por %p27, %p28
    %p30 = scmp.ne.s32.totalorder %s22, %s25
    %p31 = scmp.eq.s32.totalorder %s12, 0
    %p32 = por %p30, %p31
    %p33 = scmp.ne.s32.totalorder %s22, %s25
    %p34 = scmp.eq.s32.totalorder %s17, 1
    %p35 = por %p33, %p34
    %p36 = scmp.ne.s32.totalorder %s25, %s26
    %p37 = scmp.eq.s32.totalorder %s17, 0
    %p38 = por %p36, %p37
    %p39 = scmp.ne.s32.totalorder %s25, %s26
    %p40 = scmp.eq.s32.totalorder %s18, 1
    %p41 = por %p39, %p40
    %p43 = scmp.ne.s32.totalorder %s26, %s42
    %p44 = scmp.eq.s32.totalorder %s18, 0
    %p45 = por %p43, %p44
    %s46 = ssub.s32 %s12, %s19
    %p47 = scmp.eq.s32.totalorder %s46, 0
    %s49 = sadd.s32 %s48, 1
    %s50 = scalar_select %p47, %s48, %s49
    %p53 = pneg %p47
    %p54 = scmp.eq.s32.totalorder %s12, 1
    %p55 = por %p53, %p54
    %p56 = scmp.ne.s32.totalorder %s48, %s51
    %p57 = scmp.eq.s32.totalorder %s12, 0
    %p58 = por %p56, %p57
    %p59 = scmp.ne.s32.totalorder %s48, %s51
    %p60 = scmp.eq.s32.totalorder %s17, 1
    %p61 = por %p59, %p60
    %p62 = scmp.ne.s32.totalorder %s51, %s52
    %p63 = scmp.eq.s32.totalorder %s17, 0
    %p64 = por %p62, %p63
    %p65 = scmp.ne.s32.totalorder %s51, %s52
    %p66 = scmp.eq.s32.totalorder %s18, 1
    %p67 = por %p65, %p66
    %p69 = scmp.ne.s32.totalorder %s52, %s68
    %p70 = scmp.eq.s32.totalorder %s18, 0
    %p71 = por %p69, %p70
    %s73 = sadd.s32 %s72, 1
    %p76 = scmp.eq.s32.totalorder %s12, 1
    %p77 = scmp.ne.s32.totalorder %s72, %s74
    %p78 = scmp.eq.s32.totalorder %s12, 0
    %p79 = por %p77, %p78
    %p80 = scmp.ne.s32.totalorder %s72, %s74
    %p81 = scmp.eq.s32.totalorder %s17, 1
    %p82 = por %p80, %p81
    %p83 = scmp.ne.s32.totalorder %s74, %s75
    %p84 = scmp.eq.s32.totalorder %s17, 0
    %p85 = por %p83, %p84
    %p86 = scmp.ne.s32.totalorder %s74, %s75
    %p87 = scmp.eq.s32.totalorder %s18, 1
    %p88 = por %p86, %p87
    %p90 = scmp.ne.s32.totalorder %s75, %s89
    %p91 = scmp.eq.s32.totalorder %s18, 0
    %p92 = por %p90, %p91
    %s94 = sadd.s32 %s93, 1
    %p97 = scmp.eq.s32.totalorder %s12, 1
    %p98 = scmp.ne.s32.totalorder %s93, %s95
    %p99 = scmp.eq.s32.totalorder %s12, 0
    %p100 = por %p98, %p99
    %p101 = scmp.ne.s32.totalorder %s93, %s95
    %p102 = scmp.eq.s32.totalorder %s17, 1
    %p103 = por %p101, %p102
    %p104 = scmp.ne.s32.totalorder %s95, %s96
    %p105 = scmp.eq.s32.totalorder %s17, 0
    %p106 = por %p104, %p105
    %p107 = scmp.ne.s32.totalorder %s95, %s96
    %p108 = scmp.eq.s32.totalorder %s18, 1
    %p109 = por %p107, %p108
    %p111 = scmp.ne.s32.totalorder %s96, %s110
    %p112 = scmp.eq.s32.totalorder %s18, 0
    %p113 = por %p111, %p112
    %s115 = sadd.s32 %s114, 1
    %p118 = scmp.eq.s32.totalorder %s12, 1
    %p119 = scmp.ne.s32.totalorder %s114, %s116
    %p120 = scmp.eq.s32.totalorder %s12, 0
    %p121 = por %p119, %p120
    %p122 = scmp.ne.s32.totalorder %s114, %s116
    %p123 = scmp.eq.s32.totalorder %s17, 1
    %p124 = por %p122, %p123
    %p125 = scmp.ne.s32.totalorder %s116, %s117
    %p126 = scmp.eq.s32.totalorder %s17, 0
    %p127 = por %p125, %p126
    %p128 = scmp.ne.s32.totalorder %s116, %s117
    %p129 = scmp.eq.s32.totalorder %s18, 1
    %p130 = por %p128, %p129
    %p132 = scmp.ne.s32.totalorder %s117, %s131
    %p133 = scmp.eq.s32.totalorder %s18, 0
    %p134 = por %p132, %p133
    %s136 = sadd.s32 %s135, 1
    %p139 = scmp.eq.s32.totalorder %s12, 1
    %p140 = scmp.ne.s32.totalorder %s135, %s137
    %p141 = scmp.eq.s32.totalorder %s12, 0
    %p142 = por %p140, %p141
    %p143 = scmp.ne.s32.totalorder %s135, %s137
    %p144 = scmp.eq.s32.totalorder %s17, 1
    %p145 = por %p143, %p144
    %p146 = scmp.ne.s32.totalorder %s137, %s138
    %p147 = scmp.eq.s32.totalorder %s17, 0
    %p148 = por %p146, %p147
    %p149 = scmp.ne.s32.totalorder %s137, %s138
    %p150 = scmp.eq.s32.totalorder %s18, 1
    %p151 = por %p149, %p150
    %p153 = scmp.ne.s32.totalorder %s138, %s152
    %p154 = scmp.eq.s32.totalorder %s18, 0
    %p155 = por %p153, %p154
    %s156 = ssub.s32 %s12, %s19
    %p157 = scmp.eq.s32.totalorder %s156, 0
    %s159 = sadd.s32 %s158, 1
    %s160 = scalar_select %p157, %s158, %s159
    %p163 = pneg %p157
    %p164 = scmp.eq.s32.totalorder %s12, 1
    %p165 = por %p163, %p164
    %p166 = scmp.ne.s32.totalorder %s158, %s161
    %p167 = scmp.eq.s32.totalorder %s12, 0
    %p168 = por %p166, %p167
    %p169 = scmp.ne.s32.totalorder %s158, %s161
    %p170 = scmp.eq.s32.totalorder %s17, 1
    %p171 = por %p169, %p170
    %p172 = scmp.ne.s32.totalorder %s161, %s162
    %p173 = scmp.eq.s32.totalorder %s17, 0
    %p174 = por %p172, %p173
    %p175 = scmp.ne.s32.totalorder %s161, %s162
    %p176 = scmp.eq.s32.totalorder %s18, 1
    %p177 = por %p175, %p176
    %p179 = scmp.ne.s32.totalorder %s162, %s178
    %p180 = scmp.eq.s32.totalorder %s18, 0
    %p181 = por %p179, %p180
    %p182 = scmp.le.s32.totalorder 1, %s12
    %p183 = scmp.lt.s32.totalorder %s12, 3
    %p184 = pnand %p182, %p183
    %p185 = pneg %p184
    // Predicated region
    $region9: #{tpu_custom_call.1} parent=5 // pred_check
      _
    $region10: #{tpu_custom_call.1} parent=5 // pred_check_branch
      %187 = sbr.rel (%p184) target = $region12
    $region11: #{tpu_custom_call.1} parent=5 // pred_region
      %s188 = ssub.s32 %s12, 1
      // Predicated region
      $region13: #{tpu_custom_call.1} parent=11 // pred_check
        %p189 = pneg %p85
      $region14: #{tpu_custom_call.1} parent=11 // pred_check_branch
        %191 = sbr.rel (%p189) target = $region16
      $region15: #{tpu_custom_call.1} parent=11 // pred_region
        _
      $region16: #{tpu_custom_call.1} parent=11 // pred_fallthru
        _
      // Predicated region
      $region17: #{tpu_custom_call.1} parent=11 // pred_check
        %p192 = pneg %p106
      $region18: #{tpu_custom_call.1} parent=11 // pred_check_branch
        %194 = sbr.rel (%p192) target = $region20
      $region19: #{tpu_custom_call.1} parent=11 // pred_region
        _
      $region20: #{tpu_custom_call.1} parent=11 // pred_fallthru
        _
      // Predicated region
      $region21: #{tpu_custom_call.1} parent=11 // pred_check
        %p195 = pneg %p127
      $region22: #{tpu_custom_call.1} parent=11 // pred_check_branch
        %197 = sbr.rel (%p195) target = $region24
      $region23: #{tpu_custom_call.1} parent=11 // pred_region
        _
      $region24: #{tpu_custom_call.1} parent=11 // pred_fallthru
        _
      // Predicated region
      $region25: #{tpu_custom_call.1} parent=11 // pred_check
        %p198 = pneg %p148
      $region26: #{tpu_custom_call.1} parent=11 // pred_check_branch
        %200 = sbr.rel (%p198) target = $region28
      $region27: #{tpu_custom_call.1} parent=11 // pred_region
        _
      $region28: #{tpu_custom_call.1} parent=11 // pred_fallthru
        _
    $region12: #{tpu_custom_call.1} parent=5 // pred_fallthru
      _
    %p201 = scmp.lt.s32.totalorder %s12, 2
    // Predicated region
    $region29: #{tpu_custom_call.1} parent=5 // pred_check
      %p202 = pneg %p201
    $region30: #{tpu_custom_call.1} parent=5 // pred_check_branch
      %204 = sbr.rel (%p202) target = $region32
    $region31: #{tpu_custom_call.1} parent=5 // pred_region
      // Predicated region
      $region33: #{tpu_custom_call.1} parent=31 // pred_check
        %p205 = pneg %p32
      $region34: #{tpu_custom_call.1} parent=31 // pred_check_branch
        %207 = sbr.rel (%p205) target = $region36
      $region35: #{tpu_custom_call.1} parent=31 // pred_region
        %p208 = scmp.lt.s32.totalorder %s12, 1
        %s209 = scalar_select %p208, %s12, 1
        %s210 = smul.addr %s209, 8
        %s211 = smul.addr %s210, 8
        %s212 = scalar_lea.vmem %s0, %s211
      $region36: #{tpu_custom_call.1} parent=31 // pred_fallthru
        _
      // Predicated region
      $region37: #{tpu_custom_call.1} parent=31 // pred_check
        %p213 = pneg %p58
      $region38: #{tpu_custom_call.1} parent=31 // pred_check_branch
        %215 = sbr.rel (%p213) target = $region40
      $region39: #{tpu_custom_call.1} parent=31 // pred_region
        %p216 = scmp.lt.s32.totalorder %s12, 1
        %s217 = scalar_select %p216, %s12, 1
        %s218 = smul.addr %s217, 32
        %s219 = smul.addr %s218, 8
        %s220 = scalar_lea.vmem %s1, %s219
      $region40: #{tpu_custom_call.1} parent=31 // pred_fallthru
        _
    $region32: #{tpu_custom_call.1} parent=5 // pred_fallthru
      _
    %p221 = scmp.le.s32.totalorder 1, %s12
    %p222 = scmp.lt.s32.totalorder %s12, 3
    %p223 = pnand %p221, %p222
    %p224 = pneg %p223
    // Predicated region
    $region41: #{tpu_custom_call.1} parent=5 // pred_check
      _
    $region42: #{tpu_custom_call.1} parent=5 // pred_check_branch
      %226 = sbr.rel (%p223) target = $region44
    $region43: #{tpu_custom_call.1} parent=5 // pred_region
      %s227 = ssub.s32 %s12, 1
      %p228 = scmp.lt.s32.totalorder %s17, 1
      %s229 = scalar_select %p228, %s17, 1
      %s230 = smul.addr %s229, 8
      %s231 = smul.addr %s230, 8
      %s232 = scalar_lea.vmem %s0, %s231
      %p233 = pneg %p38
      %p234 = pneg %p35
      %p235 = scmp.lt.s32.totalorder %s17, 1
      %s236 = scalar_select %p235, %s17, 1
      %s237 = smul.addr %s236, 32
      %s238 = smul.addr %s237, 8
      %s239 = scalar_lea.vmem %s1, %s238
      %p240 = pneg %p64
      %p241 = pneg %p61
      %p242 = pneg %p85
      %p243 = pneg %p82
      %p244 = pneg %p106
      %p245 = pneg %p103
      %p246 = pneg %p127
      %p247 = pneg %p124
      %p248 = pneg %p148
      %p249 = pneg %p145
      %p250 = pneg %p174
      %p251 = pneg %p171
      %p252 = scmp.lt.s32.totalorder %s17, 1
      %s253 = scalar_select %p252, %s17, 1
      %s254 = smul.addr %s253, 32
      %s255 = smul.addr %s254, 8
      %s256 = scalar_lea.vmem %s6, %s255
      %p257 = scmp.lt.s32.totalorder %s17, 1
      %s258 = scalar_select %p257, %s17, 1
      %s259 = smul.addr %s258, 8
      %s260 = smul.addr %s259, 8
      %s261 = scalar_lea.vmem %s0, %s260
      %p262 = scmp.lt.s32.totalorder %s17, 1
      %s263 = scalar_select %p262, %s17, 1
      %s264 = smul.addr %s263, 32
      %s265 = smul.addr %s264, 8
      %s266 = scalar_lea.vmem %s1, %s265
      %p267 = scmp.lt.s32.totalorder %s17, 1
      %s268 = scalar_select %p267, %s17, 1
      %s269 = smul.addr %s268, 32
      %s270 = smul.addr %s269, 8
      %s271 = scalar_lea.vmem %s6, %s270
      %p272 = scmp.eq.s32.totalorder %s17, 0
      // Predicated region
      $region45: #{tpu_custom_call.1} parent=43 // pred_check
        %p273 = pneg %p272
      $region46: #{tpu_custom_call.1} parent=43 // pred_check_branch
        %275 = sbr.rel (%p273) target = $region48
      $region47: #{tpu_custom_call.1} parent=43 // pred_region
        %vm276 = vcmask 64512
        %277 = vst.msk [vmem:[#allocation2] sm:$0xff] %vm276, 0.0
        %278 = vst.msk [vmem:[#allocation2 + $0x8] sm:$0xff] %vm276, 0.0
        %vm279 = vcmask 58368
        %280 = vst.msk [vmem:[#allocation2 + $0x10] sm:$0x3] %vm279, 0.0
        %281 = vst.msk [vmem:[#allocation2 + $0x18] sm:$0xff] %vm276, 0.0
        %282 = vst.msk [vmem:[#allocation2 + $0x20] sm:$0xff] %vm276, 0.0
        %283 = vst.msk [vmem:[#allocation2 + $0x28] sm:$0x3] %vm279, 0.0
        %284 = vst.msk [vmem:[#allocation2 + $0x30] sm:$0xff] %vm276, 0.0
        %285 = vst.msk [vmem:[#allocation2 + $0x38] sm:$0xff] %vm276, 0.0
        %286 = vst.msk [vmem:[#allocation2 + $0x40] sm:$0x3] %vm279, 0.0
        %287 = vst.msk [vmem:[#allocation2 + $0x48] sm:$0xff] %vm276, 0.0
        %288 = vst.msk [vmem:[#allocation2 + $0x50] sm:$0xff] %vm276, 0.0
        %289 = vst.msk [vmem:[#allocation2 + $0x58] sm:$0x3] %vm279, 0.0
        %290 = vst.msk [vmem:[#allocation2 + $0x60] sm:$0xff] %vm276, 0.0
        %291 = vst.msk [vmem:[#allocation2 + $0x68] sm:$0xff] %vm276, 0.0
        %292 = vst.msk [vmem:[#allocation2 + $0x70] sm:$0x3] %vm279, 0.0
        %293 = vst.msk [vmem:[#allocation2 + $0x78] sm:$0xff] %vm276, 0.0
        %294 = vst.msk [vmem:[#allocation2 + $0x80] sm:$0xff] %vm276, 0.0
        %295 = vst.msk [vmem:[#allocation2 + $0x88] sm:$0x3] %vm279, 0.0
        %296 = vst.msk [vmem:[#allocation2 + $0x90] sm:$0xff] %vm276, 0.0
        %297 = vst.msk [vmem:[#allocation2 + $0x98] sm:$0xff] %vm276, 0.0
        %298 = vst.msk [vmem:[#allocation2 + $0xa0] sm:$0x3] %vm279, 0.0
        %299 = vst.msk [vmem:[#allocation2 + $0xa8] sm:$0xff] %vm276, 0.0
        %300 = vst.msk [vmem:[#allocation2 + $0xb0] sm:$0xff] %vm276, 0.0
        %301 = vst.msk [vmem:[#allocation2 + $0xb8] sm:$0x3] %vm279, 0.0
        %302 = vst.msk [vmem:[#allocation2 + $0xc0] sm:$0xff] %vm276, 0.0
        %303 = vst.msk [vmem:[#allocation2 + $0xc8] sm:$0xff] %vm276, 0.0
        %304 = vst.msk [vmem:[#allocation2 + $0xd0] sm:$0x3] %vm279, 0.0
        %305 = vst.msk [vmem:[#allocation2 + $0xd8] sm:$0xff] %vm276, 0.0
        %306 = vst.msk [vmem:[#allocation2 + $0xe0] sm:$0xff] %vm276, 0.0
        %307 = vst.msk [vmem:[#allocation2 + $0xe8] sm:$0x3] %vm279, 0.0
        %308 = vst.msk [vmem:[#allocation2 + $0xf0] sm:$0xff] %vm276, 0.0
        %309 = vst.msk [vmem:[#allocation2 + $0xf8] sm:$0xff] %vm276, 0.0
        %310 = vst.msk [vmem:[#allocation2 + $0x100] sm:$0x3] %vm279, 0.0
        %311 = vst.msk [vmem:[#allocation2 + $0x108] sm:$0xff] %vm276, 0.0
        %312 = vst.msk [vmem:[#allocation2 + $0x110] sm:$0xff] %vm276, 0.0
        %313 = vst.msk [vmem:[#allocation2 + $0x118] sm:$0x3] %vm279, 0.0
        %314 = vst.msk [vmem:[#allocation2 + $0x120] sm:$0xff] %vm276, 0.0
        %315 = vst.msk [vmem:[#allocation2 + $0x128] sm:$0xff] %vm276, 0.0
        %316 = vst.msk [vmem:[#allocation2 + $0x130] sm:$0x3] %vm279, 0.0
        %317 = vst.msk [vmem:[#allocation2 + $0x138] sm:$0xff] %vm276, 0.0
        %318 = vst.msk [vmem:[#allocation2 + $0x140] sm:$0xff] %vm276, 0.0
        %319 = vst.msk [vmem:[#allocation2 + $0x148] sm:$0x3] %vm279, 0.0
        %320 = vst.msk [vmem:[#allocation2 + $0x150] sm:$0xff] %vm276, 0.0
        %321 = vst.msk [vmem:[#allocation2 + $0x158] sm:$0xff] %vm276, 0.0
        %322 = vst.msk [vmem:[#allocation2 + $0x160] sm:$0x3] %vm279, 0.0
        %323 = vst.msk [vmem:[#allocation2 + $0x168] sm:$0xff] %vm276, 0.0
        %324 = vst.msk [vmem:[#allocation2 + $0x170] sm:$0xff] %vm276, 0.0
        %325 = vst.msk [vmem:[#allocation2 + $0x178] sm:$0x3] %vm279, 0.0
        %326 = vst.msk [vmem:[#allocation2 + $0x180] sm:$0xff] %vm276, 0.0
        %327 = vst.msk [vmem:[#allocation2 + $0x188] sm:$0xff] %vm276, 0.0
        %328 = vst.msk [vmem:[#allocation2 + $0x190] sm:$0x3] %vm279, 0.0
        %329 = vst.msk [vmem:[#allocation2 + $0x198] sm:$0xff] %vm276, 0.0
        %330 = vst.msk [vmem:[#allocation2 + $0x1a0] sm:$0xff] %vm276, 0.0
        %331 = vst.msk [vmem:[#allocation2 + $0x1a8] sm:$0x3] %vm279, 0.0
      $region48: #{tpu_custom_call.1} parent=43 // pred_fallthru
        _
      %v332 = vld [vmem:[%s266] sm:$0xff]
      %v333 = vld [vmem:[%s266 + $0x8] sm:$0xff]
      %v334 = vld [vmem:[%s266 + $0x10] sm:$0xff]
      %v335 = vld [vmem:[%s266 + $0x18] sm:$0xff]
      %v336 = vld [vmem:[%s266 + $0x20] sm:$0xff]
      %v337 = vld [vmem:[%s266 + $0x28] sm:$0xff]
      %v338 = vld [vmem:[%s266 + $0x30] sm:$0xff]
      %v339 = vld [vmem:[%s266 + $0x38] sm:$0xff]
      %v340 = vld [vmem:[%s266 + $0x40] sm:$0xff]
      %v341 = vld [vmem:[%s266 + $0x48] sm:$0xff]
      %v342 = vld [vmem:[%s266 + $0x50] sm:$0xff]
      %v343 = vld [vmem:[%s266 + $0x58] sm:$0xff]
      %v344 = vld [vmem:[%s266 + $0x60] sm:$0xff]
      %v345 = vld [vmem:[%s266 + $0x68] sm:$0xff]
      %v346 = vld [vmem:[%s266 + $0x70] sm:$0xff]
      %v347 = vld [vmem:[%s266 + $0x78] sm:$0xff]
      %v348 = vld [vmem:[%s266 + $0x80] sm:$0xff]
      %v349 = vld [vmem:[%s266 + $0x88] sm:$0xff]
      %v350 = vld [vmem:[%s266 + $0x90] sm:$0xff]
      %v351 = vld [vmem:[%s266 + $0x98] sm:$0xff]
      %v352 = vld [vmem:[%s266 + $0xa0] sm:$0xff]
      %v353 = vld [vmem:[%s266 + $0xa8] sm:$0xff]
      %v354 = vld [vmem:[%s266 + $0xb0] sm:$0xff]
      %v355 = vld [vmem:[%s266 + $0xb8] sm:$0xff]
      %v356 = vld [vmem:[%s266 + $0xc0] sm:$0xff]
      %v357 = vld [vmem:[%s266 + $0xc8] sm:$0xff]
      %v358 = vld [vmem:[%s266 + $0xd0] sm:$0xff]
      %v359 = vld [vmem:[%s266 + $0xd8] sm:$0xff]
      %v360 = vld [vmem:[%s266 + $0xe0] sm:$0xff]
      %v361 = vld [vmem:[%s266 + $0xe8] sm:$0xff]
      %v362 = vld [vmem:[%s266 + $0xf0] sm:$0xff]
      %v363 = vld [vmem:[%s266 + $0xf8] sm:$0xff]
      %v364 = vld [vmem:[%s2] sm:$0xf]
      %v365 = vld [vmem:[%s3] sm:$0x1]
      %v367 = vlaneseq
      %v368 = vshrl.u32 %v367, 7
      %v369 = vsub.s32 0, %v368
      %v370 = vrot.slane %v365, %v369
      %vm372 = vcmask 31744
      %v374 = vsel %vm372, %v332, 0
      %v377 = vsel %vm372, %v333, 0
      %v380 = vsel %vm372, %v334, 0
      %v383 = vsel %vm372, %v335, 0
      %v386 = vsel %vm372, %v336, 0
      %v389 = vsel %vm372, %v337, 0
      %v392 = vsel %vm372, %v338, 0
      %v395 = vsel %vm372, %v339, 0
      %v398 = vsel %vm372, %v340, 0
      %v401 = vsel %vm372, %v341, 0
      %v404 = vsel %vm372, %v342, 0
      %v407 = vsel %vm372, %v343, 0
      %v410 = vsel %vm372, %v344, 0
      %v413 = vsel %vm372, %v345, 0
      %v416 = vsel %vm372, %v346, 0
      %v419 = vsel %vm372, %v347, 0
      %v422 = vsel %vm372, %v348, 0
      %v425 = vsel %vm372, %v349, 0
      %v428 = vsel %vm372, %v350, 0
      %v431 = vsel %vm372, %v351, 0
      %v434 = vsel %vm372, %v352, 0
      %v437 = vsel %vm372, %v353, 0
      %v440 = vsel %vm372, %v354, 0
      %v443 = vsel %vm372, %v355, 0
      %v446 = vsel %vm372, %v356, 0
      %v449 = vsel %vm372, %v357, 0
      %v452 = vsel %vm372, %v358, 0
      %v455 = vsel %vm372, %v359, 0
      %v458 = vsel %vm372, %v360, 0
      %v461 = vsel %vm372, %v361, 0
      %v464 = vsel %vm372, %v362, 0
      %v467 = vsel %vm372, %v363, 0
      %vm469 = vcmask 1043456
      %v471 = vsel %vm469, %v364, 0
      %473 = vmatprep.subr.mxu0 0.0
      %474 = vmatpush1.msra.mxu0 0.0
      %475 = vmatprep.subr.mxu0 0.0
      %476 = vmatpush1.msra.mxu0 0.0
      %477 = vmatprep.subr.mxu0 0.0
      %478 = vmatpush1.msra.mxu0 0.0
      %479 = vmatprep.subr.mxu0 0.0
      %480 = vmatpush1.msra.mxu0 0.0
      %481 = vmatprep.subr.mxu0 0.0
      %482 = vmatpush1.msra.mxu0 0.0
      %483 = vmatprep.subr.mxu0 0.0
      %484 = vmatpush1.msra.mxu0 0.0
      %485 = vmatprep.subr.mxu0 0.0
      %486 = vmatpush1.msra.mxu0 0.0
      %487 = vmatprep.subr.mxu0 0.0
      %488 = vmatpush1.msra.mxu0 0.0
      %489 = vmatprep.subr.mxu0 0.0
      %490 = vmatpush1.msra.mxu0 0.0
      %491 = vmatprep.subr.mxu0 0.0
      %492 = vmatpush1.msra.mxu0 0.0
      %493 = vmatprep.subr.mxu0 0.0
      %494 = vmatpush1.msra.mxu0 0.0
      %495 = vmatprep.subr.mxu0 0.0
      %496 = vmatpush1.msra.mxu0 0.0
      %497 = vmatprep.subr.mxu0 0.0
      %498 = vmatpush1.msra.mxu0 0.0
      %499 = vmatprep.subr.mxu0 0.0
      %500 = vmatpush1.msra.mxu0 0.0
      %501 = vmatprep.subr.mxu0 0.0
      %502 = vmatpush1.msra.mxu0 0.0
      %503 = vmatprep.subr.mxu0 0.0
      %504 = vmatpush1.msra.mxu0 %v471
      %505 = vmatprep.subr.mxu0 0.0
      %506 = vmatpush2.msra.mxu0 0.0
      %507 = vmatprep.subr.mxu0 0.0
      %508 = vmatpush2.msra.mxu0 0.0
      %509 = vmatprep.subr.mxu0 0.0
      %510 = vmatpush2.msra.mxu0 0.0
      %511 = vmatprep.subr.mxu0 0.0
      %512 = vmatpush2.msra.mxu0 0.0
      %513 = vmatprep.subr.mxu0 0.0
      %514 = vmatpush2.msra.mxu0 0.0
      %515 = vmatprep.subr.mxu0 0.0
      %516 = vmatpush2.msra.mxu0 0.0
      %517 = vmatprep.subr.mxu0 0.0
      %518 = vmatpush2.msra.mxu0 0.0
      %519 = vmatprep.subr.mxu0 0.0
      %520 = vmatpush2.msra.mxu0 0.0
      %521 = vmatprep.subr.mxu0 0.0
      %522 = vmatpush2.msra.mxu0 0.0
      %523 = vmatprep.subr.mxu0 0.0
      %524 = vmatpush2.msra.mxu0 0.0
      %525 = vmatprep.subr.mxu0 0.0
      %526 = vmatpush2.msra.mxu0 0.0
      %527 = vmatprep.subr.mxu0 0.0
      %528 = vmatpush2.msra.mxu0 0.0
      %529 = vmatprep.subr.mxu0 0.0
      %530 = vmatpush2.msra.mxu0 0.0
      %531 = vmatprep.subr.mxu0 0.0
      %532 = vmatpush2.msra.mxu0 0.0
      %533 = vmatprep.subr.mxu0 0.0
      %534 = vmatpush2.msra.mxu0 0.0
      %535 = vmatprep.subr.mxu0 0.0
      %536 = vmatpush2.msra.mxu0 0.0
      %537 = vmatprep.mubr.f32.mxu0 0.0
      %538 = vmatmul.mubr.f32.gmra.mxu0 %v374
      %v539 = vpop.f32.mrf.mxu0
      %v540 = vadd.f32 %v370, %v539
      %v541 = vpop.f32.mrf.mxu0
      %542 = vmatprep.mubr.f32.mxu0 0.0
      %543 = vmatmul.mubr.f32.gmra.mxu0 %v377
      %v544 = vpop.f32.mrf.mxu0
      %v545 = vadd.f32 %v370, %v544
      %v546 = vpop.f32.mrf.mxu0
      %547 = vmatprep.mubr.f32.mxu0 0.0
      %548 = vmatmul.mubr.f32.gmra.mxu0 %v380
      %v549 = vpop.f32.mrf.mxu0
      %v550 = vadd.f32 %v370, %v549
      %v551 = vpop.f32.mrf.mxu0
      %552 = vmatprep.mubr.f32.mxu0 0.0
      %553 = vmatmul.mubr.f32.gmra.mxu0 %v383
      %v554 = vpop.f32.mrf.mxu0
      %v555 = vadd.f32 %v370, %v554
      %v556 = vpop.f32.mrf.mxu0
      %557 = vmatprep.mubr.f32.mxu0 0.0
      %558 = vmatmul.mubr.f32.gmra.mxu0 %v386
      %v559 = vpop.f32.mrf.mxu0
      %v560 = vadd.f32 %v370, %v559
      %v561 = vpop.f32.mrf.mxu0
      %562 = vmatprep.mubr.f32.mxu0 0.0
      %563 = vmatmul.mubr.f32.gmra.mxu0 %v389
      %v564 = vpop.f32.mrf.mxu0
      %v565 = vadd.f32 %v370, %v564
      %v566 = vpop.f32.mrf.mxu0
      %567 = vmatprep.mubr.f32.mxu0 0.0
      %568 = vmatmul.mubr.f32.gmra.mxu0 %v392
      %v569 = vpop.f32.mrf.mxu0
      %v570 = vadd.f32 %v370, %v569
      %v571 = vpop.f32.mrf.mxu0
      %572 = vmatprep.mubr.f32.mxu0 0.0
      %573 = vmatmul.mubr.f32.gmra.mxu0 %v395
      %v574 = vpop.f32.mrf.mxu0
      %v575 = vadd.f32 %v370, %v574
      %v576 = vpop.f32.mrf.mxu0
      %577 = vmatprep.mubr.f32.mxu0 0.0
      %578 = vmatmul.mubr.f32.gmra.mxu0 %v398
      %v579 = vpop.f32.mrf.mxu0
      %v580 = vadd.f32 %v370, %v579
      %v581 = vpop.f32.mrf.mxu0
      %582 = vmatprep.mubr.f32.mxu0 0.0
      %583 = vmatmul.mubr.f32.gmra.mxu0 %v401
      %v584 = vpop.f32.mrf.mxu0
      %v585 = vadd.f32 %v370, %v584
      %v586 = vpop.f32.mrf.mxu0
      %587 = vmatprep.mubr.f32.mxu0 0.0
      %588 = vmatmul.mubr.f32.gmra.mxu0 %v404
      %v589 = vpop.f32.mrf.mxu0
      %v590 = vadd.f32 %v370, %v589
      %v591 = vpop.f32.mrf.mxu0
      %592 = vmatprep.mubr.f32.mxu0 0.0
      %593 = vmatmul.mubr.f32.gmra.mxu0 %v407
      %v594 = vpop.f32.mrf.mxu0
      %v595 = vadd.f32 %v370, %v594
      %v596 = vpop.f32.mrf.mxu0
      %597 = vmatprep.mubr.f32.mxu0 0.0
      %598 = vmatmul.mubr.f32.gmra.mxu0 %v410
      %v599 = vpop.f32.mrf.mxu0
      %v600 = vadd.f32 %v370, %v599
      %v601 = vpop.f32.mrf.mxu0
      %602 = vmatprep.mubr.f32.mxu0 0.0
      %603 = vmatmul.mubr.f32.gmra.mxu0 %v413
      %v604 = vpop.f32.mrf.mxu0
      %v605 = vadd.f32 %v370, %v604
      %v606 = vpop.f32.mrf.mxu0
      %607 = vmatprep.mubr.f32.mxu0 0.0
      %608 = vmatmul.mubr.f32.gmra.mxu0 %v416
      %v609 = vpop.f32.mrf.mxu0
      %v610 = vadd.f32 %v370, %v609
      %v611 = vpop.f32.mrf.mxu0
      %612 = vmatprep.mubr.f32.mxu0 0.0
      %613 = vmatmul.mubr.f32.gmra.mxu0 %v419
      %v614 = vpop.f32.mrf.mxu0
      %v615 = vadd.f32 %v370, %v614
      %v616 = vpop.f32.mrf.mxu0
      %617 = vmatprep.mubr.f32.mxu0 0.0
      %618 = vmatmul.mubr.f32.gmra.mxu0 %v422
      %v619 = vpop.f32.mrf.mxu0
      %v620 = vadd.f32 %v370, %v619
      %v621 = vpop.f32.mrf.mxu0
      %622 = vmatprep.mubr.f32.mxu0 0.0
      %623 = vmatmul.mubr.f32.gmra.mxu0 %v425
      %v624 = vpop.f32.mrf.mxu0
      %v625 = vadd.f32 %v370, %v624
      %v626 = vpop.f32.mrf.mxu0
      %627 = vmatprep.mubr.f32.mxu0 0.0
      %628 = vmatmul.mubr.f32.gmra.mxu0 %v428
      %v629 = vpop.f32.mrf.mxu0
      %v630 = vadd.f32 %v370, %v629
      %v631 = vpop.f32.mrf.mxu0
      %632 = vmatprep.mubr.f32.mxu0 0.0
      %633 = vmatmul.mubr.f32.gmra.mxu0 %v431
      %v634 = vpop.f32.mrf.mxu0
      %v635 = vadd.f32 %v370, %v634
      %v636 = vpop.f32.mrf.mxu0
      %637 = vmatprep.mubr.f32.mxu0 0.0
      %638 = vmatmul.mubr.f32.gmra.mxu0 %v434
      %v639 = vpop.f32.mrf.mxu0
      %v640 = vadd.f32 %v370, %v639
      %v641 = vpop.f32.mrf.mxu0
      %642 = vmatprep.mubr.f32.mxu0 0.0
      %643 = vmatmul.mubr.f32.gmra.mxu0 %v437
      %v644 = vpop.f32.mrf.mxu0
      %v645 = vadd.f32 %v370, %v644
      %v646 = vpop.f32.mrf.mxu0
      %647 = vmatprep.mubr.f32.mxu0 0.0
      %648 = vmatmul.mubr.f32.gmra.mxu0 %v440
      %v649 = vpop.f32.mrf.mxu0
      %v650 = vadd.f32 %v370, %v649
      %v651 = vpop.f32.mrf.mxu0
      %652 = vmatprep.mubr.f32.mxu0 0.0
      %653 = vmatmul.mubr.f32.gmra.mxu0 %v443
      %v654 = vpop.f32.mrf.mxu0
      %v655 = vadd.f32 %v370, %v654
      %v656 = vpop.f32.mrf.mxu0
      %657 = vmatprep.mubr.f32.mxu0 0.0
      %658 = vmatmul.mubr.f32.gmra.mxu0 %v446
      %v659 = vpop.f32.mrf.mxu0
      %v660 = vadd.f32 %v370, %v659
      %v661 = vpop.f32.mrf.mxu0
      %662 = vmatprep.mubr.f32.mxu0 0.0
      %663 = vmatmul.mubr.f32.gmra.mxu0 %v449
      %v664 = vpop.f32.mrf.mxu0
      %v665 = vadd.f32 %v370, %v664
      %v666 = vpop.f32.mrf.mxu0
      %667 = vmatprep.mubr.f32.mxu0 0.0
      %668 = vmatmul.mubr.f32.gmra.mxu0 %v452
      %v669 = vpop.f32.mrf.mxu0
      %v670 = vadd.f32 %v370, %v669
      %v671 = vpop.f32.mrf.mxu0
      %672 = vmatprep.mubr.f32.mxu0 0.0
      %673 = vmatmul.mubr.f32.gmra.mxu0 %v455
      %v674 = vpop.f32.mrf.mxu0
      %v675 = vadd.f32 %v370, %v674
      %v676 = vpop.f32.mrf.mxu0
      %677 = vmatprep.mubr.f32.mxu0 0.0
      %678 = vmatmul.mubr.f32.gmra.mxu0 %v458
      %v679 = vpop.f32.mrf.mxu0
      %v680 = vadd.f32 %v370, %v679
      %v681 = vpop.f32.mrf.mxu0
      %682 = vmatprep.mubr.f32.mxu0 0.0
      %683 = vmatmul.mubr.f32.gmra.mxu0 %v461
      %v684 = vpop.f32.mrf.mxu0
      %v685 = vadd.f32 %v370, %v684
      %v686 = vpop.f32.mrf.mxu0
      %687 = vmatprep.mubr.f32.mxu0 0.0
      %688 = vmatmul.mubr.f32.gmra.mxu0 %v464
      %v689 = vpop.f32.mrf.mxu0
      %v690 = vadd.f32 %v370, %v689
      %v691 = vpop.f32.mrf.mxu0
      %692 = vmatprep.mubr.f32.mxu0 0.0
      %693 = vmatmul.mubr.f32.gmra.mxu0 %v467
      %v694 = vpop.f32.mrf.mxu0
      %v695 = vadd.f32 %v370, %v694
      %v696 = vpop.f32.mrf.mxu0
      %697 = vdwg.mxu0
      %v698 = vld [vmem:[%s261] sm:$0xff]
      %v699 = vld [vmem:[%s261 + $0x8] sm:$0xff]
      %v700 = vld [vmem:[%s261 + $0x10] sm:$0xff]
      %v701 = vld [vmem:[%s261 + $0x18] sm:$0xff]
      %v702 = vld [vmem:[%s261 + $0x20] sm:$0xff]
      %v703 = vld [vmem:[%s261 + $0x28] sm:$0xff]
      %v704 = vld [vmem:[%s261 + $0x30] sm:$0xff]
      %v705 = vld [vmem:[%s261 + $0x38] sm:$0xff]
      %v714 = vcombine.high %v698, %v698
      %v716 = vunpack.c.l.s4 1966171168
      %v717 = vunpack.c.0.s8 %v716
      %v718 = vlaneseq
      %v719 = vshrl.u32 %v718, 7
      %v720 = vsub.s32 %v717, %v719
      %v721 = vrot.slane %v698, %v720
      %v723 = vunpack.c.l.s4 1966171168
      %v724 = vunpack.c.0.s8 %v723
      %v725 = vlaneseq
      %v726 = vshrl.u32 %v725, 7
      %v727 = vsub.s32 %v724, %v726
      %v728 = vrot.slane %v714, %v727
      %v729 = vcombine.high %v721, %v721
      %v730 = vcombine.high %v728, %v728
      %v732 = vunpack.c.l.s4 1966171168
      %v733 = vunpack.c.0.s8 %v732
      %v734 = vlaneseq
      %v735 = vshrl.u32 %v734, 7
      %v736 = vsub.s32 %v733, %v735
      %v737 = vrot.slane %v721, %v736
      %v739 = vunpack.c.l.s4 1966171168
      %v740 = vunpack.c.0.s8 %v739
      %v741 = vlaneseq
      %v742 = vshrl.u32 %v741, 7
      %v743 = vsub.s32 %v740, %v742
      %v744 = vrot.slane %v728, %v743
      %v746 = vunpack.c.l.s4 1966171168
      %v747 = vunpack.c.0.s8 %v746
      %v748 = vlaneseq
      %v749 = vshrl.u32 %v748, 7
      %v750 = vsub.s32 %v747, %v749
      %v751 = vrot.slane %v729, %v750
      %v753 = vunpack.c.l.s4 1966171168
      %v754 = vunpack.c.0.s8 %v753
      %v755 = vlaneseq
      %v756 = vshrl.u32 %v755, 7
      %v757 = vsub.s32 %v754, %v756
      %v758 = vrot.slane %v730, %v757
      %v759 = vcombine.high %v737, %v737
      %v760 = vcombine.high %v744, %v744
      %v761 = vcombine.high %v751, %v751
      %v762 = vcombine.high %v758, %v758
      %v763 = vcombine.high %v699, %v699
      %v765 = vunpack.c.l.s4 1966171168
      %v766 = vunpack.c.0.s8 %v765
      %v767 = vlaneseq
      %v768 = vshrl.u32 %v767, 7
      %v769 = vsub.s32 %v766, %v768
      %v770 = vrot.slane %v699, %v769
      %v772 = vunpack.c.l.s4 1966171168
      %v773 = vunpack.c.0.s8 %v772
      %v774 = vlaneseq
      %v775 = vshrl.u32 %v774, 7
      %v776 = vsub.s32 %v773, %v775
      %v777 = vrot.slane %v763, %v776
      %v778 = vcombine.high %v770, %v770
      %v779 = vcombine.high %v777, %v777
      %v781 = vunpack.c.l.s4 1966171168
      %v782 = vunpack.c.0.s8 %v781
      %v783 = vlaneseq
      %v784 = vshrl.u32 %v783, 7
      %v785 = vsub.s32 %v782, %v784
      %v786 = vrot.slane %v770, %v785
      %v788 = vunpack.c.l.s4 1966171168
      %v789 = vunpack.c.0.s8 %v788
      %v790 = vlaneseq
      %v791 = vshrl.u32 %v790, 7
      %v792 = vsub.s32 %v789, %v791
      %v793 = vrot.slane %v777, %v792
      %v795 = vunpack.c.l.s4 1966171168
      %v796 = vunpack.c.0.s8 %v795
      %v797 = vlaneseq
      %v798 = vshrl.u32 %v797, 7
      %v799 = vsub.s32 %v796, %v798
      %v800 = vrot.slane %v778, %v799
      %v802 = vunpack.c.l.s4 1966171168
      %v803 = vunpack.c.0.s8 %v802
      %v804 = vlaneseq
      %v805 = vshrl.u32 %v804, 7
      %v806 = vsub.s32 %v803, %v805
      %v807 = vrot.slane %v779, %v806
      %v808 = vcombine.high %v786, %v786
      %v809 = vcombine.high %v793, %v793
      %v810 = vcombine.high %v800, %v800
      %v811 = vcombine.high %v807, %v807
      %v812 = vcombine.high %v700, %v700
      %v814 = vunpack.c.l.s4 1966171168
      %v815 = vunpack.c.0.s8 %v814
      %v816 = vlaneseq
      %v817 = vshrl.u32 %v816, 7
      %v818 = vsub.s32 %v815, %v817
      %v819 = vrot.slane %v700, %v818
      %v821 = vunpack.c.l.s4 1966171168
      %v822 = vunpack.c.0.s8 %v821
      %v823 = vlaneseq
      %v824 = vshrl.u32 %v823, 7
      %v825 = vsub.s32 %v822, %v824
      %v826 = vrot.slane %v812, %v825
      %v827 = vcombine.high %v819, %v819
      %v828 = vcombine.high %v826, %v826
      %v830 = vunpack.c.l.s4 1966171168
      %v831 = vunpack.c.0.s8 %v830
      %v832 = vlaneseq
      %v833 = vshrl.u32 %v832, 7
      %v834 = vsub.s32 %v831, %v833
      %v835 = vrot.slane %v819, %v834
      %v837 = vunpack.c.l.s4 1966171168
      %v838 = vunpack.c.0.s8 %v837
      %v839 = vlaneseq
      %v840 = vshrl.u32 %v839, 7
      %v841 = vsub.s32 %v838, %v840
      %v842 = vrot.slane %v826, %v841
      %v844 = vunpack.c.l.s4 1966171168
      %v845 = vunpack.c.0.s8 %v844
      %v846 = vlaneseq
      %v847 = vshrl.u32 %v846, 7
      %v848 = vsub.s32 %v845, %v847
      %v849 = vrot.slane %v827, %v848
      %v851 = vunpack.c.l.s4 1966171168
      %v852 = vunpack.c.0.s8 %v851
      %v853 = vlaneseq
      %v854 = vshrl.u32 %v853, 7
      %v855 = vsub.s32 %v852, %v854
      %v856 = vrot.slane %v828, %v855
      %v857 = vcombine.high %v835, %v835
      %v858 = vcombine.high %v842, %v842
      %v859 = vcombine.high %v849, %v849
      %v860 = vcombine.high %v856, %v856
      %v861 = vcombine.high %v701, %v701
      %v863 = vunpack.c.l.s4 1966171168
      %v864 = vunpack.c.0.s8 %v863
      %v865 = vlaneseq
      %v866 = vshrl.u32 %v865, 7
      %v867 = vsub.s32 %v864, %v866
      %v868 = vrot.slane %v701, %v867
      %v870 = vunpack.c.l.s4 1966171168
      %v871 = vunpack.c.0.s8 %v870
      %v872 = vlaneseq
      %v873 = vshrl.u32 %v872, 7
      %v874 = vsub.s32 %v871, %v873
      %v875 = vrot.slane %v861, %v874
      %v876 = vcombine.high %v868, %v868
      %v877 = vcombine.high %v875, %v875
      %v879 = vunpack.c.l.s4 1966171168
      %v880 = vunpack.c.0.s8 %v879
      %v881 = vlaneseq
      %v882 = vshrl.u32 %v881, 7
      %v883 = vsub.s32 %v880, %v882
      %v884 = vrot.slane %v868, %v883
      %v886 = vunpack.c.l.s4 1966171168
      %v887 = vunpack.c.0.s8 %v886
      %v888 = vlaneseq
      %v889 = vshrl.u32 %v888, 7
      %v890 = vsub.s32 %v887, %v889
      %v891 = vrot.slane %v875, %v890
      %v893 = vunpack.c.l.s4 1966171168
      %v894 = vunpack.c.0.s8 %v893
      %v895 = vlaneseq
      %v896 = vshrl.u32 %v895, 7
      %v897 = vsub.s32 %v894, %v896
      %v898 = vrot.slane %v876, %v897
      %v900 = vunpack.c.l.s4 1966171168
      %v901 = vunpack.c.0.s8 %v900
      %v902 = vlaneseq
      %v903 = vshrl.u32 %v902, 7
      %v904 = vsub.s32 %v901, %v903
      %v905 = vrot.slane %v877, %v904
      %v906 = vcombine.high %v884, %v884
      %v907 = vcombine.high %v891, %v891
      %v908 = vcombine.high %v898, %v898
      %v909 = vcombine.high %v905, %v905
      %v910 = vcombine.high %v702, %v702
      %v912 = vunpack.c.l.s4 1966171168
      %v913 = vunpack.c.0.s8 %v912
      %v914 = vlaneseq
      %v915 = vshrl.u32 %v914, 7
      %v916 = vsub.s32 %v913, %v915
      %v917 = vrot.slane %v702, %v916
      %v919 = vunpack.c.l.s4 1966171168
      %v920 = vunpack.c.0.s8 %v919
      %v921 = vlaneseq
      %v922 = vshrl.u32 %v921, 7
      %v923 = vsub.s32 %v920, %v922
      %v924 = vrot.slane %v910, %v923
      %v925 = vcombine.high %v917, %v917
      %v926 = vcombine.high %v924, %v924
      %v928 = vunpack.c.l.s4 1966171168
      %v929 = vunpack.c.0.s8 %v928
      %v930 = vlaneseq
      %v931 = vshrl.u32 %v930, 7
      %v932 = vsub.s32 %v929, %v931
      %v933 = vrot.slane %v917, %v932
      %v935 = vunpack.c.l.s4 1966171168
      %v936 = vunpack.c.0.s8 %v935
      %v937 = vlaneseq
      %v938 = vshrl.u32 %v937, 7
      %v939 = vsub.s32 %v936, %v938
      %v940 = vrot.slane %v924, %v939
      %v942 = vunpack.c.l.s4 1966171168
      %v943 = vunpack.c.0.s8 %v942
      %v944 = vlaneseq
      %v945 = vshrl.u32 %v944, 7
      %v946 = vsub.s32 %v943, %v945
      %v947 = vrot.slane %v925, %v946
      %v949 = vunpack.c.l.s4 1966171168
      %v950 = vunpack.c.0.s8 %v949
      %v951 = vlaneseq
      %v952 = vshrl.u32 %v951, 7
      %v953 = vsub.s32 %v950, %v952
      %v954 = vrot.slane %v926, %v953
      %v955 = vcombine.high %v933, %v933
      %v956 = vcombine.high %v940, %v940
      %v957 = vcombine.high %v947, %v947
      %v958 = vcombine.high %v954, %v954
      %v959 = vcombine.high %v703, %v703
      %v961 = vunpack.c.l.s4 1966171168
      %v962 = vunpack.c.0.s8 %v961
      %v963 = vlaneseq
      %v964 = vshrl.u32 %v963, 7
      %v965 = vsub.s32 %v962, %v964
      %v966 = vrot.slane %v703, %v965
      %v968 = vunpack.c.l.s4 1966171168
      %v969 = vunpack.c.0.s8 %v968
      %v970 = vlaneseq
      %v971 = vshrl.u32 %v970, 7
      %v972 = vsub.s32 %v969, %v971
      %v973 = vrot.slane %v959, %v972
      %v974 = vcombine.high %v966, %v966
      %v975 = vcombine.high %v973, %v973
      %v977 = vunpack.c.l.s4 1966171168
      %v978 = vunpack.c.0.s8 %v977
      %v979 = vlaneseq
      %v980 = vshrl.u32 %v979, 7
      %v981 = vsub.s32 %v978, %v980
      %v982 = vrot.slane %v966, %v981
      %v984 = vunpack.c.l.s4 1966171168
      %v985 = vunpack.c.0.s8 %v984
      %v986 = vlaneseq
      %v987 = vshrl.u32 %v986, 7
      %v988 = vsub.s32 %v985, %v987
      %v989 = vrot.slane %v973, %v988
      %v991 = vunpack.c.l.s4 1966171168
      %v992 = vunpack.c.0.s8 %v991
      %v993 = vlaneseq
      %v994 = vshrl.u32 %v993, 7
      %v995 = vsub.s32 %v992, %v994
      %v996 = vrot.slane %v974, %v995
      %v998 = vunpack.c.l.s4 1966171168
      %v999 = vunpack.c.0.s8 %v998
      %v1000 = vlaneseq
      %v1001 = vshrl.u32 %v1000, 7
      %v1002 = vsub.s32 %v999, %v1001
      %v1003 = vrot.slane %v975, %v1002
      %v1004 = vcombine.high %v982, %v982
      %v1005 = vcombine.high %v989, %v989
      %v1006 = vcombine.high %v996, %v996
      %v1007 = vcombine.high %v1003, %v1003
      %v1008 = vcombine.high %v704, %v704
      %v1010 = vunpack.c.l.s4 1966171168
      %v1011 = vunpack.c.0.s8 %v1010
      %v1012 = vlaneseq
      %v1013 = vshrl.u32 %v1012, 7
      %v1014 = vsub.s32 %v1011, %v1013
      %v1015 = vrot.slane %v704, %v1014
      %v1017 = vunpack.c.l.s4 1966171168
      %v1018 = vunpack.c.0.s8 %v1017
      %v1019 = vlaneseq
      %v1020 = vshrl.u32 %v1019, 7
      %v1021 = vsub.s32 %v1018, %v1020
      %v1022 = vrot.slane %v1008, %v1021
      %v1023 = vcombine.high %v1015, %v1015
      %v1024 = vcombine.high %v1022, %v1022
      %v1026 = vunpack.c.l.s4 1966171168
      %v1027 = vunpack.c.0.s8 %v1026
      %v1028 = vlaneseq
      %v1029 = vshrl.u32 %v1028, 7
      %v1030 = vsub.s32 %v1027, %v1029
      %v1031 = vrot.slane %v1015, %v1030
      %v1033 = vunpack.c.l.s4 1966171168
      %v1034 = vunpack.c.0.s8 %v1033
      %v1035 = vlaneseq
      %v1036 = vshrl.u32 %v1035, 7
      %v1037 = vsub.s32 %v1034, %v1036
      %v1038 = vrot.slane %v1022, %v1037
      %v1040 = vunpack.c.l.s4 1966171168
      %v1041 = vunpack.c.0.s8 %v1040
      %v1042 = vlaneseq
      %v1043 = vshrl.u32 %v1042, 7
      %v1044 = vsub.s32 %v1041, %v1043
      %v1045 = vrot.slane %v1023, %v1044
      %v1047 = vunpack.c.l.s4 1966171168
      %v1048 = vunpack.c.0.s8 %v1047
      %v1049 = vlaneseq
      %v1050 = vshrl.u32 %v1049, 7
      %v1051 = vsub.s32 %v1048, %v1050
      %v1052 = vrot.slane %v1024, %v1051
      %v1053 = vcombine.high %v1031, %v1031
      %v1054 = vcombine.high %v1038, %v1038
      %v1055 = vcombine.high %v1045, %v1045
      %v1056 = vcombine.high %v1052, %v1052
      %v1057 = vcombine.high %v705, %v705
      %v1059 = vunpack.c.l.s4 1966171168
      %v1060 = vunpack.c.0.s8 %v1059
      %v1061 = vlaneseq
      %v1062 = vshrl.u32 %v1061, 7
      %v1063 = vsub.s32 %v1060, %v1062
      %v1064 = vrot.slane %v705, %v1063
      %v1066 = vunpack.c.l.s4 1966171168
      %v1067 = vunpack.c.0.s8 %v1066
      %v1068 = vlaneseq
      %v1069 = vshrl.u32 %v1068, 7
      %v1070 = vsub.s32 %v1067, %v1069
      %v1071 = vrot.slane %v1057, %v1070
      %v1072 = vcombine.high %v1064, %v1064
      %v1073 = vcombine.high %v1071, %v1071
      %v1075 = vunpack.c.l.s4 1966171168
      %v1076 = vunpack.c.0.s8 %v1075
      %v1077 = vlaneseq
      %v1078 = vshrl.u32 %v1077, 7
      %v1079 = vsub.s32 %v1076, %v1078
      %v1080 = vrot.slane %v1064, %v1079
      %v1082 = vunpack.c.l.s4 1966171168
      %v1083 = vunpack.c.0.s8 %v1082
      %v1084 = vlaneseq
      %v1085 = vshrl.u32 %v1084, 7
      %v1086 = vsub.s32 %v1083, %v1085
      %v1087 = vrot.slane %v1071, %v1086
      %v1089 = vunpack.c.l.s4 1966171168
      %v1090 = vunpack.c.0.s8 %v1089
      %v1091 = vlaneseq
      %v1092 = vshrl.u32 %v1091, 7
      %v1093 = vsub.s32 %v1090, %v1092
      %v1094 = vrot.slane %v1072, %v1093
      %v1096 = vunpack.c.l.s4 1966171168
      %v1097 = vunpack.c.0.s8 %v1096
      %v1098 = vlaneseq
      %v1099 = vshrl.u32 %v1098, 7
      %v1100 = vsub.s32 %v1097, %v1099
      %v1101 = vrot.slane %v1073, %v1100
      %v1102 = vcombine.high %v1080, %v1080
      %v1103 = vcombine.high %v1087, %v1087
      %v1104 = vcombine.high %v1094, %v1094
      %v1105 = vcombine.high %v1101, %v1101
      %v1106 = vlaneseq
      %v1107 = vshrl.u32 %v1106, 7
      %v1108 = vsub.s32 0, %v1107
      %v1109 = vrot.slane %v737, %v1108
      %v1110 = vlaneseq
      %v1111 = vshrl.u32 %v1110, 7
      %v1112 = vsub.s32 0, %v1111
      %v1113 = vrot.slane %v751, %v1112
      %v1114 = vlaneseq
      %v1115 = vshrl.u32 %v1114, 7
      %v1116 = vsub.s32 0, %v1115
      %v1117 = vrot.slane %v759, %v1116
      %v1118 = vlaneseq
      %v1119 = vshrl.u32 %v1118, 7
      %v1120 = vsub.s32 0, %v1119
      %v1121 = vrot.slane %v761, %v1120
      %v1122 = vlaneseq
      %v1123 = vshrl.u32 %v1122, 7
      %v1124 = vsub.s32 0, %v1123
      %v1125 = vrot.slane %v744, %v1124
      %v1126 = vlaneseq
      %v1127 = vshrl.u32 %v1126, 7
      %v1128 = vsub.s32 0, %v1127
      %v1129 = vrot.slane %v758, %v1128
      %v1130 = vlaneseq
      %v1131 = vshrl.u32 %v1130, 7
      %v1132 = vsub.s32 0, %v1131
      %v1133 = vrot.slane %v760, %v1132
      %v1134 = vlaneseq
      %v1135 = vshrl.u32 %v1134, 7
      %v1136 = vsub.s32 0, %v1135
      %v1137 = vrot.slane %v762, %v1136
      %v1138 = vlaneseq
      %v1139 = vshrl.u32 %v1138, 7
      %v1140 = vsub.s32 0, %v1139
      %v1141 = vrot.slane %v786, %v1140
      %v1142 = vlaneseq
      %v1143 = vshrl.u32 %v1142, 7
      %v1144 = vsub.s32 0, %v1143
      %v1145 = vrot.slane %v800, %v1144
      %v1146 = vlaneseq
      %v1147 = vshrl.u32 %v1146, 7
      %v1148 = vsub.s32 0, %v1147
      %v1149 = vrot.slane %v808, %v1148
      %v1150 = vlaneseq
      %v1151 = vshrl.u32 %v1150, 7
      %v1152 = vsub.s32 0, %v1151
      %v1153 = vrot.slane %v810, %v1152
      %v1154 = vlaneseq
      %v1155 = vshrl.u32 %v1154, 7
      %v1156 = vsub.s32 0, %v1155
      %v1157 = vrot.slane %v793, %v1156
      %v1158 = vlaneseq
      %v1159 = vshrl.u32 %v1158, 7
      %v1160 = vsub.s32 0, %v1159
      %v1161 = vrot.slane %v807, %v1160
      %v1162 = vlaneseq
      %v1163 = vshrl.u32 %v1162, 7
      %v1164 = vsub.s32 0, %v1163
      %v1165 = vrot.slane %v809, %v1164
      %v1166 = vlaneseq
      %v1167 = vshrl.u32 %v1166, 7
      %v1168 = vsub.s32 0, %v1167
      %v1169 = vrot.slane %v811, %v1168
      %v1170 = vlaneseq
      %v1171 = vshrl.u32 %v1170, 7
      %v1172 = vsub.s32 0, %v1171
      %v1173 = vrot.slane %v835, %v1172
      %v1174 = vlaneseq
      %v1175 = vshrl.u32 %v1174, 7
      %v1176 = vsub.s32 0, %v1175
      %v1177 = vrot.slane %v849, %v1176
      %v1178 = vlaneseq
      %v1179 = vshrl.u32 %v1178, 7
      %v1180 = vsub.s32 0, %v1179
      %v1181 = vrot.slane %v857, %v1180
      %v1182 = vlaneseq
      %v1183 = vshrl.u32 %v1182, 7
      %v1184 = vsub.s32 0, %v1183
      %v1185 = vrot.slane %v859, %v1184
      %v1186 = vlaneseq
      %v1187 = vshrl.u32 %v1186, 7
      %v1188 = vsub.s32 0, %v1187
      %v1189 = vrot.slane %v842, %v1188
      %v1190 = vlaneseq
      %v1191 = vshrl.u32 %v1190, 7
      %v1192 = vsub.s32 0, %v1191
      %v1193 = vrot.slane %v856, %v1192
      %v1194 = vlaneseq
      %v1195 = vshrl.u32 %v1194, 7
      %v1196 = vsub.s32 0, %v1195
      %v1197 = vrot.slane %v858, %v1196
      %v1198 = vlaneseq
      %v1199 = vshrl.u32 %v1198, 7
      %v1200 = vsub.s32 0, %v1199
      %v1201 = vrot.slane %v860, %v1200
      %v1202 = vlaneseq
      %v1203 = vshrl.u32 %v1202, 7
      %v1204 = vsub.s32 0, %v1203
      %v1205 = vrot.slane %v884, %v1204
      %v1206 = vlaneseq
      %v1207 = vshrl.u32 %v1206, 7
      %v1208 = vsub.s32 0, %v1207
      %v1209 = vrot.slane %v898, %v1208
      %v1210 = vlaneseq
      %v1211 = vshrl.u32 %v1210, 7
      %v1212 = vsub.s32 0, %v1211
      %v1213 = vrot.slane %v906, %v1212
      %v1214 = vlaneseq
      %v1215 = vshrl.u32 %v1214, 7
      %v1216 = vsub.s32 0, %v1215
      %v1217 = vrot.slane %v908, %v1216
      %v1218 = vlaneseq
      %v1219 = vshrl.u32 %v1218, 7
      %v1220 = vsub.s32 0, %v1219
      %v1221 = vrot.slane %v891, %v1220
      %v1222 = vlaneseq
      %v1223 = vshrl.u32 %v1222, 7
      %v1224 = vsub.s32 0, %v1223
      %v1225 = vrot.slane %v905, %v1224
      %v1226 = vlaneseq
      %v1227 = vshrl.u32 %v1226, 7
      %v1228 = vsub.s32 0, %v1227
      %v1229 = vrot.slane %v907, %v1228
      %v1230 = vlaneseq
      %v1231 = vshrl.u32 %v1230, 7
      %v1232 = vsub.s32 0, %v1231
      %v1233 = vrot.slane %v909, %v1232
      %v1234 = vlaneseq
      %v1235 = vshrl.u32 %v1234, 7
      %v1236 = vsub.s32 0, %v1235
      %v1237 = vrot.slane %v933, %v1236
      %v1238 = vlaneseq
      %v1239 = vshrl.u32 %v1238, 7
      %v1240 = vsub.s32 0, %v1239
      %v1241 = vrot.slane %v947, %v1240
      %v1242 = vlaneseq
      %v1243 = vshrl.u32 %v1242, 7
      %v1244 = vsub.s32 0, %v1243
      %v1245 = vrot.slane %v955, %v1244
      %v1246 = vlaneseq
      %v1247 = vshrl.u32 %v1246, 7
      %v1248 = vsub.s32 0, %v1247
      %v1249 = vrot.slane %v957, %v1248
      %v1250 = vlaneseq
      %v1251 = vshrl.u32 %v1250, 7
      %v1252 = vsub.s32 0, %v1251
      %v1253 = vrot.slane %v940, %v1252
      %v1254 = vlaneseq
      %v1255 = vshrl.u32 %v1254, 7
      %v1256 = vsub.s32 0, %v1255
      %v1257 = vrot.slane %v954, %v1256
      %v1258 = vlaneseq
      %v1259 = vshrl.u32 %v1258, 7
      %v1260 = vsub.s32 0, %v1259
      %v1261 = vrot.slane %v956, %v1260
      %v1262 = vlaneseq
      %v1263 = vshrl.u32 %v1262, 7
      %v1264 = vsub.s32 0, %v1263
      %v1265 = vrot.slane %v958, %v1264
      %v1266 = vlaneseq
      %v1267 = vshrl.u32 %v1266, 7
      %v1268 = vsub.s32 0, %v1267
      %v1269 = vrot.slane %v982, %v1268
      %v1270 = vlaneseq
      %v1271 = vshrl.u32 %v1270, 7
      %v1272 = vsub.s32 0, %v1271
      %v1273 = vrot.slane %v996, %v1272
      %v1274 = vlaneseq
      %v1275 = vshrl.u32 %v1274, 7
      %v1276 = vsub.s32 0, %v1275
      %v1277 = vrot.slane %v1004, %v1276
      %v1278 = vlaneseq
      %v1279 = vshrl.u32 %v1278, 7
      %v1280 = vsub.s32 0, %v1279
      %v1281 = vrot.slane %v1006, %v1280
      %v1282 = vlaneseq
      %v1283 = vshrl.u32 %v1282, 7
      %v1284 = vsub.s32 0, %v1283
      %v1285 = vrot.slane %v989, %v1284
      %v1286 = vlaneseq
      %v1287 = vshrl.u32 %v1286, 7
      %v1288 = vsub.s32 0, %v1287
      %v1289 = vrot.slane %v1003, %v1288
      %v1290 = vlaneseq
      %v1291 = vshrl.u32 %v1290, 7
      %v1292 = vsub.s32 0, %v1291
      %v1293 = vrot.slane %v1005, %v1292
      %v1294 = vlaneseq
      %v1295 = vshrl.u32 %v1294, 7
      %v1296 = vsub.s32 0, %v1295
      %v1297 = vrot.slane %v1007, %v1296
      %v1298 = vlaneseq
      %v1299 = vshrl.u32 %v1298, 7
      %v1300 = vsub.s32 0, %v1299
      %v1301 = vrot.slane %v1031, %v1300
      %v1302 = vlaneseq
      %v1303 = vshrl.u32 %v1302, 7
      %v1304 = vsub.s32 0, %v1303
      %v1305 = vrot.slane %v1045, %v1304
      %v1306 = vlaneseq
      %v1307 = vshrl.u32 %v1306, 7
      %v1308 = vsub.s32 0, %v1307
      %v1309 = vrot.slane %v1053, %v1308
      %v1310 = vlaneseq
      %v1311 = vshrl.u32 %v1310, 7
      %v1312 = vsub.s32 0, %v1311
      %v1313 = vrot.slane %v1055, %v1312
      %v1314 = vlaneseq
      %v1315 = vshrl.u32 %v1314, 7
      %v1316 = vsub.s32 0, %v1315
      %v1317 = vrot.slane %v1038, %v1316
      %v1318 = vlaneseq
      %v1319 = vshrl.u32 %v1318, 7
      %v1320 = vsub.s32 0, %v1319
      %v1321 = vrot.slane %v1052, %v1320
      %v1322 = vlaneseq
      %v1323 = vshrl.u32 %v1322, 7
      %v1324 = vsub.s32 0, %v1323
      %v1325 = vrot.slane %v1054, %v1324
      %v1326 = vlaneseq
      %v1327 = vshrl.u32 %v1326, 7
      %v1328 = vsub.s32 0, %v1327
      %v1329 = vrot.slane %v1056, %v1328
      %v1330 = vlaneseq
      %v1331 = vshrl.u32 %v1330, 7
      %v1332 = vsub.s32 0, %v1331
      %v1333 = vrot.slane %v1080, %v1332
      %v1334 = vlaneseq
      %v1335 = vshrl.u32 %v1334, 7
      %v1336 = vsub.s32 0, %v1335
      %v1337 = vrot.slane %v1094, %v1336
      %v1338 = vlaneseq
      %v1339 = vshrl.u32 %v1338, 7
      %v1340 = vsub.s32 0, %v1339
      %v1341 = vrot.slane %v1102, %v1340
      %v1342 = vlaneseq
      %v1343 = vshrl.u32 %v1342, 7
      %v1344 = vsub.s32 0, %v1343
      %v1345 = vrot.slane %v1104, %v1344
      %v1346 = vlaneseq
      %v1347 = vshrl.u32 %v1346, 7
      %v1348 = vsub.s32 0, %v1347
      %v1349 = vrot.slane %v1087, %v1348
      %v1350 = vlaneseq
      %v1351 = vshrl.u32 %v1350, 7
      %v1352 = vsub.s32 0, %v1351
      %v1353 = vrot.slane %v1101, %v1352
      %v1354 = vlaneseq
      %v1355 = vshrl.u32 %v1354, 7
      %v1356 = vsub.s32 0, %v1355
      %v1357 = vrot.slane %v1103, %v1356
      %v1358 = vlaneseq
      %v1359 = vshrl.u32 %v1358, 7
      %v1360 = vsub.s32 0, %v1359
      %v1361 = vrot.slane %v1105, %v1360
      %v1458 = vcombine.high %v540, %v540
      %v1460 = vunpack.c.l.s4 1983009808
      %v1461 = vunpack.c.0.s8 %v1460
      %v1462 = vlaneseq
      %v1463 = vshrl.u32 %v1462, 7
      %v1464 = vsub.s32 %v1461, %v1463
      %v1465 = vrot.slane %v540, %v1464
      %v1467 = vunpack.c.l.s4 1983009808
      %v1468 = vunpack.c.0.s8 %v1467
      %v1469 = vlaneseq
      %v1470 = vshrl.u32 %v1469, 7
      %v1471 = vsub.s32 %v1468, %v1470
      %v1472 = vrot.slane %v1458, %v1471
      %v1473 = vcombine.high %v1465, %v1465
      %v1474 = vcombine.high %v1472, %v1472
      %v1475 = vcombine.high %v545, %v545
      %v1477 = vunpack.c.l.s4 1983009808
      %v1478 = vunpack.c.0.s8 %v1477
      %v1479 = vlaneseq
      %v1480 = vshrl.u32 %v1479, 7
      %v1481 = vsub.s32 %v1478, %v1480
      %v1482 = vrot.slane %v545, %v1481
      %v1484 = vunpack.c.l.s4 1983009808
      %v1485 = vunpack.c.0.s8 %v1484
      %v1486 = vlaneseq
      %v1487 = vshrl.u32 %v1486, 7
      %v1488 = vsub.s32 %v1485, %v1487
      %v1489 = vrot.slane %v1475, %v1488
      %v1490 = vcombine.high %v1482, %v1482
      %v1491 = vcombine.high %v1489, %v1489
      %v1492 = vcombine.high %v550, %v550
      %v1494 = vunpack.c.l.s4 1983009808
      %v1495 = vunpack.c.0.s8 %v1494
      %v1496 = vlaneseq
      %v1497 = vshrl.u32 %v1496, 7
      %v1498 = vsub.s32 %v1495, %v1497
      %v1499 = vrot.slane %v550, %v1498
      %v1501 = vunpack.c.l.s4 1983009808
      %v1502 = vunpack.c.0.s8 %v1501
      %v1503 = vlaneseq
      %v1504 = vshrl.u32 %v1503, 7
      %v1505 = vsub.s32 %v1502, %v1504
      %v1506 = vrot.slane %v1492, %v1505
      %v1507 = vcombine.high %v1499, %v1499
      %v1508 = vcombine.high %v1506, %v1506
      %v1509 = vcombine.high %v555, %v555
      %v1511 = vunpack.c.l.s4 1983009808
      %v1512 = vunpack.c.0.s8 %v1511
      %v1513 = vlaneseq
      %v1514 = vshrl.u32 %v1513, 7
      %v1515 = vsub.s32 %v1512, %v1514
      %v1516 = vrot.slane %v555, %v1515
      %v1518 = vunpack.c.l.s4 1983009808
      %v1519 = vunpack.c.0.s8 %v1518
      %v1520 = vlaneseq
      %v1521 = vshrl.u32 %v1520, 7
      %v1522 = vsub.s32 %v1519, %v1521
      %v1523 = vrot.slane %v1509, %v1522
      %v1524 = vcombine.high %v1516, %v1516
      %v1525 = vcombine.high %v1523, %v1523
      %v1526 = vcombine.high %v560, %v560
      %v1528 = vunpack.c.l.s4 1983009808
      %v1529 = vunpack.c.0.s8 %v1528
      %v1530 = vlaneseq
      %v1531 = vshrl.u32 %v1530, 7
      %v1532 = vsub.s32 %v1529, %v1531
      %v1533 = vrot.slane %v560, %v1532
      %v1535 = vunpack.c.l.s4 1983009808
      %v1536 = vunpack.c.0.s8 %v1535
      %v1537 = vlaneseq
      %v1538 = vshrl.u32 %v1537, 7
      %v1539 = vsub.s32 %v1536, %v1538
      %v1540 = vrot.slane %v1526, %v1539
      %v1541 = vcombine.high %v1533, %v1533
      %v1542 = vcombine.high %v1540, %v1540
      %v1543 = vcombine.high %v565, %v565
      %v1545 = vunpack.c.l.s4 1983009808
      %v1546 = vunpack.c.0.s8 %v1545
      %v1547 = vlaneseq
      %v1548 = vshrl.u32 %v1547, 7
      %v1549 = vsub.s32 %v1546, %v1548
      %v1550 = vrot.slane %v565, %v1549
      %v1552 = vunpack.c.l.s4 1983009808
      %v1553 = vunpack.c.0.s8 %v1552
      %v1554 = vlaneseq
      %v1555 = vshrl.u32 %v1554, 7
      %v1556 = vsub.s32 %v1553, %v1555
      %v1557 = vrot.slane %v1543, %v1556
      %v1558 = vcombine.high %v1550, %v1550
      %v1559 = vcombine.high %v1557, %v1557
      %v1560 = vcombine.high %v570, %v570
      %v1562 = vunpack.c.l.s4 1983009808
      %v1563 = vunpack.c.0.s8 %v1562
      %v1564 = vlaneseq
      %v1565 = vshrl.u32 %v1564, 7
      %v1566 = vsub.s32 %v1563, %v1565
      %v1567 = vrot.slane %v570, %v1566
      %v1569 = vunpack.c.l.s4 1983009808
      %v1570 = vunpack.c.0.s8 %v1569
      %v1571 = vlaneseq
      %v1572 = vshrl.u32 %v1571, 7
      %v1573 = vsub.s32 %v1570, %v1572
      %v1574 = vrot.slane %v1560, %v1573
      %v1575 = vcombine.high %v1567, %v1567
      %v1576 = vcombine.high %v1574, %v1574
      %v1577 = vcombine.high %v575, %v575
      %v1579 = vunpack.c.l.s4 1983009808
      %v1580 = vunpack.c.0.s8 %v1579
      %v1581 = vlaneseq
      %v1582 = vshrl.u32 %v1581, 7
      %v1583 = vsub.s32 %v1580, %v1582
      %v1584 = vrot.slane %v575, %v1583
      %v1586 = vunpack.c.l.s4 1983009808
      %v1587 = vunpack.c.0.s8 %v1586
      %v1588 = vlaneseq
      %v1589 = vshrl.u32 %v1588, 7
      %v1590 = vsub.s32 %v1587, %v1589
      %v1591 = vrot.slane %v1577, %v1590
      %v1592 = vcombine.high %v1584, %v1584
      %v1593 = vcombine.high %v1591, %v1591
      %v1594 = vcombine.high %v580, %v580
      %v1596 = vunpack.c.l.s4 1983009808
      %v1597 = vunpack.c.0.s8 %v1596
      %v1598 = vlaneseq
      %v1599 = vshrl.u32 %v1598, 7
      %v1600 = vsub.s32 %v1597, %v1599
      %v1601 = vrot.slane %v580, %v1600
      %v1603 = vunpack.c.l.s4 1983009808
      %v1604 = vunpack.c.0.s8 %v1603
      %v1605 = vlaneseq
      %v1606 = vshrl.u32 %v1605, 7
      %v1607 = vsub.s32 %v1604, %v1606
      %v1608 = vrot.slane %v1594, %v1607
      %v1609 = vcombine.high %v1601, %v1601
      %v1610 = vcombine.high %v1608, %v1608
      %v1611 = vcombine.high %v585, %v585
      %v1613 = vunpack.c.l.s4 1983009808
      %v1614 = vunpack.c.0.s8 %v1613
      %v1615 = vlaneseq
      %v1616 = vshrl.u32 %v1615, 7
      %v1617 = vsub.s32 %v1614, %v1616
      %v1618 = vrot.slane %v585, %v1617
      %v1620 = vunpack.c.l.s4 1983009808
      %v1621 = vunpack.c.0.s8 %v1620
      %v1622 = vlaneseq
      %v1623 = vshrl.u32 %v1622, 7
      %v1624 = vsub.s32 %v1621, %v1623
      %v1625 = vrot.slane %v1611, %v1624
      %v1626 = vcombine.high %v1618, %v1618
      %v1627 = vcombine.high %v1625, %v1625
      %v1628 = vcombine.high %v590, %v590
      %v1630 = vunpack.c.l.s4 1983009808
      %v1631 = vunpack.c.0.s8 %v1630
      %v1632 = vlaneseq
      %v1633 = vshrl.u32 %v1632, 7
      %v1634 = vsub.s32 %v1631, %v1633
      %v1635 = vrot.slane %v590, %v1634
      %v1637 = vunpack.c.l.s4 1983009808
      %v1638 = vunpack.c.0.s8 %v1637
      %v1639 = vlaneseq
      %v1640 = vshrl.u32 %v1639, 7
      %v1641 = vsub.s32 %v1638, %v1640
      %v1642 = vrot.slane %v1628, %v1641
      %v1643 = vcombine.high %v1635, %v1635
      %v1644 = vcombine.high %v1642, %v1642
      %v1645 = vcombine.high %v595, %v595
      %v1647 = vunpack.c.l.s4 1983009808
      %v1648 = vunpack.c.0.s8 %v1647
      %v1649 = vlaneseq
      %v1650 = vshrl.u32 %v1649, 7
      %v1651 = vsub.s32 %v1648, %v1650
      %v1652 = vrot.slane %v595, %v1651
      %v1654 = vunpack.c.l.s4 1983009808
      %v1655 = vunpack.c.0.s8 %v1654
      %v1656 = vlaneseq
      %v1657 = vshrl.u32 %v1656, 7
      %v1658 = vsub.s32 %v1655, %v1657
      %v1659 = vrot.slane %v1645, %v1658
      %v1660 = vcombine.high %v1652, %v1652
      %v1661 = vcombine.high %v1659, %v1659
      %v1662 = vcombine.high %v600, %v600
      %v1664 = vunpack.c.l.s4 1983009808
      %v1665 = vunpack.c.0.s8 %v1664
      %v1666 = vlaneseq
      %v1667 = vshrl.u32 %v1666, 7
      %v1668 = vsub.s32 %v1665, %v1667
      %v1669 = vrot.slane %v600, %v1668
      %v1671 = vunpack.c.l.s4 1983009808
      %v1672 = vunpack.c.0.s8 %v1671
      %v1673 = vlaneseq
      %v1674 = vshrl.u32 %v1673, 7
      %v1675 = vsub.s32 %v1672, %v1674
      %v1676 = vrot.slane %v1662, %v1675
      %v1677 = vcombine.high %v1669, %v1669
      %v1678 = vcombine.high %v1676, %v1676
      %v1679 = vcombine.high %v605, %v605
      %v1681 = vunpack.c.l.s4 1983009808
      %v1682 = vunpack.c.0.s8 %v1681
      %v1683 = vlaneseq
      %v1684 = vshrl.u32 %v1683, 7
      %v1685 = vsub.s32 %v1682, %v1684
      %v1686 = vrot.slane %v605, %v1685
      %v1688 = vunpack.c.l.s4 1983009808
      %v1689 = vunpack.c.0.s8 %v1688
      %v1690 = vlaneseq
      %v1691 = vshrl.u32 %v1690, 7
      %v1692 = vsub.s32 %v1689, %v1691
      %v1693 = vrot.slane %v1679, %v1692
      %v1694 = vcombine.high %v1686, %v1686
      %v1695 = vcombine.high %v1693, %v1693
      %v1696 = vcombine.high %v610, %v610
      %v1698 = vunpack.c.l.s4 1983009808
      %v1699 = vunpack.c.0.s8 %v1698
      %v1700 = vlaneseq
      %v1701 = vshrl.u32 %v1700, 7
      %v1702 = vsub.s32 %v1699, %v1701
      %v1703 = vrot.slane %v610, %v1702
      %v1705 = vunpack.c.l.s4 1983009808
      %v1706 = vunpack.c.0.s8 %v1705
      %v1707 = vlaneseq
      %v1708 = vshrl.u32 %v1707, 7
      %v1709 = vsub.s32 %v1706, %v1708
      %v1710 = vrot.slane %v1696, %v1709
      %v1711 = vcombine.high %v1703, %v1703
      %v1712 = vcombine.high %v1710, %v1710
      %v1713 = vcombine.high %v615, %v615
      %v1715 = vunpack.c.l.s4 1983009808
      %v1716 = vunpack.c.0.s8 %v1715
      %v1717 = vlaneseq
      %v1718 = vshrl.u32 %v1717, 7
      %v1719 = vsub.s32 %v1716, %v1718
      %v1720 = vrot.slane %v615, %v1719
      %v1722 = vunpack.c.l.s4 1983009808
      %v1723 = vunpack.c.0.s8 %v1722
      %v1724 = vlaneseq
      %v1725 = vshrl.u32 %v1724, 7
      %v1726 = vsub.s32 %v1723, %v1725
      %v1727 = vrot.slane %v1713, %v1726
      %v1728 = vcombine.high %v1720, %v1720
      %v1729 = vcombine.high %v1727, %v1727
      %v1730 = vcombine.high %v620, %v620
      %v1732 = vunpack.c.l.s4 1983009808
      %v1733 = vunpack.c.0.s8 %v1732
      %v1734 = vlaneseq
      %v1735 = vshrl.u32 %v1734, 7
      %v1736 = vsub.s32 %v1733, %v1735
      %v1737 = vrot.slane %v620, %v1736
      %v1739 = vunpack.c.l.s4 1983009808
      %v1740 = vunpack.c.0.s8 %v1739
      %v1741 = vlaneseq
      %v1742 = vshrl.u32 %v1741, 7
      %v1743 = vsub.s32 %v1740, %v1742
      %v1744 = vrot.slane %v1730, %v1743
      %v1745 = vcombine.high %v1737, %v1737
      %v1746 = vcombine.high %v1744, %v1744
      %v1747 = vcombine.high %v625, %v625
      %v1749 = vunpack.c.l.s4 1983009808
      %v1750 = vunpack.c.0.s8 %v1749
      %v1751 = vlaneseq
      %v1752 = vshrl.u32 %v1751, 7
      %v1753 = vsub.s32 %v1750, %v1752
      %v1754 = vrot.slane %v625, %v1753
      %v1756 = vunpack.c.l.s4 1983009808
      %v1757 = vunpack.c.0.s8 %v1756
      %v1758 = vlaneseq
      %v1759 = vshrl.u32 %v1758, 7
      %v1760 = vsub.s32 %v1757, %v1759
      %v1761 = vrot.slane %v1747, %v1760
      %v1762 = vcombine.high %v1754, %v1754
      %v1763 = vcombine.high %v1761, %v1761
      %v1764 = vcombine.high %v630, %v630
      %v1766 = vunpack.c.l.s4 1983009808
      %v1767 = vunpack.c.0.s8 %v1766
      %v1768 = vlaneseq
      %v1769 = vshrl.u32 %v1768, 7
      %v1770 = vsub.s32 %v1767, %v1769
      %v1771 = vrot.slane %v630, %v1770
      %v1773 = vunpack.c.l.s4 1983009808
      %v1774 = vunpack.c.0.s8 %v1773
      %v1775 = vlaneseq
      %v1776 = vshrl.u32 %v1775, 7
      %v1777 = vsub.s32 %v1774, %v1776
      %v1778 = vrot.slane %v1764, %v1777
      %v1779 = vcombine.high %v1771, %v1771
      %v1780 = vcombine.high %v1778, %v1778
      %v1781 = vcombine.high %v635, %v635
      %v1783 = vunpack.c.l.s4 1983009808
      %v1784 = vunpack.c.0.s8 %v1783
      %v1785 = vlaneseq
      %v1786 = vshrl.u32 %v1785, 7
      %v1787 = vsub.s32 %v1784, %v1786
      %v1788 = vrot.slane %v635, %v1787
      %v1790 = vunpack.c.l.s4 1983009808
      %v1791 = vunpack.c.0.s8 %v1790
      %v1792 = vlaneseq
      %v1793 = vshrl.u32 %v1792, 7
      %v1794 = vsub.s32 %v1791, %v1793
      %v1795 = vrot.slane %v1781, %v1794
      %v1796 = vcombine.high %v1788, %v1788
      %v1797 = vcombine.high %v1795, %v1795
      %v1798 = vcombine.high %v640, %v640
      %v1800 = vunpack.c.l.s4 1983009808
      %v1801 = vunpack.c.0.s8 %v1800
      %v1802 = vlaneseq
      %v1803 = vshrl.u32 %v1802, 7
      %v1804 = vsub.s32 %v1801, %v1803
      %v1805 = vrot.slane %v640, %v1804
      %v1807 = vunpack.c.l.s4 1983009808
      %v1808 = vunpack.c.0.s8 %v1807
      %v1809 = vlaneseq
      %v1810 = vshrl.u32 %v1809, 7
      %v1811 = vsub.s32 %v1808, %v1810
      %v1812 = vrot.slane %v1798, %v1811
      %v1813 = vcombine.high %v1805, %v1805
      %v1814 = vcombine.high %v1812, %v1812
      %v1815 = vcombine.high %v645, %v645
      %v1817 = vunpack.c.l.s4 1983009808
      %v1818 = vunpack.c.0.s8 %v1817
      %v1819 = vlaneseq
      %v1820 = vshrl.u32 %v1819, 7
      %v1821 = vsub.s32 %v1818, %v1820
      %v1822 = vrot.slane %v645, %v1821
      %v1824 = vunpack.c.l.s4 1983009808
      %v1825 = vunpack.c.0.s8 %v1824
      %v1826 = vlaneseq
      %v1827 = vshrl.u32 %v1826, 7
      %v1828 = vsub.s32 %v1825, %v1827
      %v1829 = vrot.slane %v1815, %v1828
      %v1830 = vcombine.high %v1822, %v1822
      %v1831 = vcombine.high %v1829, %v1829
      %v1832 = vcombine.high %v650, %v650
      %v1834 = vunpack.c.l.s4 1983009808
      %v1835 = vunpack.c.0.s8 %v1834
      %v1836 = vlaneseq
      %v1837 = vshrl.u32 %v1836, 7
      %v1838 = vsub.s32 %v1835, %v1837
      %v1839 = vrot.slane %v650, %v1838
      %v1841 = vunpack.c.l.s4 1983009808
      %v1842 = vunpack.c.0.s8 %v1841
      %v1843 = vlaneseq
      %v1844 = vshrl.u32 %v1843, 7
      %v1845 = vsub.s32 %v1842, %v1844
      %v1846 = vrot.slane %v1832, %v1845
      %v1847 = vcombine.high %v1839, %v1839
      %v1848 = vcombine.high %v1846, %v1846
      %v1849 = vcombine.high %v655, %v655
      %v1851 = vunpack.c.l.s4 1983009808
      %v1852 = vunpack.c.0.s8 %v1851
      %v1853 = vlaneseq
      %v1854 = vshrl.u32 %v1853, 7
      %v1855 = vsub.s32 %v1852, %v1854
      %v1856 = vrot.slane %v655, %v1855
      %v1858 = vunpack.c.l.s4 1983009808
      %v1859 = vunpack.c.0.s8 %v1858
      %v1860 = vlaneseq
      %v1861 = vshrl.u32 %v1860, 7
      %v1862 = vsub.s32 %v1859, %v1861
      %v1863 = vrot.slane %v1849, %v1862
      %v1864 = vcombine.high %v1856, %v1856
      %v1865 = vcombine.high %v1863, %v1863
      %v1866 = vcombine.high %v660, %v660
      %v1868 = vunpack.c.l.s4 1983009808
      %v1869 = vunpack.c.0.s8 %v1868
      %v1870 = vlaneseq
      %v1871 = vshrl.u32 %v1870, 7
      %v1872 = vsub.s32 %v1869, %v1871
      %v1873 = vrot.slane %v660, %v1872
      %v1875 = vunpack.c.l.s4 1983009808
      %v1876 = vunpack.c.0.s8 %v1875
      %v1877 = vlaneseq
      %v1878 = vshrl.u32 %v1877, 7
      %v1879 = vsub.s32 %v1876, %v1878
      %v1880 = vrot.slane %v1866, %v1879
      %v1881 = vcombine.high %v1873, %v1873
      %v1882 = vcombine.high %v1880, %v1880
      %v1883 = vcombine.high %v665, %v665
      %v1885 = vunpack.c.l.s4 1983009808
      %v1886 = vunpack.c.0.s8 %v1885
      %v1887 = vlaneseq
      %v1888 = vshrl.u32 %v1887, 7
      %v1889 = vsub.s32 %v1886, %v1888
      %v1890 = vrot.slane %v665, %v1889
      %v1892 = vunpack.c.l.s4 1983009808
      %v1893 = vunpack.c.0.s8 %v1892
      %v1894 = vlaneseq
      %v1895 = vshrl.u32 %v1894, 7
      %v1896 = vsub.s32 %v1893, %v1895
      %v1897 = vrot.slane %v1883, %v1896
      %v1898 = vcombine.high %v1890, %v1890
      %v1899 = vcombine.high %v1897, %v1897
      %v1900 = vcombine.high %v670, %v670
      %v1902 = vunpack.c.l.s4 1983009808
      %v1903 = vunpack.c.0.s8 %v1902
      %v1904 = vlaneseq
      %v1905 = vshrl.u32 %v1904, 7
      %v1906 = vsub.s32 %v1903, %v1905
      %v1907 = vrot.slane %v670, %v1906
      %v1909 = vunpack.c.l.s4 1983009808
      %v1910 = vunpack.c.0.s8 %v1909
      %v1911 = vlaneseq
      %v1912 = vshrl.u32 %v1911, 7
      %v1913 = vsub.s32 %v1910, %v1912
      %v1914 = vrot.slane %v1900, %v1913
      %v1915 = vcombine.high %v1907, %v1907
      %v1916 = vcombine.high %v1914, %v1914
      %v1917 = vcombine.high %v675, %v675
      %v1919 = vunpack.c.l.s4 1983009808
      %v1920 = vunpack.c.0.s8 %v1919
      %v1921 = vlaneseq
      %v1922 = vshrl.u32 %v1921, 7
      %v1923 = vsub.s32 %v1920, %v1922
      %v1924 = vrot.slane %v675, %v1923
      %v1926 = vunpack.c.l.s4 1983009808
      %v1927 = vunpack.c.0.s8 %v1926
      %v1928 = vlaneseq
      %v1929 = vshrl.u32 %v1928, 7
      %v1930 = vsub.s32 %v1927, %v1929
      %v1931 = vrot.slane %v1917, %v1930
      %v1932 = vcombine.high %v1924, %v1924
      %v1933 = vcombine.high %v1931, %v1931
      %v1934 = vcombine.high %v680, %v680
      %v1936 = vunpack.c.l.s4 1983009808
      %v1937 = vunpack.c.0.s8 %v1936
      %v1938 = vlaneseq
      %v1939 = vshrl.u32 %v1938, 7
      %v1940 = vsub.s32 %v1937, %v1939
      %v1941 = vrot.slane %v680, %v1940
      %v1943 = vunpack.c.l.s4 1983009808
      %v1944 = vunpack.c.0.s8 %v1943
      %v1945 = vlaneseq
      %v1946 = vshrl.u32 %v1945, 7
      %v1947 = vsub.s32 %v1944, %v1946
      %v1948 = vrot.slane %v1934, %v1947
      %v1949 = vcombine.high %v1941, %v1941
      %v1950 = vcombine.high %v1948, %v1948
      %v1951 = vcombine.high %v685, %v685
      %v1953 = vunpack.c.l.s4 1983009808
      %v1954 = vunpack.c.0.s8 %v1953
      %v1955 = vlaneseq
      %v1956 = vshrl.u32 %v1955, 7
      %v1957 = vsub.s32 %v1954, %v1956
      %v1958 = vrot.slane %v685, %v1957
      %v1960 = vunpack.c.l.s4 1983009808
      %v1961 = vunpack.c.0.s8 %v1960
      %v1962 = vlaneseq
      %v1963 = vshrl.u32 %v1962, 7
      %v1964 = vsub.s32 %v1961, %v1963
      %v1965 = vrot.slane %v1951, %v1964
      %v1966 = vcombine.high %v1958, %v1958
      %v1967 = vcombine.high %v1965, %v1965
      %v1968 = vcombine.high %v690, %v690
      %v1970 = vunpack.c.l.s4 1983009808
      %v1971 = vunpack.c.0.s8 %v1970
      %v1972 = vlaneseq
      %v1973 = vshrl.u32 %v1972, 7
      %v1974 = vsub.s32 %v1971, %v1973
      %v1975 = vrot.slane %v690, %v1974
      %v1977 = vunpack.c.l.s4 1983009808
      %v1978 = vunpack.c.0.s8 %v1977
      %v1979 = vlaneseq
      %v1980 = vshrl.u32 %v1979, 7
      %v1981 = vsub.s32 %v1978, %v1980
      %v1982 = vrot.slane %v1968, %v1981
      %v1983 = vcombine.high %v1975, %v1975
      %v1984 = vcombine.high %v1982, %v1982
      %v1985 = vcombine.high %v695, %v695
      %v1987 = vunpack.c.l.s4 1983009808
      %v1988 = vunpack.c.0.s8 %v1987
      %v1989 = vlaneseq
      %v1990 = vshrl.u32 %v1989, 7
      %v1991 = vsub.s32 %v1988, %v1990
      %v1992 = vrot.slane %v695, %v1991
      %v1994 = vunpack.c.l.s4 1983009808
      %v1995 = vunpack.c.0.s8 %v1994
      %v1996 = vlaneseq
      %v1997 = vshrl.u32 %v1996, 7
      %v1998 = vsub.s32 %v1995, %v1997
      %v1999 = vrot.slane %v1985, %v1998
      %v2000 = vcombine.high %v1992, %v1992
      %v2001 = vcombine.high %v1999, %v1999
      %v2130 = vadd.f32 %v1109, %v1465
      %v2131 = vadd.f32 %v1113, %v1473
      %v2132 = vadd.f32 %v1117, %v1472
      %v2133 = vadd.f32 %v1121, %v1474
      %v2134 = vadd.f32 %v1125, %v1482
      %v2135 = vadd.f32 %v1129, %v1490
      %v2136 = vadd.f32 %v1133, %v1489
      %v2137 = vadd.f32 %v1137, %v1491
      %v2138 = vadd.f32 %v1109, %v1499
      %v2139 = vadd.f32 %v1113, %v1507
      %v2140 = vadd.f32 %v1117, %v1506
      %v2141 = vadd.f32 %v1121, %v1508
      %v2142 = vadd.f32 %v1125, %v1516
      %v2143 = vadd.f32 %v1129, %v1524
      %v2144 = vadd.f32 %v1133, %v1523
      %v2145 = vadd.f32 %v1137, %v1525
      %v2146 = vadd.f32 %v1141, %v1533
      %v2147 = vadd.f32 %v1145, %v1541
      %v2148 = vadd.f32 %v1149, %v1540
      %v2149 = vadd.f32 %v1153, %v1542
      %v2150 = vadd.f32 %v1157, %v1550
      %v2151 = vadd.f32 %v1161, %v1558
      %v2152 = vadd.f32 %v1165, %v1557
      %v2153 = vadd.f32 %v1169, %v1559
      %v2154 = vadd.f32 %v1141, %v1567
      %v2155 = vadd.f32 %v1145, %v1575
      %v2156 = vadd.f32 %v1149, %v1574
      %v2157 = vadd.f32 %v1153, %v1576
      %v2158 = vadd.f32 %v1157, %v1584
      %v2159 = vadd.f32 %v1161, %v1592
      %v2160 = vadd.f32 %v1165, %v1591
      %v2161 = vadd.f32 %v1169, %v1593
      %v2162 = vadd.f32 %v1173, %v1601
      %v2163 = vadd.f32 %v1177, %v1609
      %v2164 = vadd.f32 %v1181, %v1608
      %v2165 = vadd.f32 %v1185, %v1610
      %v2166 = vadd.f32 %v1189, %v1618
      %v2167 = vadd.f32 %v1193, %v1626
      %v2168 = vadd.f32 %v1197, %v1625
      %v2169 = vadd.f32 %v1201, %v1627
      %v2170 = vadd.f32 %v1173, %v1635
      %v2171 = vadd.f32 %v1177, %v1643
      %v2172 = vadd.f32 %v1181, %v1642
      %v2173 = vadd.f32 %v1185, %v1644
      %v2174 = vadd.f32 %v1189, %v1652
      %v2175 = vadd.f32 %v1193, %v1660
      %v2176 = vadd.f32 %v1197, %v1659
      %v2177 = vadd.f32 %v1201, %v1661
      %v2178 = vadd.f32 %v1205, %v1669
      %v2179 = vadd.f32 %v1209, %v1677
      %v2180 = vadd.f32 %v1213, %v1676
      %v2181 = vadd.f32 %v1217, %v1678
      %v2182 = vadd.f32 %v1221, %v1686
      %v2183 = vadd.f32 %v1225, %v1694
      %v2184 = vadd.f32 %v1229, %v1693
      %v2185 = vadd.f32 %v1233, %v1695
      %v2186 = vadd.f32 %v1205, %v1703
      %v2187 = vadd.f32 %v1209, %v1711
      %v2188 = vadd.f32 %v1213, %v1710
      %v2189 = vadd.f32 %v1217, %v1712
      %v2190 = vadd.f32 %v1221, %v1720
      %v2191 = vadd.f32 %v1225, %v1728
      %v2192 = vadd.f32 %v1229, %v1727
      %v2193 = vadd.f32 %v1233, %v1729
      %v2194 = vadd.f32 %v1237, %v1737
      %v2195 = vadd.f32 %v1241, %v1745
      %v2196 = vadd.f32 %v1245, %v1744
      %v2197 = vadd.f32 %v1249, %v1746
      %v2198 = vadd.f32 %v1253, %v1754
      %v2199 = vadd.f32 %v1257, %v1762
      %v2200 = vadd.f32 %v1261, %v1761
      %v2201 = vadd.f32 %v1265, %v1763
      %v2202 = vadd.f32 %v1237, %v1771
      %v2203 = vadd.f32 %v1241, %v1779
      %v2204 = vadd.f32 %v1245, %v1778
      %v2205 = vadd.f32 %v1249, %v1780
      %v2206 = vadd.f32 %v1253, %v1788
      %v2207 = vadd.f32 %v1257, %v1796
      %v2208 = vadd.f32 %v1261, %v1795
      %v2209 = vadd.f32 %v1265, %v1797
      %v2210 = vadd.f32 %v1269, %v1805
      %v2211 = vadd.f32 %v1273, %v1813
      %v2212 = vadd.f32 %v1277, %v1812
      %v2213 = vadd.f32 %v1281, %v1814
      %v2214 = vadd.f32 %v1285, %v1822
      %v2215 = vadd.f32 %v1289, %v1830
      %v2216 = vadd.f32 %v1293, %v1829
      %v2217 = vadd.f32 %v1297, %v1831
      %v2218 = vadd.f32 %v1269, %v1839
      %v2219 = vadd.f32 %v1273, %v1847
      %v2220 = vadd.f32 %v1277, %v1846
      %v2221 = vadd.f32 %v1281, %v1848
      %v2222 = vadd.f32 %v1285, %v1856
      %v2223 = vadd.f32 %v1289, %v1864
      %v2224 = vadd.f32 %v1293, %v1863
      %v2225 = vadd.f32 %v1297, %v1865
      %v2226 = vadd.f32 %v1301, %v1873
      %v2227 = vadd.f32 %v1305, %v1881
      %v2228 = vadd.f32 %v1309, %v1880
      %v2229 = vadd.f32 %v1313, %v1882
      %v2230 = vadd.f32 %v1317, %v1890
      %v2231 = vadd.f32 %v1321, %v1898
      %v2232 = vadd.f32 %v1325, %v1897
      %v2233 = vadd.f32 %v1329, %v1899
      %v2234 = vadd.f32 %v1301, %v1907
      %v2235 = vadd.f32 %v1305, %v1915
      %v2236 = vadd.f32 %v1309, %v1914
      %v2237 = vadd.f32 %v1313, %v1916
      %v2238 = vadd.f32 %v1317, %v1924
      %v2239 = vadd.f32 %v1321, %v1932
      %v2240 = vadd.f32 %v1325, %v1931
      %v2241 = vadd.f32 %v1329, %v1933
      %v2242 = vadd.f32 %v1333, %v1941
      %v2243 = vadd.f32 %v1337, %v1949
      %v2244 = vadd.f32 %v1341, %v1948
      %v2245 = vadd.f32 %v1345, %v1950
      %v2246 = vadd.f32 %v1349, %v1958
      %v2247 = vadd.f32 %v1353, %v1966
      %v2248 = vadd.f32 %v1357, %v1965
      %v2249 = vadd.f32 %v1361, %v1967
      %v2250 = vadd.f32 %v1333, %v1975
      %v2251 = vadd.f32 %v1337, %v1983
      %v2252 = vadd.f32 %v1341, %v1982
      %v2253 = vadd.f32 %v1345, %v1984
      %v2254 = vadd.f32 %v1349, %v1992
      %v2255 = vadd.f32 %v1353, %v2000
      %v2256 = vadd.f32 %v1357, %v1999
      %v2257 = vadd.f32 %v1361, %v2001
      %v2386 = vcombine.low %v2130, %v2131
      %v2387 = vcombine.low %v2132, %v2133
      %v2389 = vunpack.c.l.s4 1983009808
      %v2390 = vunpack.c.0.s8 %v2389
      %v2391 = vlaneseq
      %v2392 = vshrl.u32 %v2391, 7
      %v2393 = vsub.s32 %v2390, %v2392
      %v2394 = vrot.slane %v2386, %v2393
      %v2396 = vunpack.c.l.s4 1983009808
      %v2397 = vunpack.c.0.s8 %v2396
      %v2398 = vlaneseq
      %v2399 = vshrl.u32 %v2398, 7
      %v2400 = vsub.s32 %v2397, %v2399
      %v2401 = vrot.slane %v2387, %v2400
      %v2402 = vcombine.low %v2394, %v2401
      %v2403 = vcombine.low %v2134, %v2135
      %v2404 = vcombine.low %v2136, %v2137
      %v2406 = vunpack.c.l.s4 1983009808
      %v2407 = vunpack.c.0.s8 %v2406
      %v2408 = vlaneseq
      %v2409 = vshrl.u32 %v2408, 7
      %v2410 = vsub.s32 %v2407, %v2409
      %v2411 = vrot.slane %v2403, %v2410
      %v2413 = vunpack.c.l.s4 1983009808
      %v2414 = vunpack.c.0.s8 %v2413
      %v2415 = vlaneseq
      %v2416 = vshrl.u32 %v2415, 7
      %v2417 = vsub.s32 %v2414, %v2416
      %v2418 = vrot.slane %v2404, %v2417
      %v2419 = vcombine.low %v2411, %v2418
      %v2420 = vcombine.low %v2138, %v2139
      %v2421 = vcombine.low %v2140, %v2141
      %v2423 = vunpack.c.l.s4 1983009808
      %v2424 = vunpack.c.0.s8 %v2423
      %v2425 = vlaneseq
      %v2426 = vshrl.u32 %v2425, 7
      %v2427 = vsub.s32 %v2424, %v2426
      %v2428 = vrot.slane %v2420, %v2427
      %v2430 = vunpack.c.l.s4 1983009808
      %v2431 = vunpack.c.0.s8 %v2430
      %v2432 = vlaneseq
      %v2433 = vshrl.u32 %v2432, 7
      %v2434 = vsub.s32 %v2431, %v2433
      %v2435 = vrot.slane %v2421, %v2434
      %v2436 = vcombine.low %v2428, %v2435
      %v2437 = vcombine.low %v2142, %v2143
      %v2438 = vcombine.low %v2144, %v2145
      %v2440 = vunpack.c.l.s4 1983009808
      %v2441 = vunpack.c.0.s8 %v2440
      %v2442 = vlaneseq
      %v2443 = vshrl.u32 %v2442, 7
      %v2444 = vsub.s32 %v2441, %v2443
      %v2445 = vrot.slane %v2437, %v2444
      %v2447 = vunpack.c.l.s4 1983009808
      %v2448 = vunpack.c.0.s8 %v2447
      %v2449 = vlaneseq
      %v2450 = vshrl.u32 %v2449, 7
      %v2451 = vsub.s32 %v2448, %v2450
      %v2452 = vrot.slane %v2438, %v2451
      %v2453 = vcombine.low %v2445, %v2452
      %v2454 = vcombine.low %v2146, %v2147
      %v2455 = vcombine.low %v2148, %v2149
      %v2457 = vunpack.c.l.s4 1983009808
      %v2458 = vunpack.c.0.s8 %v2457
      %v2459 = vlaneseq
      %v2460 = vshrl.u32 %v2459, 7
      %v2461 = vsub.s32 %v2458, %v2460
      %v2462 = vrot.slane %v2454, %v2461
      %v2464 = vunpack.c.l.s4 1983009808
      %v2465 = vunpack.c.0.s8 %v2464
      %v2466 = vlaneseq
      %v2467 = vshrl.u32 %v2466, 7
      %v2468 = vsub.s32 %v2465, %v2467
      %v2469 = vrot.slane %v2455, %v2468
      %v2470 = vcombine.low %v2462, %v2469
      %v2471 = vcombine.low %v2150, %v2151
      %v2472 = vcombine.low %v2152, %v2153
      %v2474 = vunpack.c.l.s4 1983009808
      %v2475 = vunpack.c.0.s8 %v2474
      %v2476 = vlaneseq
      %v2477 = vshrl.u32 %v2476, 7
      %v2478 = vsub.s32 %v2475, %v2477
      %v2479 = vrot.slane %v2471, %v2478
      %v2481 = vunpack.c.l.s4 1983009808
      %v2482 = vunpack.c.0.s8 %v2481
      %v2483 = vlaneseq
      %v2484 = vshrl.u32 %v2483, 7
      %v2485 = vsub.s32 %v2482, %v2484
      %v2486 = vrot.slane %v2472, %v2485
      %v2487 = vcombine.low %v2479, %v2486
      %v2488 = vcombine.low %v2154, %v2155
      %v2489 = vcombine.low %v2156, %v2157
      %v2491 = vunpack.c.l.s4 1983009808
      %v2492 = vunpack.c.0.s8 %v2491
      %v2493 = vlaneseq
      %v2494 = vshrl.u32 %v2493, 7
      %v2495 = vsub.s32 %v2492, %v2494
      %v2496 = vrot.slane %v2488, %v2495
      %v2498 = vunpack.c.l.s4 1983009808
      %v2499 = vunpack.c.0.s8 %v2498
      %v2500 = vlaneseq
      %v2501 = vshrl.u32 %v2500, 7
      %v2502 = vsub.s32 %v2499, %v2501
      %v2503 = vrot.slane %v2489, %v2502
      %v2504 = vcombine.low %v2496, %v2503
      %v2505 = vcombine.low %v2158, %v2159
      %v2506 = vcombine.low %v2160, %v2161
      %v2508 = vunpack.c.l.s4 1983009808
      %v2509 = vunpack.c.0.s8 %v2508
      %v2510 = vlaneseq
      %v2511 = vshrl.u32 %v2510, 7
      %v2512 = vsub.s32 %v2509, %v2511
      %v2513 = vrot.slane %v2505, %v2512
      %v2515 = vunpack.c.l.s4 1983009808
      %v2516 = vunpack.c.0.s8 %v2515
      %v2517 = vlaneseq
      %v2518 = vshrl.u32 %v2517, 7
      %v2519 = vsub.s32 %v2516, %v2518
      %v2520 = vrot.slane %v2506, %v2519
      %v2521 = vcombine.low %v2513, %v2520
      %v2522 = vcombine.low %v2162, %v2163
      %v2523 = vcombine.low %v2164, %v2165
      %v2525 = vunpack.c.l.s4 1983009808
      %v2526 = vunpack.c.0.s8 %v2525
      %v2527 = vlaneseq
      %v2528 = vshrl.u32 %v2527, 7
      %v2529 = vsub.s32 %v2526, %v2528
      %v2530 = vrot.slane %v2522, %v2529
      %v2532 = vunpack.c.l.s4 1983009808
      %v2533 = vunpack.c.0.s8 %v2532
      %v2534 = vlaneseq
      %v2535 = vshrl.u32 %v2534, 7
      %v2536 = vsub.s32 %v2533, %v2535
      %v2537 = vrot.slane %v2523, %v2536
      %v2538 = vcombine.low %v2530, %v2537
      %v2539 = vcombine.low %v2166, %v2167
      %v2540 = vcombine.low %v2168, %v2169
      %v2542 = vunpack.c.l.s4 1983009808
      %v2543 = vunpack.c.0.s8 %v2542
      %v2544 = vlaneseq
      %v2545 = vshrl.u32 %v2544, 7
      %v2546 = vsub.s32 %v2543, %v2545
      %v2547 = vrot.slane %v2539, %v2546
      %v2549 = vunpack.c.l.s4 1983009808
      %v2550 = vunpack.c.0.s8 %v2549
      %v2551 = vlaneseq
      %v2552 = vshrl.u32 %v2551, 7
      %v2553 = vsub.s32 %v2550, %v2552
      %v2554 = vrot.slane %v2540, %v2553
      %v2555 = vcombine.low %v2547, %v2554
      %v2556 = vcombine.low %v2170, %v2171
      %v2557 = vcombine.low %v2172, %v2173
      %v2559 = vunpack.c.l.s4 1983009808
      %v2560 = vunpack.c.0.s8 %v2559
      %v2561 = vlaneseq
      %v2562 = vshrl.u32 %v2561, 7
      %v2563 = vsub.s32 %v2560, %v2562
      %v2564 = vrot.slane %v2556, %v2563
      %v2566 = vunpack.c.l.s4 1983009808
      %v2567 = vunpack.c.0.s8 %v2566
      %v2568 = vlaneseq
      %v2569 = vshrl.u32 %v2568, 7
      %v2570 = vsub.s32 %v2567, %v2569
      %v2571 = vrot.slane %v2557, %v2570
      %v2572 = vcombine.low %v2564, %v2571
      %v2573 = vcombine.low %v2174, %v2175
      %v2574 = vcombine.low %v2176, %v2177
      %v2576 = vunpack.c.l.s4 1983009808
      %v2577 = vunpack.c.0.s8 %v2576
      %v2578 = vlaneseq
      %v2579 = vshrl.u32 %v2578, 7
      %v2580 = vsub.s32 %v2577, %v2579
      %v2581 = vrot.slane %v2573, %v2580
      %v2583 = vunpack.c.l.s4 1983009808
      %v2584 = vunpack.c.0.s8 %v2583
      %v2585 = vlaneseq
      %v2586 = vshrl.u32 %v2585, 7
      %v2587 = vsub.s32 %v2584, %v2586
      %v2588 = vrot.slane %v2574, %v2587
      %v2589 = vcombine.low %v2581, %v2588
      %v2590 = vcombine.low %v2178, %v2179
      %v2591 = vcombine.low %v2180, %v2181
      %v2593 = vunpack.c.l.s4 1983009808
      %v2594 = vunpack.c.0.s8 %v2593
      %v2595 = vlaneseq
      %v2596 = vshrl.u32 %v2595, 7
      %v2597 = vsub.s32 %v2594, %v2596
      %v2598 = vrot.slane %v2590, %v2597
      %v2600 = vunpack.c.l.s4 1983009808
      %v2601 = vunpack.c.0.s8 %v2600
      %v2602 = vlaneseq
      %v2603 = vshrl.u32 %v2602, 7
      %v2604 = vsub.s32 %v2601, %v2603
      %v2605 = vrot.slane %v2591, %v2604
      %v2606 = vcombine.low %v2598, %v2605
      %v2607 = vcombine.low %v2182, %v2183
      %v2608 = vcombine.low %v2184, %v2185
      %v2610 = vunpack.c.l.s4 1983009808
      %v2611 = vunpack.c.0.s8 %v2610
      %v2612 = vlaneseq
      %v2613 = vshrl.u32 %v2612, 7
      %v2614 = vsub.s32 %v2611, %v2613
      %v2615 = vrot.slane %v2607, %v2614
      %v2617 = vunpack.c.l.s4 1983009808
      %v2618 = vunpack.c.0.s8 %v2617
      %v2619 = vlaneseq
      %v2620 = vshrl.u32 %v2619, 7
      %v2621 = vsub.s32 %v2618, %v2620
      %v2622 = vrot.slane %v2608, %v2621
      %v2623 = vcombine.low %v2615, %v2622
      %v2624 = vcombine.low %v2186, %v2187
      %v2625 = vcombine.low %v2188, %v2189
      %v2627 = vunpack.c.l.s4 1983009808
      %v2628 = vunpack.c.0.s8 %v2627
      %v2629 = vlaneseq
      %v2630 = vshrl.u32 %v2629, 7
      %v2631 = vsub.s32 %v2628, %v2630
      %v2632 = vrot.slane %v2624, %v2631
      %v2634 = vunpack.c.l.s4 1983009808
      %v2635 = vunpack.c.0.s8 %v2634
      %v2636 = vlaneseq
      %v2637 = vshrl.u32 %v2636, 7
      %v2638 = vsub.s32 %v2635, %v2637
      %v2639 = vrot.slane %v2625, %v2638
      %v2640 = vcombine.low %v2632, %v2639
      %v2641 = vcombine.low %v2190, %v2191
      %v2642 = vcombine.low %v2192, %v2193
      %v2644 = vunpack.c.l.s4 1983009808
      %v2645 = vunpack.c.0.s8 %v2644
      %v2646 = vlaneseq
      %v2647 = vshrl.u32 %v2646, 7
      %v2648 = vsub.s32 %v2645, %v2647
      %v2649 = vrot.slane %v2641, %v2648
      %v2651 = vunpack.c.l.s4 1983009808
      %v2652 = vunpack.c.0.s8 %v2651
      %v2653 = vlaneseq
      %v2654 = vshrl.u32 %v2653, 7
      %v2655 = vsub.s32 %v2652, %v2654
      %v2656 = vrot.slane %v2642, %v2655
      %v2657 = vcombine.low %v2649, %v2656
      %v2658 = vcombine.low %v2194, %v2195
      %v2659 = vcombine.low %v2196, %v2197
      %v2661 = vunpack.c.l.s4 1983009808
      %v2662 = vunpack.c.0.s8 %v2661
      %v2663 = vlaneseq
      %v2664 = vshrl.u32 %v2663, 7
      %v2665 = vsub.s32 %v2662, %v2664
      %v2666 = vrot.slane %v2658, %v2665
      %v2668 = vunpack.c.l.s4 1983009808
      %v2669 = vunpack.c.0.s8 %v2668
      %v2670 = vlaneseq
      %v2671 = vshrl.u32 %v2670, 7
      %v2672 = vsub.s32 %v2669, %v2671
      %v2673 = vrot.slane %v2659, %v2672
      %v2674 = vcombine.low %v2666, %v2673
      %v2675 = vcombine.low %v2198, %v2199
      %v2676 = vcombine.low %v2200, %v2201
      %v2678 = vunpack.c.l.s4 1983009808
      %v2679 = vunpack.c.0.s8 %v2678
      %v2680 = vlaneseq
      %v2681 = vshrl.u32 %v2680, 7
      %v2682 = vsub.s32 %v2679, %v2681
      %v2683 = vrot.slane %v2675, %v2682
      %v2685 = vunpack.c.l.s4 1983009808
      %v2686 = vunpack.c.0.s8 %v2685
      %v2687 = vlaneseq
      %v2688 = vshrl.u32 %v2687, 7
      %v2689 = vsub.s32 %v2686, %v2688
      %v2690 = vrot.slane %v2676, %v2689
      %v2691 = vcombine.low %v2683, %v2690
      %v2692 = vcombine.low %v2202, %v2203
      %v2693 = vcombine.low %v2204, %v2205
      %v2695 = vunpack.c.l.s4 1983009808
      %v2696 = vunpack.c.0.s8 %v2695
      %v2697 = vlaneseq
      %v2698 = vshrl.u32 %v2697, 7
      %v2699 = vsub.s32 %v2696, %v2698
      %v2700 = vrot.slane %v2692, %v2699
      %v2702 = vunpack.c.l.s4 1983009808
      %v2703 = vunpack.c.0.s8 %v2702
      %v2704 = vlaneseq
      %v2705 = vshrl.u32 %v2704, 7
      %v2706 = vsub.s32 %v2703, %v2705
      %v2707 = vrot.slane %v2693, %v2706
      %v2708 = vcombine.low %v2700, %v2707
      %v2709 = vcombine.low %v2206, %v2207
      %v2710 = vcombine.low %v2208, %v2209
      %v2712 = vunpack.c.l.s4 1983009808
      %v2713 = vunpack.c.0.s8 %v2712
      %v2714 = vlaneseq
      %v2715 = vshrl.u32 %v2714, 7
      %v2716 = vsub.s32 %v2713, %v2715
      %v2717 = vrot.slane %v2709, %v2716
      %v2719 = vunpack.c.l.s4 1983009808
      %v2720 = vunpack.c.0.s8 %v2719
      %v2721 = vlaneseq
      %v2722 = vshrl.u32 %v2721, 7
      %v2723 = vsub.s32 %v2720, %v2722
      %v2724 = vrot.slane %v2710, %v2723
      %v2725 = vcombine.low %v2717, %v2724
      %v2726 = vcombine.low %v2210, %v2211
      %v2727 = vcombine.low %v2212, %v2213
      %v2729 = vunpack.c.l.s4 1983009808
      %v2730 = vunpack.c.0.s8 %v2729
      %v2731 = vlaneseq
      %v2732 = vshrl.u32 %v2731, 7
      %v2733 = vsub.s32 %v2730, %v2732
      %v2734 = vrot.slane %v2726, %v2733
      %v2736 = vunpack.c.l.s4 1983009808
      %v2737 = vunpack.c.0.s8 %v2736
      %v2738 = vlaneseq
      %v2739 = vshrl.u32 %v2738, 7
      %v2740 = vsub.s32 %v2737, %v2739
      %v2741 = vrot.slane %v2727, %v2740
      %v2742 = vcombine.low %v2734, %v2741
      %v2743 = vcombine.low %v2214, %v2215
      %v2744 = vcombine.low %v2216, %v2217
      %v2746 = vunpack.c.l.s4 1983009808
      %v2747 = vunpack.c.0.s8 %v2746
      %v2748 = vlaneseq
      %v2749 = vshrl.u32 %v2748, 7
      %v2750 = vsub.s32 %v2747, %v2749
      %v2751 = vrot.slane %v2743, %v2750
      %v2753 = vunpack.c.l.s4 1983009808
      %v2754 = vunpack.c.0.s8 %v2753
      %v2755 = vlaneseq
      %v2756 = vshrl.u32 %v2755, 7
      %v2757 = vsub.s32 %v2754, %v2756
      %v2758 = vrot.slane %v2744, %v2757
      %v2759 = vcombine.low %v2751, %v2758
      %v2760 = vcombine.low %v2218, %v2219
      %v2761 = vcombine.low %v2220, %v2221
      %v2763 = vunpack.c.l.s4 1983009808
      %v2764 = vunpack.c.0.s8 %v2763
      %v2765 = vlaneseq
      %v2766 = vshrl.u32 %v2765, 7
      %v2767 = vsub.s32 %v2764, %v2766
      %v2768 = vrot.slane %v2760, %v2767
      %v2770 = vunpack.c.l.s4 1983009808
      %v2771 = vunpack.c.0.s8 %v2770
      %v2772 = vlaneseq
      %v2773 = vshrl.u32 %v2772, 7
      %v2774 = vsub.s32 %v2771, %v2773
      %v2775 = vrot.slane %v2761, %v2774
      %v2776 = vcombine.low %v2768, %v2775
      %v2777 = vcombine.low %v2222, %v2223
      %v2778 = vcombine.low %v2224, %v2225
      %v2780 = vunpack.c.l.s4 1983009808
      %v2781 = vunpack.c.0.s8 %v2780
      %v2782 = vlaneseq
      %v2783 = vshrl.u32 %v2782, 7
      %v2784 = vsub.s32 %v2781, %v2783
      %v2785 = vrot.slane %v2777, %v2784
      %v2787 = vunpack.c.l.s4 1983009808
      %v2788 = vunpack.c.0.s8 %v2787
      %v2789 = vlaneseq
      %v2790 = vshrl.u32 %v2789, 7
      %v2791 = vsub.s32 %v2788, %v2790
      %v2792 = vrot.slane %v2778, %v2791
      %v2793 = vcombine.low %v2785, %v2792
      %v2794 = vcombine.low %v2226, %v2227
      %v2795 = vcombine.low %v2228, %v2229
      %v2797 = vunpack.c.l.s4 1983009808
      %v2798 = vunpack.c.0.s8 %v2797
      %v2799 = vlaneseq
      %v2800 = vshrl.u32 %v2799, 7
      %v2801 = vsub.s32 %v2798, %v2800
      %v2802 = vrot.slane %v2794, %v2801
      %v2804 = vunpack.c.l.s4 1983009808
      %v2805 = vunpack.c.0.s8 %v2804
      %v2806 = vlaneseq
      %v2807 = vshrl.u32 %v2806, 7
      %v2808 = vsub.s32 %v2805, %v2807
      %v2809 = vrot.slane %v2795, %v2808
      %v2810 = vcombine.low %v2802, %v2809
      %v2811 = vcombine.low %v2230, %v2231
      %v2812 = vcombine.low %v2232, %v2233
      %v2814 = vunpack.c.l.s4 1983009808
      %v2815 = vunpack.c.0.s8 %v2814
      %v2816 = vlaneseq
      %v2817 = vshrl.u32 %v2816, 7
      %v2818 = vsub.s32 %v2815, %v2817
      %v2819 = vrot.slane %v2811, %v2818
      %v2821 = vunpack.c.l.s4 1983009808
      %v2822 = vunpack.c.0.s8 %v2821
      %v2823 = vlaneseq
      %v2824 = vshrl.u32 %v2823, 7
      %v2825 = vsub.s32 %v2822, %v2824
      %v2826 = vrot.slane %v2812, %v2825
      %v2827 = vcombine.low %v2819, %v2826
      %v2828 = vcombine.low %v2234, %v2235
      %v2829 = vcombine.low %v2236, %v2237
      %v2831 = vunpack.c.l.s4 1983009808
      %v2832 = vunpack.c.0.s8 %v2831
      %v2833 = vlaneseq
      %v2834 = vshrl.u32 %v2833, 7
      %v2835 = vsub.s32 %v2832, %v2834
      %v2836 = vrot.slane %v2828, %v2835
      %v2838 = vunpack.c.l.s4 1983009808
      %v2839 = vunpack.c.0.s8 %v2838
      %v2840 = vlaneseq
      %v2841 = vshrl.u32 %v2840, 7
      %v2842 = vsub.s32 %v2839, %v2841
      %v2843 = vrot.slane %v2829, %v2842
      %v2844 = vcombine.low %v2836, %v2843
      %v2845 = vcombine.low %v2238, %v2239
      %v2846 = vcombine.low %v2240, %v2241
      %v2848 = vunpack.c.l.s4 1983009808
      %v2849 = vunpack.c.0.s8 %v2848
      %v2850 = vlaneseq
      %v2851 = vshrl.u32 %v2850, 7
      %v2852 = vsub.s32 %v2849, %v2851
      %v2853 = vrot.slane %v2845, %v2852
      %v2855 = vunpack.c.l.s4 1983009808
      %v2856 = vunpack.c.0.s8 %v2855
      %v2857 = vlaneseq
      %v2858 = vshrl.u32 %v2857, 7
      %v2859 = vsub.s32 %v2856, %v2858
      %v2860 = vrot.slane %v2846, %v2859
      %v2861 = vcombine.low %v2853, %v2860
      %v2862 = vcombine.low %v2242, %v2243
      %v2863 = vcombine.low %v2244, %v2245
      %v2865 = vunpack.c.l.s4 1983009808
      %v2866 = vunpack.c.0.s8 %v2865
      %v2867 = vlaneseq
      %v2868 = vshrl.u32 %v2867, 7
      %v2869 = vsub.s32 %v2866, %v2868
      %v2870 = vrot.slane %v2862, %v2869
      %v2872 = vunpack.c.l.s4 1983009808
      %v2873 = vunpack.c.0.s8 %v2872
      %v2874 = vlaneseq
      %v2875 = vshrl.u32 %v2874, 7
      %v2876 = vsub.s32 %v2873, %v2875
      %v2877 = vrot.slane %v2863, %v2876
      %v2878 = vcombine.low %v2870, %v2877
      %v2879 = vcombine.low %v2246, %v2247
      %v2880 = vcombine.low %v2248, %v2249
      %v2882 = vunpack.c.l.s4 1983009808
      %v2883 = vunpack.c.0.s8 %v2882
      %v2884 = vlaneseq
      %v2885 = vshrl.u32 %v2884, 7
      %v2886 = vsub.s32 %v2883, %v2885
      %v2887 = vrot.slane %v2879, %v2886
      %v2889 = vunpack.c.l.s4 1983009808
      %v2890 = vunpack.c.0.s8 %v2889
      %v2891 = vlaneseq
      %v2892 = vshrl.u32 %v2891, 7
      %v2893 = vsub.s32 %v2890, %v2892
      %v2894 = vrot.slane %v2880, %v2893
      %v2895 = vcombine.low %v2887, %v2894
      %v2896 = vcombine.low %v2250, %v2251
      %v2897 = vcombine.low %v2252, %v2253
      %v2899 = vunpack.c.l.s4 1983009808
      %v2900 = vunpack.c.0.s8 %v2899
      %v2901 = vlaneseq
      %v2902 = vshrl.u32 %v2901, 7
      %v2903 = vsub.s32 %v2900, %v2902
      %v2904 = vrot.slane %v2896, %v2903
      %v2906 = vunpack.c.l.s4 1983009808
      %v2907 = vunpack.c.0.s8 %v2906
      %v2908 = vlaneseq
      %v2909 = vshrl.u32 %v2908, 7
      %v2910 = vsub.s32 %v2907, %v2909
      %v2911 = vrot.slane %v2897, %v2910
      %v2912 = vcombine.low %v2904, %v2911
      %v2913 = vcombine.low %v2254, %v2255
      %v2914 = vcombine.low %v2256, %v2257
      %v2916 = vunpack.c.l.s4 1983009808
      %v2917 = vunpack.c.0.s8 %v2916
      %v2918 = vlaneseq
      %v2919 = vshrl.u32 %v2918, 7
      %v2920 = vsub.s32 %v2917, %v2919
      %v2921 = vrot.slane %v2913, %v2920
      %v2923 = vunpack.c.l.s4 1983009808
      %v2924 = vunpack.c.0.s8 %v2923
      %v2925 = vlaneseq
      %v2926 = vshrl.u32 %v2925, 7
      %v2927 = vsub.s32 %v2924, %v2926
      %v2928 = vrot.slane %v2914, %v2927
      %v2929 = vcombine.low %v2921, %v2928
      %s2962 = scalar_lea.vmem [#allocation2], 24
      %vm2963 = vcmask 64512
      %2964 = vst.msk [vmem:[%s2962 + $0x1] sm:$0xff] %vm2963, %v2402
      %2965 = vst.msk [vmem:[%s2962 + $0x9] sm:$0xff] %vm2963, %v2419
      %2966 = vst.msk [vmem:[%s2962 + $0x19] sm:$0xff] %vm2963, %v2436
      %2967 = vst.msk [vmem:[%s2962 + $0x21] sm:$0xff] %vm2963, %v2453
      %2968 = vst.msk [vmem:[%s2962 + $0x31] sm:$0xff] %vm2963, %v2470
      %2969 = vst.msk [vmem:[%s2962 + $0x39] sm:$0xff] %vm2963, %v2487
      %2970 = vst.msk [vmem:[%s2962 + $0x49] sm:$0xff] %vm2963, %v2504
      %2971 = vst.msk [vmem:[%s2962 + $0x51] sm:$0xff] %vm2963, %v2521
      %2972 = vst.msk [vmem:[%s2962 + $0x61] sm:$0xff] %vm2963, %v2538
      %2973 = vst.msk [vmem:[%s2962 + $0x69] sm:$0xff] %vm2963, %v2555
      %2974 = vst.msk [vmem:[%s2962 + $0x79] sm:$0xff] %vm2963, %v2572
      %2975 = vst.msk [vmem:[%s2962 + $0x81] sm:$0xff] %vm2963, %v2589
      %2976 = vst.msk [vmem:[%s2962 + $0x91] sm:$0xff] %vm2963, %v2606
      %2977 = vst.msk [vmem:[%s2962 + $0x99] sm:$0xff] %vm2963, %v2623
      %2978 = vst.msk [vmem:[%s2962 + $0xa9] sm:$0xff] %vm2963, %v2640
      %2979 = vst.msk [vmem:[%s2962 + $0xb1] sm:$0xff] %vm2963, %v2657
      %2980 = vst.msk [vmem:[%s2962 + $0xc1] sm:$0xff] %vm2963, %v2674
      %2981 = vst.msk [vmem:[%s2962 + $0xc9] sm:$0xff] %vm2963, %v2691
      %2982 = vst.msk [vmem:[%s2962 + $0xd9] sm:$0xff] %vm2963, %v2708
      %2983 = vst.msk [vmem:[%s2962 + $0xe1] sm:$0xff] %vm2963, %v2725
      %2984 = vst.msk [vmem:[%s2962 + $0xf1] sm:$0xff] %vm2963, %v2742
      %2985 = vst.msk [vmem:[%s2962 + $0xf9] sm:$0xff] %vm2963, %v2759
      %2986 = vst.msk [vmem:[%s2962 + $0x109] sm:$0xff] %vm2963, %v2776
      %2987 = vst.msk [vmem:[%s2962 + $0x111] sm:$0xff] %vm2963, %v2793
      %2988 = vst.msk [vmem:[%s2962 + $0x121] sm:$0xff] %vm2963, %v2810
      %2989 = vst.msk [vmem:[%s2962 + $0x129] sm:$0xff] %vm2963, %v2827
      %2990 = vst.msk [vmem:[%s2962 + $0x139] sm:$0xff] %vm2963, %v2844
      %2991 = vst.msk [vmem:[%s2962 + $0x141] sm:$0xff] %vm2963, %v2861
      %2992 = vst.msk [vmem:[%s2962 + $0x151] sm:$0xff] %vm2963, %v2878
      %2993 = vst.msk [vmem:[%s2962 + $0x159] sm:$0xff] %vm2963, %v2895
      %2994 = vst.msk [vmem:[%s2962 + $0x169] sm:$0xff] %vm2963, %v2912
      %2995 = vst.msk [vmem:[%s2962 + $0x171] sm:$0xff] %vm2963, %v2929
      %v2996 = vld [vmem:[#allocation2] sm:$0xff]
      %v2997 = vld [vmem:[#allocation2 + $0x8] sm:$0xff]
      %v2998 = vld [vmem:[#allocation2 + $0x18] sm:$0xff]
      %v2999 = vld [vmem:[#allocation2 + $0x20] sm:$0xff]
      %v3000 = vld [vmem:[#allocation2 + $0x30] sm:$0xff]
      %v3001 = vld [vmem:[#allocation2 + $0x38] sm:$0xff]
      %v3002 = vld [vmem:[#allocation2 + $0x48] sm:$0xff]
      %v3003 = vld [vmem:[#allocation2 + $0x50] sm:$0xff]
      %v3004 = vld [vmem:[#allocation2 + $0x60] sm:$0xff]
      %v3005 = vld [vmem:[#allocation2 + $0x68] sm:$0xff]
      %v3006 = vld [vmem:[#allocation2 + $0x78] sm:$0xff]
      %v3007 = vld [vmem:[#allocation2 + $0x80] sm:$0xff]
      %v3008 = vld [vmem:[#allocation2 + $0x90] sm:$0xff]
      %v3009 = vld [vmem:[#allocation2 + $0x98] sm:$0xff]
      %v3010 = vld [vmem:[#allocation2 + $0xa8] sm:$0xff]
      %v3011 = vld [vmem:[#allocation2 + $0xb0] sm:$0xff]
      %v3012 = vld [vmem:[#allocation2 + $0xc0] sm:$0xff]
      %v3013 = vld [vmem:[#allocation2 + $0xc8] sm:$0xff]
      %v3014 = vld [vmem:[#allocation2 + $0xd8] sm:$0xff]
      %v3015 = vld [vmem:[#allocation2 + $0xe0] sm:$0xff]
      %v3016 = vld [vmem:[#allocation2 + $0xf0] sm:$0xff]
      %v3017 = vld [vmem:[#allocation2 + $0xf8] sm:$0xff]
      %v3018 = vld [vmem:[#allocation2 + $0x108] sm:$0xff]
      %v3019 = vld [vmem:[#allocation2 + $0x110] sm:$0xff]
      %v3020 = vld [vmem:[#allocation2 + $0x120] sm:$0xff]
      %v3021 = vld [vmem:[#allocation2 + $0x128] sm:$0xff]
      %v3022 = vld [vmem:[#allocation2 + $0x138] sm:$0xff]
      %v3023 = vld [vmem:[#allocation2 + $0x140] sm:$0xff]
      %v3024 = vld [vmem:[#allocation2 + $0x150] sm:$0xff]
      %v3025 = vld [vmem:[#allocation2 + $0x158] sm:$0xff]
      %v3026 = vld [vmem:[#allocation2 + $0x168] sm:$0xff]
      %v3027 = vld [vmem:[#allocation2 + $0x170] sm:$0xff]
      %v3028 = vld [vmem:[#allocation2 + $0x1] sm:$0xff]
      %v3029 = vld [vmem:[#allocation2 + $0x9] sm:$0xff]
      %v3030 = vld [vmem:[#allocation2 + $0x19] sm:$0xff]
      %v3031 = vld [vmem:[#allocation2 + $0x21] sm:$0xff]
      %v3032 = vld [vmem:[#allocation2 + $0x31] sm:$0xff]
      %v3033 = vld [vmem:[#allocation2 + $0x39] sm:$0xff]
      %v3034 = vld [vmem:[#allocation2 + $0x49] sm:$0xff]
      %v3035 = vld [vmem:[#allocation2 + $0x51] sm:$0xff]
      %v3036 = vld [vmem:[#allocation2 + $0x61] sm:$0xff]
      %v3037 = vld [vmem:[#allocation2 + $0x69] sm:$0xff]
      %v3038 = vld [vmem:[#allocation2 + $0x79] sm:$0xff]
      %v3039 = vld [vmem:[#allocation2 + $0x81] sm:$0xff]
      %v3040 = vld [vmem:[#allocation2 + $0x91] sm:$0xff]
      %v3041 = vld [vmem:[#allocation2 + $0x99] sm:$0xff]
      %v3042 = vld [vmem:[#allocation2 + $0xa9] sm:$0xff]
      %v3043 = vld [vmem:[#allocation2 + $0xb1] sm:$0xff]
      %v3044 = vld [vmem:[#allocation2 + $0xc1] sm:$0xff]
      %v3045 = vld [vmem:[#allocation2 + $0xc9] sm:$0xff]
      %v3046 = vld [vmem:[#allocation2 + $0xd9] sm:$0xff]
      %v3047 = vld [vmem:[#allocation2 + $0xe1] sm:$0xff]
      %v3048 = vld [vmem:[#allocation2 + $0xf1] sm:$0xff]
      %v3049 = vld [vmem:[#allocation2 + $0xf9] sm:$0xff]
      %v3050 = vld [vmem:[#allocation2 + $0x109] sm:$0xff]
      %v3051 = vld [vmem:[#allocation2 + $0x111] sm:$0xff]
      %v3052 = vld [vmem:[#allocation2 + $0x121] sm:$0xff]
      %v3053 = vld [vmem:[#allocation2 + $0x129] sm:$0xff]
      %v3054 = vld [vmem:[#allocation2 + $0x139] sm:$0xff]
      %v3055 = vld [vmem:[#allocation2 + $0x141] sm:$0xff]
      %v3056 = vld [vmem:[#allocation2 + $0x151] sm:$0xff]
      %v3057 = vld [vmem:[#allocation2 + $0x159] sm:$0xff]
      %v3058 = vld [vmem:[#allocation2 + $0x169] sm:$0xff]
      %v3059 = vld [vmem:[#allocation2 + $0x171] sm:$0xff]
      %v3060 = vld [vmem:[#allocation2 + $0x2] sm:$0xff]
      %v3061 = vld [vmem:[#allocation2 + $0xa] sm:$0xff]
      %v3062 = vld [vmem:[#allocation2 + $0x1a] sm:$0xff]
      %v3063 = vld [vmem:[#allocation2 + $0x22] sm:$0xff]
      %v3064 = vld [vmem:[#allocation2 + $0x32] sm:$0xff]
      %v3065 = vld [vmem:[#allocation2 + $0x3a] sm:$0xff]
      %v3066 = vld [vmem:[#allocation2 + $0x4a] sm:$0xff]
      %v3067 = vld [vmem:[#allocation2 + $0x52] sm:$0xff]
      %v3068 = vld [vmem:[#allocation2 + $0x62] sm:$0xff]
      %v3069 = vld [vmem:[#allocation2 + $0x6a] sm:$0xff]
      %v3070 = vld [vmem:[#allocation2 + $0x7a] sm:$0xff]
      %v3071 = vld [vmem:[#allocation2 + $0x82] sm:$0xff]
      %v3072 = vld [vmem:[#allocation2 + $0x92] sm:$0xff]
      %v3073 = vld [vmem:[#allocation2 + $0x9a] sm:$0xff]
      %v3074 = vld [vmem:[#allocation2 + $0xaa] sm:$0xff]
      %v3075 = vld [vmem:[#allocation2 + $0xb2] sm:$0xff]
      %v3076 = vld [vmem:[#allocation2 + $0xc2] sm:$0xff]
      %v3077 = vld [vmem:[#allocation2 + $0xca] sm:$0xff]
      %v3078 = vld [vmem:[#allocation2 + $0xda] sm:$0xff]
      %v3079 = vld [vmem:[#allocation2 + $0xe2] sm:$0xff]
      %v3080 = vld [vmem:[#allocation2 + $0xf2] sm:$0xff]
      %v3081 = vld [vmem:[#allocation2 + $0xfa] sm:$0xff]
      %v3082 = vld [vmem:[#allocation2 + $0x10a] sm:$0xff]
      %v3083 = vld [vmem:[#allocation2 + $0x112] sm:$0xff]
      %v3084 = vld [vmem:[#allocation2 + $0x122] sm:$0xff]
      %v3085 = vld [vmem:[#allocation2 + $0x12a] sm:$0xff]
      %v3086 = vld [vmem:[#allocation2 + $0x13a] sm:$0xff]
      %v3087 = vld [vmem:[#allocation2 + $0x142] sm:$0xff]
      %v3088 = vld [vmem:[#allocation2 + $0x152] sm:$0xff]
      %v3089 = vld [vmem:[#allocation2 + $0x15a] sm:$0xff]
      %v3090 = vld [vmem:[#allocation2 + $0x16a] sm:$0xff]
      %v3091 = vld [vmem:[#allocation2 + $0x172] sm:$0xff]
      %v3092 = vld [vmem:[%s2962] sm:$0xff]
      %v3093 = vld [vmem:[%s2962 + $0x8] sm:$0xff]
      %v3094 = vld [vmem:[%s2962 + $0x18] sm:$0xff]
      %v3095 = vld [vmem:[%s2962 + $0x20] sm:$0xff]
      %v3096 = vld [vmem:[%s2962 + $0x30] sm:$0xff]
      %v3097 = vld [vmem:[%s2962 + $0x38] sm:$0xff]
      %v3098 = vld [vmem:[%s2962 + $0x48] sm:$0xff]
      %v3099 = vld [vmem:[%s2962 + $0x50] sm:$0xff]
      %v3100 = vld [vmem:[%s2962 + $0x60] sm:$0xff]
      %v3101 = vld [vmem:[%s2962 + $0x68] sm:$0xff]
      %v3102 = vld [vmem:[%s2962 + $0x78] sm:$0xff]
      %v3103 = vld [vmem:[%s2962 + $0x80] sm:$0xff]
      %v3104 = vld [vmem:[%s2962 + $0x90] sm:$0xff]
      %v3105 = vld [vmem:[%s2962 + $0x98] sm:$0xff]
      %v3106 = vld [vmem:[%s2962 + $0xa8] sm:$0xff]
      %v3107 = vld [vmem:[%s2962 + $0xb0] sm:$0xff]
      %v3108 = vld [vmem:[%s2962 + $0xc0] sm:$0xff]
      %v3109 = vld [vmem:[%s2962 + $0xc8] sm:$0xff]
      %v3110 = vld [vmem:[%s2962 + $0xd8] sm:$0xff]
      %v3111 = vld [vmem:[%s2962 + $0xe0] sm:$0xff]
      %v3112 = vld [vmem:[%s2962 + $0xf0] sm:$0xff]
      %v3113 = vld [vmem:[%s2962 + $0xf8] sm:$0xff]
      %v3114 = vld [vmem:[%s2962 + $0x108] sm:$0xff]
      %v3115 = vld [vmem:[%s2962 + $0x110] sm:$0xff]
      %v3116 = vld [vmem:[%s2962 + $0x120] sm:$0xff]
      %v3117 = vld [vmem:[%s2962 + $0x128] sm:$0xff]
      %v3118 = vld [vmem:[%s2962 + $0x138] sm:$0xff]
      %v3119 = vld [vmem:[%s2962 + $0x140] sm:$0xff]
      %v3120 = vld [vmem:[%s2962 + $0x150] sm:$0xff]
      %v3121 = vld [vmem:[%s2962 + $0x158] sm:$0xff]
      %v3122 = vld [vmem:[%s2962 + $0x168] sm:$0xff]
      %v3123 = vld [vmem:[%s2962 + $0x170] sm:$0xff]
      %v3124 = vld [vmem:[%s2962 + $0x1] sm:$0xff]
      %v3125 = vld [vmem:[%s2962 + $0x9] sm:$0xff]
      %v3126 = vld [vmem:[%s2962 + $0x19] sm:$0xff]
      %v3127 = vld [vmem:[%s2962 + $0x21] sm:$0xff]
      %v3128 = vld [vmem:[%s2962 + $0x31] sm:$0xff]
      %v3129 = vld [vmem:[%s2962 + $0x39] sm:$0xff]
      %v3130 = vld [vmem:[%s2962 + $0x49] sm:$0xff]
      %v3131 = vld [vmem:[%s2962 + $0x51] sm:$0xff]
      %v3132 = vld [vmem:[%s2962 + $0x61] sm:$0xff]
      %v3133 = vld [vmem:[%s2962 + $0x69] sm:$0xff]
      %v3134 = vld [vmem:[%s2962 + $0x79] sm:$0xff]
      %v3135 = vld [vmem:[%s2962 + $0x81] sm:$0xff]
      %v3136 = vld [vmem:[%s2962 + $0x91] sm:$0xff]
      %v3137 = vld [vmem:[%s2962 + $0x99] sm:$0xff]
      %v3138 = vld [vmem:[%s2962 + $0xa9] sm:$0xff]
      %v3139 = vld [vmem:[%s2962 + $0xb1] sm:$0xff]
      %v3140 = vld [vmem:[%s2962 + $0xc1] sm:$0xff]
      %v3141 = vld [vmem:[%s2962 + $0xc9] sm:$0xff]
      %v3142 = vld [vmem:[%s2962 + $0xd9] sm:$0xff]
      %v3143 = vld [vmem:[%s2962 + $0xe1] sm:$0xff]
      %v3144 = vld [vmem:[%s2962 + $0xf1] sm:$0xff]
      %v3145 = vld [vmem:[%s2962 + $0xf9] sm:$0xff]
      %v3146 = vld [vmem:[%s2962 + $0x109] sm:$0xff]
      %v3147 = vld [vmem:[%s2962 + $0x111] sm:$0xff]
      %v3148 = vld [vmem:[%s2962 + $0x121] sm:$0xff]
      %v3149 = vld [vmem:[%s2962 + $0x129] sm:$0xff]
      %v3150 = vld [vmem:[%s2962 + $0x139] sm:$0xff]
      %v3151 = vld [vmem:[%s2962 + $0x141] sm:$0xff]
      %v3152 = vld [vmem:[%s2962 + $0x151] sm:$0xff]
      %v3153 = vld [vmem:[%s2962 + $0x159] sm:$0xff]
      %v3154 = vld [vmem:[%s2962 + $0x169] sm:$0xff]
      %v3155 = vld [vmem:[%s2962 + $0x171] sm:$0xff]
      %v3156 = vld [vmem:[%s2962 + $0x2] sm:$0xff]
      %v3157 = vld [vmem:[%s2962 + $0xa] sm:$0xff]
      %v3158 = vld [vmem:[%s2962 + $0x1a] sm:$0xff]
      %v3159 = vld [vmem:[%s2962 + $0x22] sm:$0xff]
      %v3160 = vld [vmem:[%s2962 + $0x32] sm:$0xff]
      %v3161 = vld [vmem:[%s2962 + $0x3a] sm:$0xff]
      %v3162 = vld [vmem:[%s2962 + $0x4a] sm:$0xff]
      %v3163 = vld [vmem:[%s2962 + $0x52] sm:$0xff]
      %v3164 = vld [vmem:[%s2962 + $0x62] sm:$0xff]
      %v3165 = vld [vmem:[%s2962 + $0x6a] sm:$0xff]
      %v3166 = vld [vmem:[%s2962 + $0x7a] sm:$0xff]
      %v3167 = vld [vmem:[%s2962 + $0x82] sm:$0xff]
      %v3168 = vld [vmem:[%s2962 + $0x92] sm:$0xff]
      %v3169 = vld [vmem:[%s2962 + $0x9a] sm:$0xff]
      %v3170 = vld [vmem:[%s2962 + $0xaa] sm:$0xff]
      %v3171 = vld [vmem:[%s2962 + $0xb2] sm:$0xff]
      %v3172 = vld [vmem:[%s2962 + $0xc2] sm:$0xff]
      %v3173 = vld [vmem:[%s2962 + $0xca] sm:$0xff]
      %v3174 = vld [vmem:[%s2962 + $0xda] sm:$0xff]
      %v3175 = vld [vmem:[%s2962 + $0xe2] sm:$0xff]
      %v3176 = vld [vmem:[%s2962 + $0xf2] sm:$0xff]
      %v3177 = vld [vmem:[%s2962 + $0xfa] sm:$0xff]
      %v3178 = vld [vmem:[%s2962 + $0x10a] sm:$0xff]
      %v3179 = vld [vmem:[%s2962 + $0x112] sm:$0xff]
      %v3180 = vld [vmem:[%s2962 + $0x122] sm:$0xff]
      %v3181 = vld [vmem:[%s2962 + $0x12a] sm:$0xff]
      %v3182 = vld [vmem:[%s2962 + $0x13a] sm:$0xff]
      %v3183 = vld [vmem:[%s2962 + $0x142] sm:$0xff]
      %v3184 = vld [vmem:[%s2962 + $0x152] sm:$0xff]
      %v3185 = vld [vmem:[%s2962 + $0x15a] sm:$0xff]
      %v3186 = vld [vmem:[%s2962 + $0x16a] sm:$0xff]
      %v3187 = vld [vmem:[%s2962 + $0x172] sm:$0xff]
      %s3188 = scalar_lea.vmem [#allocation2], 48
      %v3189 = vld [vmem:[%s3188] sm:$0xff]
      %v3190 = vld [vmem:[%s3188 + $0x8] sm:$0xff]
      %v3191 = vld [vmem:[%s3188 + $0x18] sm:$0xff]
      %v3192 = vld [vmem:[%s3188 + $0x20] sm:$0xff]
      %v3193 = vld [vmem:[%s3188 + $0x30] sm:$0xff]
      %v3194 = vld [vmem:[%s3188 + $0x38] sm:$0xff]
      %v3195 = vld [vmem:[%s3188 + $0x48] sm:$0xff]
      %v3196 = vld [vmem:[%s3188 + $0x50] sm:$0xff]
      %v3197 = vld [vmem:[%s3188 + $0x60] sm:$0xff]
      %v3198 = vld [vmem:[%s3188 + $0x68] sm:$0xff]
      %v3199 = vld [vmem:[%s3188 + $0x78] sm:$0xff]
      %v3200 = vld [vmem:[%s3188 + $0x80] sm:$0xff]
      %v3201 = vld [vmem:[%s3188 + $0x90] sm:$0xff]
      %v3202 = vld [vmem:[%s3188 + $0x98] sm:$0xff]
      %v3203 = vld [vmem:[%s3188 + $0xa8] sm:$0xff]
      %v3204 = vld [vmem:[%s3188 + $0xb0] sm:$0xff]
      %v3205 = vld [vmem:[%s3188 + $0xc0] sm:$0xff]
      %v3206 = vld [vmem:[%s3188 + $0xc8] sm:$0xff]
      %v3207 = vld [vmem:[%s3188 + $0xd8] sm:$0xff]
      %v3208 = vld [vmem:[%s3188 + $0xe0] sm:$0xff]
      %v3209 = vld [vmem:[%s3188 + $0xf0] sm:$0xff]
      %v3210 = vld [vmem:[%s3188 + $0xf8] sm:$0xff]
      %v3211 = vld [vmem:[%s3188 + $0x108] sm:$0xff]
      %v3212 = vld [vmem:[%s3188 + $0x110] sm:$0xff]
      %v3213 = vld [vmem:[%s3188 + $0x120] sm:$0xff]
      %v3214 = vld [vmem:[%s3188 + $0x128] sm:$0xff]
      %v3215 = vld [vmem:[%s3188 + $0x138] sm:$0xff]
      %v3216 = vld [vmem:[%s3188 + $0x140] sm:$0xff]
      %v3217 = vld [vmem:[%s3188 + $0x150] sm:$0xff]
      %v3218 = vld [vmem:[%s3188 + $0x158] sm:$0xff]
      %v3219 = vld [vmem:[%s3188 + $0x168] sm:$0xff]
      %v3220 = vld [vmem:[%s3188 + $0x170] sm:$0xff]
      %v3221 = vld [vmem:[%s3188 + $0x1] sm:$0xff]
      %v3222 = vld [vmem:[%s3188 + $0x9] sm:$0xff]
      %v3223 = vld [vmem:[%s3188 + $0x19] sm:$0xff]
      %v3224 = vld [vmem:[%s3188 + $0x21] sm:$0xff]
      %v3225 = vld [vmem:[%s3188 + $0x31] sm:$0xff]
      %v3226 = vld [vmem:[%s3188 + $0x39] sm:$0xff]
      %v3227 = vld [vmem:[%s3188 + $0x49] sm:$0xff]
      %v3228 = vld [vmem:[%s3188 + $0x51] sm:$0xff]
      %v3229 = vld [vmem:[%s3188 + $0x61] sm:$0xff]
      %v3230 = vld [vmem:[%s3188 + $0x69] sm:$0xff]
      %v3231 = vld [vmem:[%s3188 + $0x79] sm:$0xff]
      %v3232 = vld [vmem:[%s3188 + $0x81] sm:$0xff]
      %v3233 = vld [vmem:[%s3188 + $0x91] sm:$0xff]
      %v3234 = vld [vmem:[%s3188 + $0x99] sm:$0xff]
      %v3235 = vld [vmem:[%s3188 + $0xa9] sm:$0xff]
      %v3236 = vld [vmem:[%s3188 + $0xb1] sm:$0xff]
      %v3237 = vld [vmem:[%s3188 + $0xc1] sm:$0xff]
      %v3238 = vld [vmem:[%s3188 + $0xc9] sm:$0xff]
      %v3239 = vld [vmem:[%s3188 + $0xd9] sm:$0xff]
      %v3240 = vld [vmem:[%s3188 + $0xe1] sm:$0xff]
      %v3241 = vld [vmem:[%s3188 + $0xf1] sm:$0xff]
      %v3242 = vld [vmem:[%s3188 + $0xf9] sm:$0xff]
      %v3243 = vld [vmem:[%s3188 + $0x109] sm:$0xff]
      %v3244 = vld [vmem:[%s3188 + $0x111] sm:$0xff]
      %v3245 = vld [vmem:[%s3188 + $0x121] sm:$0xff]
      %v3246 = vld [vmem:[%s3188 + $0x129] sm:$0xff]
      %v3247 = vld [vmem:[%s3188 + $0x139] sm:$0xff]
      %v3248 = vld [vmem:[%s3188 + $0x141] sm:$0xff]
      %v3249 = vld [vmem:[%s3188 + $0x151] sm:$0xff]
      %v3250 = vld [vmem:[%s3188 + $0x159] sm:$0xff]
      %v3251 = vld [vmem:[%s3188 + $0x169] sm:$0xff]
      %v3252 = vld [vmem:[%s3188 + $0x171] sm:$0xff]
      %v3253 = vld [vmem:[%s3188 + $0x2] sm:$0xff]
      %v3254 = vld [vmem:[%s3188 + $0xa] sm:$0xff]
      %v3255 = vld [vmem:[%s3188 + $0x1a] sm:$0xff]
      %v3256 = vld [vmem:[%s3188 + $0x22] sm:$0xff]
      %v3257 = vld [vmem:[%s3188 + $0x32] sm:$0xff]
      %v3258 = vld [vmem:[%s3188 + $0x3a] sm:$0xff]
      %v3259 = vld [vmem:[%s3188 + $0x4a] sm:$0xff]
      %v3260 = vld [vmem:[%s3188 + $0x52] sm:$0xff]
      %v3261 = vld [vmem:[%s3188 + $0x62] sm:$0xff]
      %v3262 = vld [vmem:[%s3188 + $0x6a] sm:$0xff]
      %v3263 = vld [vmem:[%s3188 + $0x7a] sm:$0xff]
      %v3264 = vld [vmem:[%s3188 + $0x82] sm:$0xff]
      %v3265 = vld [vmem:[%s3188 + $0x92] sm:$0xff]
      %v3266 = vld [vmem:[%s3188 + $0x9a] sm:$0xff]
      %v3267 = vld [vmem:[%s3188 + $0xaa] sm:$0xff]
      %v3268 = vld [vmem:[%s3188 + $0xb2] sm:$0xff]
      %v3269 = vld [vmem:[%s3188 + $0xc2] sm:$0xff]
      %v3270 = vld [vmem:[%s3188 + $0xca] sm:$0xff]
      %v3271 = vld [vmem:[%s3188 + $0xda] sm:$0xff]
      %v3272 = vld [vmem:[%s3188 + $0xe2] sm:$0xff]
      %v3273 = vld [vmem:[%s3188 + $0xf2] sm:$0xff]
      %v3274 = vld [vmem:[%s3188 + $0xfa] sm:$0xff]
      %v3275 = vld [vmem:[%s3188 + $0x10a] sm:$0xff]
      %v3276 = vld [vmem:[%s3188 + $0x112] sm:$0xff]
      %v3277 = vld [vmem:[%s3188 + $0x122] sm:$0xff]
      %v3278 = vld [vmem:[%s3188 + $0x12a] sm:$0xff]
      %v3279 = vld [vmem:[%s3188 + $0x13a] sm:$0xff]
      %v3280 = vld [vmem:[%s3188 + $0x142] sm:$0xff]
      %v3281 = vld [vmem:[%s3188 + $0x152] sm:$0xff]
      %v3282 = vld [vmem:[%s3188 + $0x15a] sm:$0xff]
      %v3283 = vld [vmem:[%s3188 + $0x16a] sm:$0xff]
      %v3284 = vld [vmem:[%s3188 + $0x172] sm:$0xff]
      %3317 = vrot.lane.b32.xlu0 %v3028, 8
      %v3318 = vpop.permute.xlu0 %3317
      %3319 = vrot.lane.b32.xlu0 %v3029, 8
      %v3320 = vpop.permute.xlu0 %3319
      %3321 = vrot.lane.b32.xlu0 %v3030, 8
      %v3322 = vpop.permute.xlu0 %3321
      %3323 = vrot.lane.b32.xlu0 %v3031, 8
      %v3324 = vpop.permute.xlu0 %3323
      %3325 = vrot.lane.b32.xlu0 %v3032, 8
      %v3326 = vpop.permute.xlu0 %3325
      %3327 = vrot.lane.b32.xlu0 %v3033, 8
      %v3328 = vpop.permute.xlu0 %3327
      %3329 = vrot.lane.b32.xlu0 %v3034, 8
      %v3330 = vpop.permute.xlu0 %3329
      %3331 = vrot.lane.b32.xlu0 %v3035, 8
      %v3332 = vpop.permute.xlu0 %3331
      %3333 = vrot.lane.b32.xlu0 %v3036, 8
      %v3334 = vpop.permute.xlu0 %3333
      %3335 = vrot.lane.b32.xlu0 %v3037, 8
      %v3336 = vpop.permute.xlu0 %3335
      %3337 = vrot.lane.b32.xlu0 %v3038, 8
      %v3338 = vpop.permute.xlu0 %3337
      %3339 = vrot.lane.b32.xlu0 %v3039, 8
      %v3340 = vpop.permute.xlu0 %3339
      %3341 = vrot.lane.b32.xlu0 %v3040, 8
      %v3342 = vpop.permute.xlu0 %3341
      %3343 = vrot.lane.b32.xlu0 %v3041, 8
      %v3344 = vpop.permute.xlu0 %3343
      %3345 = vrot.lane.b32.xlu0 %v3042, 8
      %v3346 = vpop.permute.xlu0 %3345
      %3347 = vrot.lane.b32.xlu0 %v3043, 8
      %v3348 = vpop.permute.xlu0 %3347
      %3349 = vrot.lane.b32.xlu0 %v3044, 8
      %v3350 = vpop.permute.xlu0 %3349
      %3351 = vrot.lane.b32.xlu0 %v3045, 8
      %v3352 = vpop.permute.xlu0 %3351
      %3353 = vrot.lane.b32.xlu0 %v3046, 8
      %v3354 = vpop.permute.xlu0 %3353
      %3355 = vrot.lane.b32.xlu0 %v3047, 8
      %v3356 = vpop.permute.xlu0 %3355
      %3357 = vrot.lane.b32.xlu0 %v3048, 8
      %v3358 = vpop.permute.xlu0 %3357
      %3359 = vrot.lane.b32.xlu0 %v3049, 8
      %v3360 = vpop.permute.xlu0 %3359
      %3361 = vrot.lane.b32.xlu0 %v3050, 8
      %v3362 = vpop.permute.xlu0 %3361
      %3363 = vrot.lane.b32.xlu0 %v3051, 8
      %v3364 = vpop.permute.xlu0 %3363
      %3365 = vrot.lane.b32.xlu0 %v3052, 8
      %v3366 = vpop.permute.xlu0 %3365
      %3367 = vrot.lane.b32.xlu0 %v3053, 8
      %v3368 = vpop.permute.xlu0 %3367
      %3369 = vrot.lane.b32.xlu0 %v3054, 8
      %v3370 = vpop.permute.xlu0 %3369
      %3371 = vrot.lane.b32.xlu0 %v3055, 8
      %v3372 = vpop.permute.xlu0 %3371
      %3373 = vrot.lane.b32.xlu0 %v3056, 8
      %v3374 = vpop.permute.xlu0 %3373
      %3375 = vrot.lane.b32.xlu0 %v3057, 8
      %v3376 = vpop.permute.xlu0 %3375
      %3377 = vrot.lane.b32.xlu0 %v3058, 8
      %v3378 = vpop.permute.xlu0 %3377
      %3379 = vrot.lane.b32.xlu0 %v3059, 8
      %v3380 = vpop.permute.xlu0 %3379
      %3445 = vrot.lane.b32.xlu0 %v3060, 16
      %v3446 = vpop.permute.xlu0 %3445
      %3447 = vrot.lane.b32.xlu0 %v3061, 16
      %v3448 = vpop.permute.xlu0 %3447
      %3449 = vrot.lane.b32.xlu0 %v3062, 16
      %v3450 = vpop.permute.xlu0 %3449
      %3451 = vrot.lane.b32.xlu0 %v3063, 16
      %v3452 = vpop.permute.xlu0 %3451
      %3453 = vrot.lane.b32.xlu0 %v3064, 16
      %v3454 = vpop.permute.xlu0 %3453
      %3455 = vrot.lane.b32.xlu0 %v3065, 16
      %v3456 = vpop.permute.xlu0 %3455
      %3457 = vrot.lane.b32.xlu0 %v3066, 16
      %v3458 = vpop.permute.xlu0 %3457
      %3459 = vrot.lane.b32.xlu0 %v3067, 16
      %v3460 = vpop.permute.xlu0 %3459
      %3461 = vrot.lane.b32.xlu0 %v3068, 16
      %v3462 = vpop.permute.xlu0 %3461
      %3463 = vrot.lane.b32.xlu0 %v3069, 16
      %v3464 = vpop.permute.xlu0 %3463
      %3465 = vrot.lane.b32.xlu0 %v3070, 16
      %v3466 = vpop.permute.xlu0 %3465
      %3467 = vrot.lane.b32.xlu0 %v3071, 16
      %v3468 = vpop.permute.xlu0 %3467
      %3469 = vrot.lane.b32.xlu0 %v3072, 16
      %v3470 = vpop.permute.xlu0 %3469
      %3471 = vrot.lane.b32.xlu0 %v3073, 16
      %v3472 = vpop.permute.xlu0 %3471
      %3473 = vrot.lane.b32.xlu0 %v3074, 16
      %v3474 = vpop.permute.xlu0 %3473
      %3475 = vrot.lane.b32.xlu0 %v3075, 16
      %v3476 = vpop.permute.xlu0 %3475
      %3477 = vrot.lane.b32.xlu0 %v3076, 16
      %v3478 = vpop.permute.xlu0 %3477
      %3479 = vrot.lane.b32.xlu0 %v3077, 16
      %v3480 = vpop.permute.xlu0 %3479
      %3481 = vrot.lane.b32.xlu0 %v3078, 16
      %v3482 = vpop.permute.xlu0 %3481
      %3483 = vrot.lane.b32.xlu0 %v3079, 16
      %v3484 = vpop.permute.xlu0 %3483
      %3485 = vrot.lane.b32.xlu0 %v3080, 16
      %v3486 = vpop.permute.xlu0 %3485
      %3487 = vrot.lane.b32.xlu0 %v3081, 16
      %v3488 = vpop.permute.xlu0 %3487
      %3489 = vrot.lane.b32.xlu0 %v3082, 16
      %v3490 = vpop.permute.xlu0 %3489
      %3491 = vrot.lane.b32.xlu0 %v3083, 16
      %v3492 = vpop.permute.xlu0 %3491
      %3493 = vrot.lane.b32.xlu0 %v3084, 16
      %v3494 = vpop.permute.xlu0 %3493
      %3495 = vrot.lane.b32.xlu0 %v3085, 16
      %v3496 = vpop.permute.xlu0 %3495
      %3497 = vrot.lane.b32.xlu0 %v3086, 16
      %v3498 = vpop.permute.xlu0 %3497
      %3499 = vrot.lane.b32.xlu0 %v3087, 16
      %v3500 = vpop.permute.xlu0 %3499
      %3501 = vrot.lane.b32.xlu0 %v3088, 16
      %v3502 = vpop.permute.xlu0 %3501
      %3503 = vrot.lane.b32.xlu0 %v3089, 16
      %v3504 = vpop.permute.xlu0 %3503
      %3505 = vrot.lane.b32.xlu0 %v3090, 16
      %v3506 = vpop.permute.xlu0 %3505
      %3507 = vrot.lane.b32.xlu0 %v3091, 16
      %v3508 = vpop.permute.xlu0 %3507
      %3573 = vrot.lane.b32.xlu0 %v3092, 24
      %v3574 = vpop.permute.xlu0 %3573
      %3575 = vrot.lane.b32.xlu0 %v3093, 24
      %v3576 = vpop.permute.xlu0 %3575
      %3577 = vrot.lane.b32.xlu0 %v3094, 24
      %v3578 = vpop.permute.xlu0 %3577
      %3579 = vrot.lane.b32.xlu0 %v3095, 24
      %v3580 = vpop.permute.xlu0 %3579
      %3581 = vrot.lane.b32.xlu0 %v3096, 24
      %v3582 = vpop.permute.xlu0 %3581
      %3583 = vrot.lane.b32.xlu0 %v3097, 24
      %v3584 = vpop.permute.xlu0 %3583
      %3585 = vrot.lane.b32.xlu0 %v3098, 24
      %v3586 = vpop.permute.xlu0 %3585
      %3587 = vrot.lane.b32.xlu0 %v3099, 24
      %v3588 = vpop.permute.xlu0 %3587
      %3589 = vrot.lane.b32.xlu0 %v3100, 24
      %v3590 = vpop.permute.xlu0 %3589
      %3591 = vrot.lane.b32.xlu0 %v3101, 24
      %v3592 = vpop.permute.xlu0 %3591
      %3593 = vrot.lane.b32.xlu0 %v3102, 24
      %v3594 = vpop.permute.xlu0 %3593
      %3595 = vrot.lane.b32.xlu0 %v3103, 24
      %v3596 = vpop.permute.xlu0 %3595
      %3597 = vrot.lane.b32.xlu0 %v3104, 24
      %v3598 = vpop.permute.xlu0 %3597
      %3599 = vrot.lane.b32.xlu0 %v3105, 24
      %v3600 = vpop.permute.xlu0 %3599
      %3601 = vrot.lane.b32.xlu0 %v3106, 24
      %v3602 = vpop.permute.xlu0 %3601
      %3603 = vrot.lane.b32.xlu0 %v3107, 24
      %v3604 = vpop.permute.xlu0 %3603
      %3605 = vrot.lane.b32.xlu0 %v3108, 24
      %v3606 = vpop.permute.xlu0 %3605
      %3607 = vrot.lane.b32.xlu0 %v3109, 24
      %v3608 = vpop.permute.xlu0 %3607
      %3609 = vrot.lane.b32.xlu0 %v3110, 24
      %v3610 = vpop.permute.xlu0 %3609
      %3611 = vrot.lane.b32.xlu0 %v3111, 24
      %v3612 = vpop.permute.xlu0 %3611
      %3613 = vrot.lane.b32.xlu0 %v3112, 24
      %v3614 = vpop.permute.xlu0 %3613
      %3615 = vrot.lane.b32.xlu0 %v3113, 24
      %v3616 = vpop.permute.xlu0 %3615
      %3617 = vrot.lane.b32.xlu0 %v3114, 24
      %v3618 = vpop.permute.xlu0 %3617
      %3619 = vrot.lane.b32.xlu0 %v3115, 24
      %v3620 = vpop.permute.xlu0 %3619
      %3621 = vrot.lane.b32.xlu0 %v3116, 24
      %v3622 = vpop.permute.xlu0 %3621
      %3623 = vrot.lane.b32.xlu0 %v3117, 24
      %v3624 = vpop.permute.xlu0 %3623
      %3625 = vrot.lane.b32.xlu0 %v3118, 24
      %v3626 = vpop.permute.xlu0 %3625
      %3627 = vrot.lane.b32.xlu0 %v3119, 24
      %v3628 = vpop.permute.xlu0 %3627
      %3629 = vrot.lane.b32.xlu0 %v3120, 24
      %v3630 = vpop.permute.xlu0 %3629
      %3631 = vrot.lane.b32.xlu0 %v3121, 24
      %v3632 = vpop.permute.xlu0 %3631
      %3633 = vrot.lane.b32.xlu0 %v3122, 24
      %v3634 = vpop.permute.xlu0 %3633
      %3635 = vrot.lane.b32.xlu0 %v3123, 24
      %v3636 = vpop.permute.xlu0 %3635
      %3701 = vrot.lane.b32.xlu0 %v3124, 32
      %v3702 = vpop.permute.xlu0 %3701
      %3703 = vrot.lane.b32.xlu0 %v3125, 32
      %v3704 = vpop.permute.xlu0 %3703
      %3705 = vrot.lane.b32.xlu0 %v3126, 32
      %v3706 = vpop.permute.xlu0 %3705
      %3707 = vrot.lane.b32.xlu0 %v3127, 32
      %v3708 = vpop.permute.xlu0 %3707
      %3709 = vrot.lane.b32.xlu0 %v3128, 32
      %v3710 = vpop.permute.xlu0 %3709
      %3711 = vrot.lane.b32.xlu0 %v3129, 32
      %v3712 = vpop.permute.xlu0 %3711
      %3713 = vrot.lane.b32.xlu0 %v3130, 32
      %v3714 = vpop.permute.xlu0 %3713
      %3715 = vrot.lane.b32.xlu0 %v3131, 32
      %v3716 = vpop.permute.xlu0 %3715
      %3717 = vrot.lane.b32.xlu0 %v3132, 32
      %v3718 = vpop.permute.xlu0 %3717
      %3719 = vrot.lane.b32.xlu0 %v3133, 32
      %v3720 = vpop.permute.xlu0 %3719
      %3721 = vrot.lane.b32.xlu0 %v3134, 32
      %v3722 = vpop.permute.xlu0 %3721
      %3723 = vrot.lane.b32.xlu0 %v3135, 32
      %v3724 = vpop.permute.xlu0 %3723
      %3725 = vrot.lane.b32.xlu0 %v3136, 32
      %v3726 = vpop.permute.xlu0 %3725
      %3727 = vrot.lane.b32.xlu0 %v3137, 32
      %v3728 = vpop.permute.xlu0 %3727
      %3729 = vrot.lane.b32.xlu0 %v3138, 32
      %v3730 = vpop.permute.xlu0 %3729
      %3731 = vrot.lane.b32.xlu0 %v3139, 32
      %v3732 = vpop.permute.xlu0 %3731
      %3733 = vrot.lane.b32.xlu0 %v3140, 32
      %v3734 = vpop.permute.xlu0 %3733
      %3735 = vrot.lane.b32.xlu0 %v3141, 32
      %v3736 = vpop.permute.xlu0 %3735
      %3737 = vrot.lane.b32.xlu0 %v3142, 32
      %v3738 = vpop.permute.xlu0 %3737
      %3739 = vrot.lane.b32.xlu0 %v3143, 32
      %v3740 = vpop.permute.xlu0 %3739
      %3741 = vrot.lane.b32.xlu0 %v3144, 32
      %v3742 = vpop.permute.xlu0 %3741
      %3743 = vrot.lane.b32.xlu0 %v3145, 32
      %v3744 = vpop.permute.xlu0 %3743
      %3745 = vrot.lane.b32.xlu0 %v3146, 32
      %v3746 = vpop.permute.xlu0 %3745
      %3747 = vrot.lane.b32.xlu0 %v3147, 32
      %v3748 = vpop.permute.xlu0 %3747
      %3749 = vrot.lane.b32.xlu0 %v3148, 32
      %v3750 = vpop.permute.xlu0 %3749
      %3751 = vrot.lane.b32.xlu0 %v3149, 32
      %v3752 = vpop.permute.xlu0 %3751
      %3753 = vrot.lane.b32.xlu0 %v3150, 32
      %v3754 = vpop.permute.xlu0 %3753
      %3755 = vrot.lane.b32.xlu0 %v3151, 32
      %v3756 = vpop.permute.xlu0 %3755
      %3757 = vrot.lane.b32.xlu0 %v3152, 32
      %v3758 = vpop.permute.xlu0 %3757
      %3759 = vrot.lane.b32.xlu0 %v3153, 32
      %v3760 = vpop.permute.xlu0 %3759
      %3761 = vrot.lane.b32.xlu0 %v3154, 32
      %v3762 = vpop.permute.xlu0 %3761
      %3763 = vrot.lane.b32.xlu0 %v3155, 32
      %v3764 = vpop.permute.xlu0 %3763
      %3829 = vrot.lane.b32.xlu0 %v3156, 40
      %v3830 = vpop.permute.xlu0 %3829
      %3831 = vrot.lane.b32.xlu0 %v3157, 40
      %v3832 = vpop.permute.xlu0 %3831
      %3833 = vrot.lane.b32.xlu0 %v3158, 40
      %v3834 = vpop.permute.xlu0 %3833
      %3835 = vrot.lane.b32.xlu0 %v3159, 40
      %v3836 = vpop.permute.xlu0 %3835
      %3837 = vrot.lane.b32.xlu0 %v3160, 40
      %v3838 = vpop.permute.xlu0 %3837
      %3839 = vrot.lane.b32.xlu0 %v3161, 40
      %v3840 = vpop.permute.xlu0 %3839
      %3841 = vrot.lane.b32.xlu0 %v3162, 40
      %v3842 = vpop.permute.xlu0 %3841
      %3843 = vrot.lane.b32.xlu0 %v3163, 40
      %v3844 = vpop.permute.xlu0 %3843
      %3845 = vrot.lane.b32.xlu0 %v3164, 40
      %v3846 = vpop.permute.xlu0 %3845
      %3847 = vrot.lane.b32.xlu0 %v3165, 40
      %v3848 = vpop.permute.xlu0 %3847
      %3849 = vrot.lane.b32.xlu0 %v3166, 40
      %v3850 = vpop.permute.xlu0 %3849
      %3851 = vrot.lane.b32.xlu0 %v3167, 40
      %v3852 = vpop.permute.xlu0 %3851
      %3853 = vrot.lane.b32.xlu0 %v3168, 40
      %v3854 = vpop.permute.xlu0 %3853
      %3855 = vrot.lane.b32.xlu0 %v3169, 40
      %v3856 = vpop.permute.xlu0 %3855
      %3857 = vrot.lane.b32.xlu0 %v3170, 40
      %v3858 = vpop.permute.xlu0 %3857
      %3859 = vrot.lane.b32.xlu0 %v3171, 40
      %v3860 = vpop.permute.xlu0 %3859
      %3861 = vrot.lane.b32.xlu0 %v3172, 40
      %v3862 = vpop.permute.xlu0 %3861
      %3863 = vrot.lane.b32.xlu0 %v3173, 40
      %v3864 = vpop.permute.xlu0 %3863
      %3865 = vrot.lane.b32.xlu0 %v3174, 40
      %v3866 = vpop.permute.xlu0 %3865
      %3867 = vrot.lane.b32.xlu0 %v3175, 40
      %v3868 = vpop.permute.xlu0 %3867
      %3869 = vrot.lane.b32.xlu0 %v3176, 40
      %v3870 = vpop.permute.xlu0 %3869
      %3871 = vrot.lane.b32.xlu0 %v3177, 40
      %v3872 = vpop.permute.xlu0 %3871
      %3873 = vrot.lane.b32.xlu0 %v3178, 40
      %v3874 = vpop.permute.xlu0 %3873
      %3875 = vrot.lane.b32.xlu0 %v3179, 40
      %v3876 = vpop.permute.xlu0 %3875
      %3877 = vrot.lane.b32.xlu0 %v3180, 40
      %v3878 = vpop.permute.xlu0 %3877
      %3879 = vrot.lane.b32.xlu0 %v3181, 40
      %v3880 = vpop.permute.xlu0 %3879
      %3881 = vrot.lane.b32.xlu0 %v3182, 40
      %v3882 = vpop.permute.xlu0 %3881
      %3883 = vrot.lane.b32.xlu0 %v3183, 40
      %v3884 = vpop.permute.xlu0 %3883
      %3885 = vrot.lane.b32.xlu0 %v3184, 40
      %v3886 = vpop.permute.xlu0 %3885
      %3887 = vrot.lane.b32.xlu0 %v3185, 40
      %v3888 = vpop.permute.xlu0 %3887
      %3889 = vrot.lane.b32.xlu0 %v3186, 40
      %v3890 = vpop.permute.xlu0 %3889
      %3891 = vrot.lane.b32.xlu0 %v3187, 40
      %v3892 = vpop.permute.xlu0 %3891
      %3957 = vrot.lane.b32.xlu0 %v3189, 48
      %v3958 = vpop.permute.xlu0 %3957
      %3959 = vrot.lane.b32.xlu0 %v3190, 48
      %v3960 = vpop.permute.xlu0 %3959
      %3961 = vrot.lane.b32.xlu0 %v3191, 48
      %v3962 = vpop.permute.xlu0 %3961
      %3963 = vrot.lane.b32.xlu0 %v3192, 48
      %v3964 = vpop.permute.xlu0 %3963
      %3965 = vrot.lane.b32.xlu0 %v3193, 48
      %v3966 = vpop.permute.xlu0 %3965
      %3967 = vrot.lane.b32.xlu0 %v3194, 48
      %v3968 = vpop.permute.xlu0 %3967
      %3969 = vrot.lane.b32.xlu0 %v3195, 48
      %v3970 = vpop.permute.xlu0 %3969
      %3971 = vrot.lane.b32.xlu0 %v3196, 48
      %v3972 = vpop.permute.xlu0 %3971
      %3973 = vrot.lane.b32.xlu0 %v3197, 48
      %v3974 = vpop.permute.xlu0 %3973
      %3975 = vrot.lane.b32.xlu0 %v3198, 48
      %v3976 = vpop.permute.xlu0 %3975
      %3977 = vrot.lane.b32.xlu0 %v3199, 48
      %v3978 = vpop.permute.xlu0 %3977
      %3979 = vrot.lane.b32.xlu0 %v3200, 48
      %v3980 = vpop.permute.xlu0 %3979
      %3981 = vrot.lane.b32.xlu0 %v3201, 48
      %v3982 = vpop.permute.xlu0 %3981
      %3983 = vrot.lane.b32.xlu0 %v3202, 48
      %v3984 = vpop.permute.xlu0 %3983
      %3985 = vrot.lane.b32.xlu0 %v3203, 48
      %v3986 = vpop.permute.xlu0 %3985
      %3987 = vrot.lane.b32.xlu0 %v3204, 48
      %v3988 = vpop.permute.xlu0 %3987
      %3989 = vrot.lane.b32.xlu0 %v3205, 48
      %v3990 = vpop.permute.xlu0 %3989
      %3991 = vrot.lane.b32.xlu0 %v3206, 48
      %v3992 = vpop.permute.xlu0 %3991
      %3993 = vrot.lane.b32.xlu0 %v3207, 48
      %v3994 = vpop.permute.xlu0 %3993
      %3995 = vrot.lane.b32.xlu0 %v3208, 48
      %v3996 = vpop.permute.xlu0 %3995
      %3997 = vrot.lane.b32.xlu0 %v3209, 48
      %v3998 = vpop.permute.xlu0 %3997
      %3999 = vrot.lane.b32.xlu0 %v3210, 48
      %v4000 = vpop.permute.xlu0 %3999
      %4001 = vrot.lane.b32.xlu0 %v3211, 48
      %v4002 = vpop.permute.xlu0 %4001
      %4003 = vrot.lane.b32.xlu0 %v3212, 48
      %v4004 = vpop.permute.xlu0 %4003
      %4005 = vrot.lane.b32.xlu0 %v3213, 48
      %v4006 = vpop.permute.xlu0 %4005
      %4007 = vrot.lane.b32.xlu0 %v3214, 48
      %v4008 = vpop.permute.xlu0 %4007
      %4009 = vrot.lane.b32.xlu0 %v3215, 48
      %v4010 = vpop.permute.xlu0 %4009
      %4011 = vrot.lane.b32.xlu0 %v3216, 48
      %v4012 = vpop.permute.xlu0 %4011
      %4013 = vrot.lane.b32.xlu0 %v3217, 48
      %v4014 = vpop.permute.xlu0 %4013
      %4015 = vrot.lane.b32.xlu0 %v3218, 48
      %v4016 = vpop.permute.xlu0 %4015
      %4017 = vrot.lane.b32.xlu0 %v3219, 48
      %v4018 = vpop.permute.xlu0 %4017
      %4019 = vrot.lane.b32.xlu0 %v3220, 48
      %v4020 = vpop.permute.xlu0 %4019
      %4085 = vrot.lane.b32.xlu0 %v3221, 56
      %v4086 = vpop.permute.xlu0 %4085
      %4087 = vrot.lane.b32.xlu0 %v3222, 56
      %v4088 = vpop.permute.xlu0 %4087
      %4089 = vrot.lane.b32.xlu0 %v3223, 56
      %v4090 = vpop.permute.xlu0 %4089
      %4091 = vrot.lane.b32.xlu0 %v3224, 56
      %v4092 = vpop.permute.xlu0 %4091
      %4093 = vrot.lane.b32.xlu0 %v3225, 56
      %v4094 = vpop.permute.xlu0 %4093
      %4095 = vrot.lane.b32.xlu0 %v3226, 56
      %v4096 = vpop.permute.xlu0 %4095
      %4097 = vrot.lane.b32.xlu0 %v3227, 56
      %v4098 = vpop.permute.xlu0 %4097
      %4099 = vrot.lane.b32.xlu0 %v3228, 56
      %v4100 = vpop.permute.xlu0 %4099
      %4101 = vrot.lane.b32.xlu0 %v3229, 56
      %v4102 = vpop.permute.xlu0 %4101
      %4103 = vrot.lane.b32.xlu0 %v3230, 56
      %v4104 = vpop.permute.xlu0 %4103
      %4105 = vrot.lane.b32.xlu0 %v3231, 56
      %v4106 = vpop.permute.xlu0 %4105
      %4107 = vrot.lane.b32.xlu0 %v3232, 56
      %v4108 = vpop.permute.xlu0 %4107
      %4109 = vrot.lane.b32.xlu0 %v3233, 56
      %v4110 = vpop.permute.xlu0 %4109
      %4111 = vrot.lane.b32.xlu0 %v3234, 56
      %v4112 = vpop.permute.xlu0 %4111
      %4113 = vrot.lane.b32.xlu0 %v3235, 56
      %v4114 = vpop.permute.xlu0 %4113
      %4115 = vrot.lane.b32.xlu0 %v3236, 56
      %v4116 = vpop.permute.xlu0 %4115
      %4117 = vrot.lane.b32.xlu0 %v3237, 56
      %v4118 = vpop.permute.xlu0 %4117
      %4119 = vrot.lane.b32.xlu0 %v3238, 56
      %v4120 = vpop.permute.xlu0 %4119
      %4121 = vrot.lane.b32.xlu0 %v3239, 56
      %v4122 = vpop.permute.xlu0 %4121
      %4123 = vrot.lane.b32.xlu0 %v3240, 56
      %v4124 = vpop.permute.xlu0 %4123
      %4125 = vrot.lane.b32.xlu0 %v3241, 56
      %v4126 = vpop.permute.xlu0 %4125
      %4127 = vrot.lane.b32.xlu0 %v3242, 56
      %v4128 = vpop.permute.xlu0 %4127
      %4129 = vrot.lane.b32.xlu0 %v3243, 56
      %v4130 = vpop.permute.xlu0 %4129
      %4131 = vrot.lane.b32.xlu0 %v3244, 56
      %v4132 = vpop.permute.xlu0 %4131
      %4133 = vrot.lane.b32.xlu0 %v3245, 56
      %v4134 = vpop.permute.xlu0 %4133
      %4135 = vrot.lane.b32.xlu0 %v3246, 56
      %v4136 = vpop.permute.xlu0 %4135
      %4137 = vrot.lane.b32.xlu0 %v3247, 56
      %v4138 = vpop.permute.xlu0 %4137
      %4139 = vrot.lane.b32.xlu0 %v3248, 56
      %v4140 = vpop.permute.xlu0 %4139
      %4141 = vrot.lane.b32.xlu0 %v3249, 56
      %v4142 = vpop.permute.xlu0 %4141
      %4143 = vrot.lane.b32.xlu0 %v3250, 56
      %v4144 = vpop.permute.xlu0 %4143
      %4145 = vrot.lane.b32.xlu0 %v3251, 56
      %v4146 = vpop.permute.xlu0 %4145
      %4147 = vrot.lane.b32.xlu0 %v3252, 56
      %v4148 = vpop.permute.xlu0 %4147
      %4213 = vrot.lane.b32.xlu0 %v3253, 64
      %v4214 = vpop.permute.xlu0 %4213
      %4215 = vrot.lane.b32.xlu0 %v3254, 64
      %v4216 = vpop.permute.xlu0 %4215
      %4217 = vrot.lane.b32.xlu0 %v3255, 64
      %v4218 = vpop.permute.xlu0 %4217
      %4219 = vrot.lane.b32.xlu0 %v3256, 64
      %v4220 = vpop.permute.xlu0 %4219
      %4221 = vrot.lane.b32.xlu0 %v3257, 64
      %v4222 = vpop.permute.xlu0 %4221
      %4223 = vrot.lane.b32.xlu0 %v3258, 64
      %v4224 = vpop.permute.xlu0 %4223
      %4225 = vrot.lane.b32.xlu0 %v3259, 64
      %v4226 = vpop.permute.xlu0 %4225
      %4227 = vrot.lane.b32.xlu0 %v3260, 64
      %v4228 = vpop.permute.xlu0 %4227
      %4229 = vrot.lane.b32.xlu0 %v3261, 64
      %v4230 = vpop.permute.xlu0 %4229
      %4231 = vrot.lane.b32.xlu0 %v3262, 64
      %v4232 = vpop.permute.xlu0 %4231
      %4233 = vrot.lane.b32.xlu0 %v3263, 64
      %v4234 = vpop.permute.xlu0 %4233
      %4235 = vrot.lane.b32.xlu0 %v3264, 64
      %v4236 = vpop.permute.xlu0 %4235
      %4237 = vrot.lane.b32.xlu0 %v3265, 64
      %v4238 = vpop.permute.xlu0 %4237
      %4239 = vrot.lane.b32.xlu0 %v3266, 64
      %v4240 = vpop.permute.xlu0 %4239
      %4241 = vrot.lane.b32.xlu0 %v3267, 64
      %v4242 = vpop.permute.xlu0 %4241
      %4243 = vrot.lane.b32.xlu0 %v3268, 64
      %v4244 = vpop.permute.xlu0 %4243
      %4245 = vrot.lane.b32.xlu0 %v3269, 64
      %v4246 = vpop.permute.xlu0 %4245
      %4247 = vrot.lane.b32.xlu0 %v3270, 64
      %v4248 = vpop.permute.xlu0 %4247
      %4249 = vrot.lane.b32.xlu0 %v3271, 64
      %v4250 = vpop.permute.xlu0 %4249
      %4251 = vrot.lane.b32.xlu0 %v3272, 64
      %v4252 = vpop.permute.xlu0 %4251
      %4253 = vrot.lane.b32.xlu0 %v3273, 64
      %v4254 = vpop.permute.xlu0 %4253
      %4255 = vrot.lane.b32.xlu0 %v3274, 64
      %v4256 = vpop.permute.xlu0 %4255
      %4257 = vrot.lane.b32.xlu0 %v3275, 64
      %v4258 = vpop.permute.xlu0 %4257
      %4259 = vrot.lane.b32.xlu0 %v3276, 64
      %v4260 = vpop.permute.xlu0 %4259
      %4261 = vrot.lane.b32.xlu0 %v3277, 64
      %v4262 = vpop.permute.xlu0 %4261
      %4263 = vrot.lane.b32.xlu0 %v3278, 64
      %v4264 = vpop.permute.xlu0 %4263
      %4265 = vrot.lane.b32.xlu0 %v3279, 64
      %v4266 = vpop.permute.xlu0 %4265
      %4267 = vrot.lane.b32.xlu0 %v3280, 64
      %v4268 = vpop.permute.xlu0 %4267
      %4269 = vrot.lane.b32.xlu0 %v3281, 64
      %v4270 = vpop.permute.xlu0 %4269
      %4271 = vrot.lane.b32.xlu0 %v3282, 64
      %v4272 = vpop.permute.xlu0 %4271
      %4273 = vrot.lane.b32.xlu0 %v3283, 64
      %v4274 = vpop.permute.xlu0 %4273
      %4275 = vrot.lane.b32.xlu0 %v3284, 64
      %v4276 = vpop.permute.xlu0 %4275
      %v4309 = vsel %vm2963, %v2996, %v3318
      %v4310 = vsel %vm2963, %v2997, %v3320
      %v4311 = vsel %vm2963, %v2998, %v3322
      %v4312 = vsel %vm2963, %v2999, %v3324
      %v4313 = vsel %vm2963, %v3000, %v3326
      %v4314 = vsel %vm2963, %v3001, %v3328
      %v4315 = vsel %vm2963, %v3002, %v3330
      %v4316 = vsel %vm2963, %v3003, %v3332
      %v4317 = vsel %vm2963, %v3004, %v3334
      %v4318 = vsel %vm2963, %v3005, %v3336
      %v4319 = vsel %vm2963, %v3006, %v3338
      %v4320 = vsel %vm2963, %v3007, %v3340
      %v4321 = vsel %vm2963, %v3008, %v3342
      %v4322 = vsel %vm2963, %v3009, %v3344
      %v4323 = vsel %vm2963, %v3010, %v3346
      %v4324 = vsel %vm2963, %v3011, %v3348
      %v4325 = vsel %vm2963, %v3012, %v3350
      %v4326 = vsel %vm2963, %v3013, %v3352
      %v4327 = vsel %vm2963, %v3014, %v3354
      %v4328 = vsel %vm2963, %v3015, %v3356
      %v4329 = vsel %vm2963, %v3016, %v3358
      %v4330 = vsel %vm2963, %v3017, %v3360
      %v4331 = vsel %vm2963, %v3018, %v3362
      %v4332 = vsel %vm2963, %v3019, %v3364
      %v4333 = vsel %vm2963, %v3020, %v3366
      %v4334 = vsel %vm2963, %v3021, %v3368
      %v4335 = vsel %vm2963, %v3022, %v3370
      %v4336 = vsel %vm2963, %v3023, %v3372
      %v4337 = vsel %vm2963, %v3024, %v3374
      %v4338 = vsel %vm2963, %v3025, %v3376
      %v4339 = vsel %vm2963, %v3026, %v3378
      %v4340 = vsel %vm2963, %v3027, %v3380
      %vm4341 = vcmask 130048
      %v4342 = vsel %vm4341, %v4309, %v3446
      %v4343 = vsel %vm4341, %v4310, %v3448
      %v4344 = vsel %vm4341, %v4311, %v3450
      %v4345 = vsel %vm4341, %v4312, %v3452
      %v4346 = vsel %vm4341, %v4313, %v3454
      %v4347 = vsel %vm4341, %v4314, %v3456
      %v4348 = vsel %vm4341, %v4315, %v3458
      %v4349 = vsel %vm4341, %v4316, %v3460
      %v4350 = vsel %vm4341, %v4317, %v3462
      %v4351 = vsel %vm4341, %v4318, %v3464
      %v4352 = vsel %vm4341, %v4319, %v3466
      %v4353 = vsel %vm4341, %v4320, %v3468
      %v4354 = vsel %vm4341, %v4321, %v3470
      %v4355 = vsel %vm4341, %v4322, %v3472
      %v4356 = vsel %vm4341, %v4323, %v3474
      %v4357 = vsel %vm4341, %v4324, %v3476
      %v4358 = vsel %vm4341, %v4325, %v3478
      %v4359 = vsel %vm4341, %v4326, %v3480
      %v4360 = vsel %vm4341, %v4327, %v3482
      %v4361 = vsel %vm4341, %v4328, %v3484
      %v4362 = vsel %vm4341, %v4329, %v3486
      %v4363 = vsel %vm4341, %v4330, %v3488
      %v4364 = vsel %vm4341, %v4331, %v3490
      %v4365 = vsel %vm4341, %v4332, %v3492
      %v4366 = vsel %vm4341, %v4333, %v3494
      %v4367 = vsel %vm4341, %v4334, %v3496
      %v4368 = vsel %vm4341, %v4335, %v3498
      %v4369 = vsel %vm4341, %v4336, %v3500
      %v4370 = vsel %vm4341, %v4337, %v3502
      %v4371 = vsel %vm4341, %v4338, %v3504
      %v4372 = vsel %vm4341, %v4339, %v3506
      %v4373 = vsel %vm4341, %v4340, %v3508
      %vm4374 = vcmask 195584
      %v4375 = vsel %vm4374, %v4342, %v3574
      %v4376 = vsel %vm4374, %v4343, %v3576
      %v4377 = vsel %vm4374, %v4344, %v3578
      %v4378 = vsel %vm4374, %v4345, %v3580
      %v4379 = vsel %vm4374, %v4346, %v3582
      %v4380 = vsel %vm4374, %v4347, %v3584
      %v4381 = vsel %vm4374, %v4348, %v3586
      %v4382 = vsel %vm4374, %v4349, %v3588
      %v4383 = vsel %vm4374, %v4350, %v3590
      %v4384 = vsel %vm4374, %v4351, %v3592
      %v4385 = vsel %vm4374, %v4352, %v3594
      %v4386 = vsel %vm4374, %v4353, %v3596
      %v4387 = vsel %vm4374, %v4354, %v3598
      %v4388 = vsel %vm4374, %v4355, %v3600
      %v4389 = vsel %vm4374, %v4356, %v3602
      %v4390 = vsel %vm4374, %v4357, %v3604
      %v4391 = vsel %vm4374, %v4358, %v3606
      %v4392 = vsel %vm4374, %v4359, %v3608
      %v4393 = vsel %vm4374, %v4360, %v3610
      %v4394 = vsel %vm4374, %v4361, %v3612
      %v4395 = vsel %vm4374, %v4362, %v3614
      %v4396 = vsel %vm4374, %v4363, %v3616
      %v4397 = vsel %vm4374, %v4364, %v3618
      %v4398 = vsel %vm4374, %v4365, %v3620
      %v4399 = vsel %vm4374, %v4366, %v3622
      %v4400 = vsel %vm4374, %v4367, %v3624
      %v4401 = vsel %vm4374, %v4368, %v3626
      %v4402 = vsel %vm4374, %v4369, %v3628
      %v4403 = vsel %vm4374, %v4370, %v3630
      %v4404 = vsel %vm4374, %v4371, %v3632
      %v4405 = vsel %vm4374, %v4372, %v3634
      %v4406 = vsel %vm4374, %v4373, %v3636
      %vm4407 = vcmask 261120
      %v4408 = vsel %vm4407, %v4375, %v3702
      %v4409 = vsel %vm4407, %v4376, %v3704
      %v4410 = vsel %vm4407, %v4377, %v3706
      %v4411 = vsel %vm4407, %v4378, %v3708
      %v4412 = vsel %vm4407, %v4379, %v3710
      %v4413 = vsel %vm4407, %v4380, %v3712
      %v4414 = vsel %vm4407, %v4381, %v3714
      %v4415 = vsel %vm4407, %v4382, %v3716
      %v4416 = vsel %vm4407, %v4383, %v3718
      %v4417 = vsel %vm4407, %v4384, %v3720
      %v4418 = vsel %vm4407, %v4385, %v3722
      %v4419 = vsel %vm4407, %v4386, %v3724
      %v4420 = vsel %vm4407, %v4387, %v3726
      %v4421 = vsel %vm4407, %v4388, %v3728
      %v4422 = vsel %vm4407, %v4389, %v3730
      %v4423 = vsel %vm4407, %v4390, %v3732
      %v4424 = vsel %vm4407, %v4391, %v3734
      %v4425 = vsel %vm4407, %v4392, %v3736
      %v4426 = vsel %vm4407, %v4393, %v3738
      %v4427 = vsel %vm4407, %v4394, %v3740
      %v4428 = vsel %vm4407, %v4395, %v3742
      %v4429 = vsel %vm4407, %v4396, %v3744
      %v4430 = vsel %vm4407, %v4397, %v3746
      %v4431 = vsel %vm4407, %v4398, %v3748
      %v4432 = vsel %vm4407, %v4399, %v3750
      %v4433 = vsel %vm4407, %v4400, %v3752
      %v4434 = vsel %vm4407, %v4401, %v3754
      %v4435 = vsel %vm4407, %v4402, %v3756
      %v4436 = vsel %vm4407, %v4403, %v3758
      %v4437 = vsel %vm4407, %v4404, %v3760
      %v4438 = vsel %vm4407, %v4405, %v3762
      %v4439 = vsel %vm4407, %v4406, %v3764
      %vm4440 = vcmask 326656
      %v4441 = vsel %vm4440, %v4408, %v3830
      %v4442 = vsel %vm4440, %v4409, %v3832
      %v4443 = vsel %vm4440, %v4410, %v3834
      %v4444 = vsel %vm4440, %v4411, %v3836
      %v4445 = vsel %vm4440, %v4412, %v3838
      %v4446 = vsel %vm4440, %v4413, %v3840
      %v4447 = vsel %vm4440, %v4414, %v3842
      %v4448 = vsel %vm4440, %v4415, %v3844
      %v4449 = vsel %vm4440, %v4416, %v3846
      %v4450 = vsel %vm4440, %v4417, %v3848
      %v4451 = vsel %vm4440, %v4418, %v3850
      %v4452 = vsel %vm4440, %v4419, %v3852
      %v4453 = vsel %vm4440, %v4420, %v3854
      %v4454 = vsel %vm4440, %v4421, %v3856
      %v4455 = vsel %vm4440, %v4422, %v3858
      %v4456 = vsel %vm4440, %v4423, %v3860
      %v4457 = vsel %vm4440, %v4424, %v3862
      %v4458 = vsel %vm4440, %v4425, %v3864
      %v4459 = vsel %vm4440, %v4426, %v3866
      %v4460 = vsel %vm4440, %v4427, %v3868
      %v4461 = vsel %vm4440, %v4428, %v3870
      %v4462 = vsel %vm4440, %v4429, %v3872
      %v4463 = vsel %vm4440, %v4430, %v3874
      %v4464 = vsel %vm4440, %v4431, %v3876
      %v4465 = vsel %vm4440, %v4432, %v3878
      %v4466 = vsel %vm4440, %v4433, %v3880
      %v4467 = vsel %vm4440, %v4434, %v3882
      %v4468 = vsel %vm4440, %v4435, %v3884
      %v4469 = vsel %vm4440, %v4436, %v3886
      %v4470 = vsel %vm4440, %v4437, %v3888
      %v4471 = vsel %vm4440, %v4438, %v3890
      %v4472 = vsel %vm4440, %v4439, %v3892
      %vm4473 = vcmask 392192
      %v4474 = vsel %vm4473, %v4441, %v3958
      %v4475 = vsel %vm4473, %v4442, %v3960
      %v4476 = vsel %vm4473, %v4443, %v3962
      %v4477 = vsel %vm4473, %v4444, %v3964
      %v4478 = vsel %vm4473, %v4445, %v3966
      %v4479 = vsel %vm4473, %v4446, %v3968
      %v4480 = vsel %vm4473, %v4447, %v3970
      %v4481 = vsel %vm4473, %v4448, %v3972
      %v4482 = vsel %vm4473, %v4449, %v3974
      %v4483 = vsel %vm4473, %v4450, %v3976
      %v4484 = vsel %vm4473, %v4451, %v3978
      %v4485 = vsel %vm4473, %v4452, %v3980
      %v4486 = vsel %vm4473, %v4453, %v3982
      %v4487 = vsel %vm4473, %v4454, %v3984
      %v4488 = vsel %vm4473, %v4455, %v3986
      %v4489 = vsel %vm4473, %v4456, %v3988
      %v4490 = vsel %vm4473, %v4457, %v3990
      %v4491 = vsel %vm4473, %v4458, %v3992
      %v4492 = vsel %vm4473, %v4459, %v3994
      %v4493 = vsel %vm4473, %v4460, %v3996
      %v4494 = vsel %vm4473, %v4461, %v3998
      %v4495 = vsel %vm4473, %v4462, %v4000
      %v4496 = vsel %vm4473, %v4463, %v4002
      %v4497 = vsel %vm4473, %v4464, %v4004
      %v4498 = vsel %vm4473, %v4465, %v4006
      %v4499 = vsel %vm4473, %v4466, %v4008
      %v4500 = vsel %vm4473, %v4467, %v4010
      %v4501 = vsel %vm4473, %v4468, %v4012
      %v4502 = vsel %vm4473, %v4469, %v4014
      %v4503 = vsel %vm4473, %v4470, %v4016
      %v4504 = vsel %vm4473, %v4471, %v4018
      %v4505 = vsel %vm4473, %v4472, %v4020
      %vm4506 = vcmask 457728
      %v4507 = vsel %vm4506, %v4474, %v4086
      %v4508 = vsel %vm4506, %v4475, %v4088
      %v4509 = vsel %vm4506, %v4476, %v4090
      %v4510 = vsel %vm4506, %v4477, %v4092
      %v4511 = vsel %vm4506, %v4478, %v4094
      %v4512 = vsel %vm4506, %v4479, %v4096
      %v4513 = vsel %vm4506, %v4480, %v4098
      %v4514 = vsel %vm4506, %v4481, %v4100
      %v4515 = vsel %vm4506, %v4482, %v4102
      %v4516 = vsel %vm4506, %v4483, %v4104
      %v4517 = vsel %vm4506, %v4484, %v4106
      %v4518 = vsel %vm4506, %v4485, %v4108
      %v4519 = vsel %vm4506, %v4486, %v4110
      %v4520 = vsel %vm4506, %v4487, %v4112
      %v4521 = vsel %vm4506, %v4488, %v4114
      %v4522 = vsel %vm4506, %v4489, %v4116
      %v4523 = vsel %vm4506, %v4490, %v4118
      %v4524 = vsel %vm4506, %v4491, %v4120
      %v4525 = vsel %vm4506, %v4492, %v4122
      %v4526 = vsel %vm4506, %v4493, %v4124
      %v4527 = vsel %vm4506, %v4494, %v4126
      %v4528 = vsel %vm4506, %v4495, %v4128
      %v4529 = vsel %vm4506, %v4496, %v4130
      %v4530 = vsel %vm4506, %v4497, %v4132
      %v4531 = vsel %vm4506, %v4498, %v4134
      %v4532 = vsel %vm4506, %v4499, %v4136
      %v4533 = vsel %vm4506, %v4500, %v4138
      %v4534 = vsel %vm4506, %v4501, %v4140
      %v4535 = vsel %vm4506, %v4502, %v4142
      %v4536 = vsel %vm4506, %v4503, %v4144
      %v4537 = vsel %vm4506, %v4504, %v4146
      %v4538 = vsel %vm4506, %v4505, %v4148
      %vm4539 = vcmask 523264
      %v4540 = vsel %vm4539, %v4507, %v4214
      %v4541 = vsel %vm4539, %v4508, %v4216
      %v4542 = vsel %vm4539, %v4509, %v4218
      %v4543 = vsel %vm4539, %v4510, %v4220
      %v4544 = vsel %vm4539, %v4511, %v4222
      %v4545 = vsel %vm4539, %v4512, %v4224
      %v4546 = vsel %vm4539, %v4513, %v4226
      %v4547 = vsel %vm4539, %v4514, %v4228
      %v4548 = vsel %vm4539, %v4515, %v4230
      %v4549 = vsel %vm4539, %v4516, %v4232
      %v4550 = vsel %vm4539, %v4517, %v4234
      %v4551 = vsel %vm4539, %v4518, %v4236
      %v4552 = vsel %vm4539, %v4519, %v4238
      %v4553 = vsel %vm4539, %v4520, %v4240
      %v4554 = vsel %vm4539, %v4521, %v4242
      %v4555 = vsel %vm4539, %v4522, %v4244
      %v4556 = vsel %vm4539, %v4523, %v4246
      %v4557 = vsel %vm4539, %v4524, %v4248
      %v4558 = vsel %vm4539, %v4525, %v4250
      %v4559 = vsel %vm4539, %v4526, %v4252
      %v4560 = vsel %vm4539, %v4527, %v4254
      %v4561 = vsel %vm4539, %v4528, %v4256
      %v4562 = vsel %vm4539, %v4529, %v4258
      %v4563 = vsel %vm4539, %v4530, %v4260
      %v4564 = vsel %vm4539, %v4531, %v4262
      %v4565 = vsel %vm4539, %v4532, %v4264
      %v4566 = vsel %vm4539, %v4533, %v4266
      %v4567 = vsel %vm4539, %v4534, %v4268
      %v4568 = vsel %vm4539, %v4535, %v4270
      %v4569 = vsel %vm4539, %v4536, %v4272
      %v4570 = vsel %vm4539, %v4537, %v4274
      %v4571 = vsel %vm4539, %v4538, %v4276
      %v4572 = vld [vmem:[%s4] sm:$0xff]
      %v4573 = vld [vmem:[%s4 + $0x8] sm:$0xff]
      %v4574 = vld [vmem:[%s4 + $0x10] sm:$0xff]
      %v4575 = vld [vmem:[%s4 + $0x18] sm:$0xff]
      %v4576 = vld [vmem:[%s4 + $0x20] sm:$0xff]
      %v4577 = vld [vmem:[%s4 + $0x28] sm:$0xff]
      %v4578 = vld [vmem:[%s4 + $0x30] sm:$0xff]
      %v4579 = vld [vmem:[%s4 + $0x38] sm:$0xff]
      %v4580 = vld [vmem:[%s4 + $0x40] sm:$0xff]
      %v4581 = vld [vmem:[%s5] sm:$0x1]
      %v4583 = vlaneseq
      %v4584 = vshrl.u32 %v4583, 7
      %v4585 = vsub.s32 0, %v4584
      %v4586 = vrot.slane %v4581, %v4585
      %vm4588 = vcmask 588800
      %v4590 = vsel %vm4588, %v4540, 0
      %v4593 = vsel %vm4588, %v4541, 0
      %v4596 = vsel %vm4588, %v4542, 0
      %v4599 = vsel %vm4588, %v4543, 0
      %v4602 = vsel %vm4588, %v4544, 0
      %v4605 = vsel %vm4588, %v4545, 0
      %v4608 = vsel %vm4588, %v4546, 0
      %v4611 = vsel %vm4588, %v4547, 0
      %v4614 = vsel %vm4588, %v4548, 0
      %v4617 = vsel %vm4588, %v4549, 0
      %v4620 = vsel %vm4588, %v4550, 0
      %v4623 = vsel %vm4588, %v4551, 0
      %v4626 = vsel %vm4588, %v4552, 0
      %v4629 = vsel %vm4588, %v4553, 0
      %v4632 = vsel %vm4588, %v4554, 0
      %v4635 = vsel %vm4588, %v4555, 0
      %v4638 = vsel %vm4588, %v4556, 0
      %v4641 = vsel %vm4588, %v4557, 0
      %v4644 = vsel %vm4588, %v4558, 0
      %v4647 = vsel %vm4588, %v4559, 0
      %v4650 = vsel %vm4588, %v4560, 0
      %v4653 = vsel %vm4588, %v4561, 0
      %v4656 = vsel %vm4588, %v4562, 0
      %v4659 = vsel %vm4588, %v4563, 0
      %v4662 = vsel %vm4588, %v4564, 0
      %v4665 = vsel %vm4588, %v4565, 0
      %v4668 = vsel %vm4588, %v4566, 0
      %v4671 = vsel %vm4588, %v4567, 0
      %v4674 = vsel %vm4588, %v4568, 0
      %v4677 = vsel %vm4588, %v4569, 0
      %v4680 = vsel %vm4588, %v4570, 0
      %v4683 = vsel %vm4588, %v4571, 0
      %4685 = vmatprep.subr.mxu0 0.0
      %4686 = vmatpush1.msra.mxu0 0.0
      %4687 = vmatprep.subr.mxu0 0.0
      %4688 = vmatpush1.msra.mxu0 0.0
      %4689 = vmatprep.subr.mxu0 0.0
      %4690 = vmatpush1.msra.mxu0 0.0
      %4691 = vmatprep.subr.mxu0 0.0
      %4692 = vmatpush1.msra.mxu0 0.0
      %4693 = vmatprep.subr.mxu0 0.0
      %4694 = vmatpush1.msra.mxu0 0.0
      %4695 = vmatprep.subr.mxu0 0.0
      %4696 = vmatpush1.msra.mxu0 0.0
      %4697 = vmatprep.subr.mxu0 0.0
      %4698 = vmatpush1.msra.mxu0 0.0
      %4699 = vmatprep.subr.mxu0 0.0
      %4700 = vmatpush1.msra.mxu0 %v4580
      %4701 = vmatprep.subr.mxu0 0.0
      %4702 = vmatpush1.msra.mxu0 %v4579
      %4703 = vmatprep.subr.mxu0 0.0
      %4704 = vmatpush1.msra.mxu0 %v4578
      %4705 = vmatprep.subr.mxu0 0.0
      %4706 = vmatpush1.msra.mxu0 %v4577
      %4707 = vmatprep.subr.mxu0 0.0
      %4708 = vmatpush1.msra.mxu0 %v4576
      %4709 = vmatprep.subr.mxu0 0.0
      %4710 = vmatpush1.msra.mxu0 %v4575
      %4711 = vmatprep.subr.mxu0 0.0
      %4712 = vmatpush1.msra.mxu0 %v4574
      %4713 = vmatprep.subr.mxu0 0.0
      %4714 = vmatpush1.msra.mxu0 %v4573
      %4715 = vmatprep.subr.mxu0 0.0
      %4716 = vmatpush1.msra.mxu0 %v4572
      %4717 = vmatprep.subr.mxu0 0.0
      %4718 = vmatpush2.msra.mxu0 0.0
      %4719 = vmatprep.subr.mxu0 0.0
      %4720 = vmatpush2.msra.mxu0 0.0
      %4721 = vmatprep.subr.mxu0 0.0
      %4722 = vmatpush2.msra.mxu0 0.0
      %4723 = vmatprep.subr.mxu0 0.0
      %4724 = vmatpush2.msra.mxu0 0.0
      %4725 = vmatprep.subr.mxu0 0.0
      %4726 = vmatpush2.msra.mxu0 0.0
      %4727 = vmatprep.subr.mxu0 0.0
      %4728 = vmatpush2.msra.mxu0 0.0
      %4729 = vmatprep.subr.mxu0 0.0
      %4730 = vmatpush2.msra.mxu0 0.0
      %4731 = vmatprep.subr.mxu0 0.0
      %4732 = vmatpush2.msra.mxu0 0.0
      %4733 = vmatprep.subr.mxu0 0.0
      %4734 = vmatpush2.msra.mxu0 0.0
      %4735 = vmatprep.subr.mxu0 0.0
      %4736 = vmatpush2.msra.mxu0 0.0
      %4737 = vmatprep.subr.mxu0 0.0
      %4738 = vmatpush2.msra.mxu0 0.0
      %4739 = vmatprep.subr.mxu0 0.0
      %4740 = vmatpush2.msra.mxu0 0.0
      %4741 = vmatprep.subr.mxu0 0.0
      %4742 = vmatpush2.msra.mxu0 0.0
      %4743 = vmatprep.subr.mxu0 0.0
      %4744 = vmatpush2.msra.mxu0 0.0
      %4745 = vmatprep.subr.mxu0 0.0
      %4746 = vmatpush2.msra.mxu0 0.0
      %4747 = vmatprep.subr.mxu0 0.0
      %4748 = vmatpush2.msra.mxu0 0.0
      %4749 = vmatprep.mubr.f32.mxu0 0.0
      %4750 = vmatmul.mubr.f32.gmra.mxu0 %v4590
      %v4751 = vpop.f32.mrf.mxu0
      %v4752 = vadd.f32 %v4586, %v4751
      %v4753 = vpop.f32.mrf.mxu0
      %4754 = vmatprep.mubr.f32.mxu0 0.0
      %4755 = vmatmul.mubr.f32.gmra.mxu0 %v4593
      %v4756 = vpop.f32.mrf.mxu0
      %v4757 = vadd.f32 %v4586, %v4756
      %v4758 = vpop.f32.mrf.mxu0
      %4759 = vmatprep.mubr.f32.mxu0 0.0
      %4760 = vmatmul.mubr.f32.gmra.mxu0 %v4596
      %v4761 = vpop.f32.mrf.mxu0
      %v4762 = vadd.f32 %v4586, %v4761
      %v4763 = vpop.f32.mrf.mxu0
      %4764 = vmatprep.mubr.f32.mxu0 0.0
      %4765 = vmatmul.mubr.f32.gmra.mxu0 %v4599
      %v4766 = vpop.f32.mrf.mxu0
      %v4767 = vadd.f32 %v4586, %v4766
      %v4768 = vpop.f32.mrf.mxu0
      %4769 = vmatprep.mubr.f32.mxu0 0.0
      %4770 = vmatmul.mubr.f32.gmra.mxu0 %v4602
      %v4771 = vpop.f32.mrf.mxu0
      %v4772 = vadd.f32 %v4586, %v4771
      %v4773 = vpop.f32.mrf.mxu0
      %4774 = vmatprep.mubr.f32.mxu0 0.0
      %4775 = vmatmul.mubr.f32.gmra.mxu0 %v4605
      %v4776 = vpop.f32.mrf.mxu0
      %v4777 = vadd.f32 %v4586, %v4776
      %v4778 = vpop.f32.mrf.mxu0
      %4779 = vmatprep.mubr.f32.mxu0 0.0
      %4780 = vmatmul.mubr.f32.gmra.mxu0 %v4608
      %v4781 = vpop.f32.mrf.mxu0
      %v4782 = vadd.f32 %v4586, %v4781
      %v4783 = vpop.f32.mrf.mxu0
      %4784 = vmatprep.mubr.f32.mxu0 0.0
      %4785 = vmatmul.mubr.f32.gmra.mxu0 %v4611
      %v4786 = vpop.f32.mrf.mxu0
      %v4787 = vadd.f32 %v4586, %v4786
      %v4788 = vpop.f32.mrf.mxu0
      %4789 = vmatprep.mubr.f32.mxu0 0.0
      %4790 = vmatmul.mubr.f32.gmra.mxu0 %v4614
      %v4791 = vpop.f32.mrf.mxu0
      %v4792 = vadd.f32 %v4586, %v4791
      %v4793 = vpop.f32.mrf.mxu0
      %4794 = vmatprep.mubr.f32.mxu0 0.0
      %4795 = vmatmul.mubr.f32.gmra.mxu0 %v4617
      %v4796 = vpop.f32.mrf.mxu0
      %v4797 = vadd.f32 %v4586, %v4796
      %v4798 = vpop.f32.mrf.mxu0
      %4799 = vmatprep.mubr.f32.mxu0 0.0
      %4800 = vmatmul.mubr.f32.gmra.mxu0 %v4620
      %v4801 = vpop.f32.mrf.mxu0
      %v4802 = vadd.f32 %v4586, %v4801
      %v4803 = vpop.f32.mrf.mxu0
      %4804 = vmatprep.mubr.f32.mxu0 0.0
      %4805 = vmatmul.mubr.f32.gmra.mxu0 %v4623
      %v4806 = vpop.f32.mrf.mxu0
      %v4807 = vadd.f32 %v4586, %v4806
      %v4808 = vpop.f32.mrf.mxu0
      %4809 = vmatprep.mubr.f32.mxu0 0.0
      %4810 = vmatmul.mubr.f32.gmra.mxu0 %v4626
      %v4811 = vpop.f32.mrf.mxu0
      %v4812 = vadd.f32 %v4586, %v4811
      %v4813 = vpop.f32.mrf.mxu0
      %4814 = vmatprep.mubr.f32.mxu0 0.0
      %4815 = vmatmul.mubr.f32.gmra.mxu0 %v4629
      %v4816 = vpop.f32.mrf.mxu0
      %v4817 = vadd.f32 %v4586, %v4816
      %v4818 = vpop.f32.mrf.mxu0
      %4819 = vmatprep.mubr.f32.mxu0 0.0
      %4820 = vmatmul.mubr.f32.gmra.mxu0 %v4632
      %v4821 = vpop.f32.mrf.mxu0
      %v4822 = vadd.f32 %v4586, %v4821
      %v4823 = vpop.f32.mrf.mxu0
      %4824 = vmatprep.mubr.f32.mxu0 0.0
      %4825 = vmatmul.mubr.f32.gmra.mxu0 %v4635
      %v4826 = vpop.f32.mrf.mxu0
      %v4827 = vadd.f32 %v4586, %v4826
      %v4828 = vpop.f32.mrf.mxu0
      %4829 = vmatprep.mubr.f32.mxu0 0.0
      %4830 = vmatmul.mubr.f32.gmra.mxu0 %v4638
      %v4831 = vpop.f32.mrf.mxu0
      %v4832 = vadd.f32 %v4586, %v4831
      %v4833 = vpop.f32.mrf.mxu0
      %4834 = vmatprep.mubr.f32.mxu0 0.0
      %4835 = vmatmul.mubr.f32.gmra.mxu0 %v4641
      %v4836 = vpop.f32.mrf.mxu0
      %v4837 = vadd.f32 %v4586, %v4836
      %v4838 = vpop.f32.mrf.mxu0
      %4839 = vmatprep.mubr.f32.mxu0 0.0
      %4840 = vmatmul.mubr.f32.gmra.mxu0 %v4644
      %v4841 = vpop.f32.mrf.mxu0
      %v4842 = vadd.f32 %v4586, %v4841
      %v4843 = vpop.f32.mrf.mxu0
      %4844 = vmatprep.mubr.f32.mxu0 0.0
      %4845 = vmatmul.mubr.f32.gmra.mxu0 %v4647
      %v4846 = vpop.f32.mrf.mxu0
      %v4847 = vadd.f32 %v4586, %v4846
      %v4848 = vpop.f32.mrf.mxu0
      %4849 = vmatprep.mubr.f32.mxu0 0.0
      %4850 = vmatmul.mubr.f32.gmra.mxu0 %v4650
      %v4851 = vpop.f32.mrf.mxu0
      %v4852 = vadd.f32 %v4586, %v4851
      %v4853 = vpop.f32.mrf.mxu0
      %4854 = vmatprep.mubr.f32.mxu0 0.0
      %4855 = vmatmul.mubr.f32.gmra.mxu0 %v4653
      %v4856 = vpop.f32.mrf.mxu0
      %v4857 = vadd.f32 %v4586, %v4856
      %v4858 = vpop.f32.mrf.mxu0
      %4859 = vmatprep.mubr.f32.mxu0 0.0
      %4860 = vmatmul.mubr.f32.gmra.mxu0 %v4656
      %v4861 = vpop.f32.mrf.mxu0
      %v4862 = vadd.f32 %v4586, %v4861
      %v4863 = vpop.f32.mrf.mxu0
      %4864 = vmatprep.mubr.f32.mxu0 0.0
      %4865 = vmatmul.mubr.f32.gmra.mxu0 %v4659
      %v4866 = vpop.f32.mrf.mxu0
      %v4867 = vadd.f32 %v4586, %v4866
      %v4868 = vpop.f32.mrf.mxu0
      %4869 = vmatprep.mubr.f32.mxu0 0.0
      %4870 = vmatmul.mubr.f32.gmra.mxu0 %v4662
      %v4871 = vpop.f32.mrf.mxu0
      %v4872 = vadd.f32 %v4586, %v4871
      %v4873 = vpop.f32.mrf.mxu0
      %4874 = vmatprep.mubr.f32.mxu0 0.0
      %4875 = vmatmul.mubr.f32.gmra.mxu0 %v4665
      %v4876 = vpop.f32.mrf.mxu0
      %v4877 = vadd.f32 %v4586, %v4876
      %v4878 = vpop.f32.mrf.mxu0
      %4879 = vmatprep.mubr.f32.mxu0 0.0
      %4880 = vmatmul.mubr.f32.gmra.mxu0 %v4668
      %v4881 = vpop.f32.mrf.mxu0
      %v4882 = vadd.f32 %v4586, %v4881
      %v4883 = vpop.f32.mrf.mxu0
      %4884 = vmatprep.mubr.f32.mxu0 0.0
      %4885 = vmatmul.mubr.f32.gmra.mxu0 %v4671
      %v4886 = vpop.f32.mrf.mxu0
      %v4887 = vadd.f32 %v4586, %v4886
      %v4888 = vpop.f32.mrf.mxu0
      %4889 = vmatprep.mubr.f32.mxu0 0.0
      %4890 = vmatmul.mubr.f32.gmra.mxu0 %v4674
      %v4891 = vpop.f32.mrf.mxu0
      %v4892 = vadd.f32 %v4586, %v4891
      %v4893 = vpop.f32.mrf.mxu0
      %4894 = vmatprep.mubr.f32.mxu0 0.0
      %4895 = vmatmul.mubr.f32.gmra.mxu0 %v4677
      %v4896 = vpop.f32.mrf.mxu0
      %v4897 = vadd.f32 %v4586, %v4896
      %v4898 = vpop.f32.mrf.mxu0
      %4899 = vmatprep.mubr.f32.mxu0 0.0
      %4900 = vmatmul.mubr.f32.gmra.mxu0 %v4680
      %v4901 = vpop.f32.mrf.mxu0
      %v4902 = vadd.f32 %v4586, %v4901
      %v4903 = vpop.f32.mrf.mxu0
      %4904 = vmatprep.mubr.f32.mxu0 0.0
      %4905 = vmatmul.mubr.f32.gmra.mxu0 %v4683
      %v4906 = vpop.f32.mrf.mxu0
      %v4907 = vadd.f32 %v4586, %v4906
      %v4908 = vpop.f32.mrf.mxu0
      %4909 = vdwg.mxu0
      %v4910 = vmax.f32 %v4752, 0.0
      %v4911 = vmax.f32 %v4757, 0.0
      %v4912 = vmax.f32 %v4762, 0.0
      %v4913 = vmax.f32 %v4767, 0.0
      %v4914 = vmax.f32 %v4772, 0.0
      %v4915 = vmax.f32 %v4777, 0.0
      %v4916 = vmax.f32 %v4782, 0.0
      %v4917 = vmax.f32 %v4787, 0.0
      %v4918 = vmax.f32 %v4792, 0.0
      %v4919 = vmax.f32 %v4797, 0.0
      %v4920 = vmax.f32 %v4802, 0.0
      %v4921 = vmax.f32 %v4807, 0.0
      %v4922 = vmax.f32 %v4812, 0.0
      %v4923 = vmax.f32 %v4817, 0.0
      %v4924 = vmax.f32 %v4822, 0.0
      %v4925 = vmax.f32 %v4827, 0.0
      %v4926 = vmax.f32 %v4832, 0.0
      %v4927 = vmax.f32 %v4837, 0.0
      %v4928 = vmax.f32 %v4842, 0.0
      %v4929 = vmax.f32 %v4847, 0.0
      %v4930 = vmax.f32 %v4852, 0.0
      %v4931 = vmax.f32 %v4857, 0.0
      %v4932 = vmax.f32 %v4862, 0.0
      %v4933 = vmax.f32 %v4867, 0.0
      %v4934 = vmax.f32 %v4872, 0.0
      %v4935 = vmax.f32 %v4877, 0.0
      %v4936 = vmax.f32 %v4882, 0.0
      %v4937 = vmax.f32 %v4887, 0.0
      %v4938 = vmax.f32 %v4892, 0.0
      %v4939 = vmax.f32 %v4897, 0.0
      %v4940 = vmax.f32 %v4902, 0.0
      %v4941 = vmax.f32 %v4907, 0.0
      %4942 = vst.msk [vmem:[%s271] sm:$0xff] %vm2963, %v4910
      %4943 = vst.msk [vmem:[%s271 + $0x8] sm:$0xff] %vm2963, %v4911
      %4944 = vst.msk [vmem:[%s271 + $0x10] sm:$0xff] %vm2963, %v4912
      %4945 = vst.msk [vmem:[%s271 + $0x18] sm:$0xff] %vm2963, %v4913
      %4946 = vst.msk [vmem:[%s271 + $0x20] sm:$0xff] %vm2963, %v4914
      %4947 = vst.msk [vmem:[%s271 + $0x28] sm:$0xff] %vm2963, %v4915
      %4948 = vst.msk [vmem:[%s271 + $0x30] sm:$0xff] %vm2963, %v4916
      %4949 = vst.msk [vmem:[%s271 + $0x38] sm:$0xff] %vm2963, %v4917
      %4950 = vst.msk [vmem:[%s271 + $0x40] sm:$0xff] %vm2963, %v4918
      %4951 = vst.msk [vmem:[%s271 + $0x48] sm:$0xff] %vm2963, %v4919
      %4952 = vst.msk [vmem:[%s271 + $0x50] sm:$0xff] %vm2963, %v4920
      %4953 = vst.msk [vmem:[%s271 + $0x58] sm:$0xff] %vm2963, %v4921
      %4954 = vst.msk [vmem:[%s271 + $0x60] sm:$0xff] %vm2963, %v4922
      %4955 = vst.msk [vmem:[%s271 + $0x68] sm:$0xff] %vm2963, %v4923
      %4956 = vst.msk [vmem:[%s271 + $0x70] sm:$0xff] %vm2963, %v4924
      %4957 = vst.msk [vmem:[%s271 + $0x78] sm:$0xff] %vm2963, %v4925
      %4958 = vst.msk [vmem:[%s271 + $0x80] sm:$0xff] %vm2963, %v4926
      %4959 = vst.msk [vmem:[%s271 + $0x88] sm:$0xff] %vm2963, %v4927
      %4960 = vst.msk [vmem:[%s271 + $0x90] sm:$0xff] %vm2963, %v4928
      %4961 = vst.msk [vmem:[%s271 + $0x98] sm:$0xff] %vm2963, %v4929
      %4962 = vst.msk [vmem:[%s271 + $0xa0] sm:$0xff] %vm2963, %v4930
      %4963 = vst.msk [vmem:[%s271 + $0xa8] sm:$0xff] %vm2963, %v4931
      %4964 = vst.msk [vmem:[%s271 + $0xb0] sm:$0xff] %vm2963, %v4932
      %4965 = vst.msk [vmem:[%s271 + $0xb8] sm:$0xff] %vm2963, %v4933
      %4966 = vst.msk [vmem:[%s271 + $0xc0] sm:$0xff] %vm2963, %v4934
      %4967 = vst.msk [vmem:[%s271 + $0xc8] sm:$0xff] %vm2963, %v4935
      %4968 = vst.msk [vmem:[%s271 + $0xd0] sm:$0xff] %vm2963, %v4936
      %4969 = vst.msk [vmem:[%s271 + $0xd8] sm:$0xff] %vm2963, %v4937
      %4970 = vst.msk [vmem:[%s271 + $0xe0] sm:$0xff] %vm2963, %v4938
      %4971 = vst.msk [vmem:[%s271 + $0xe8] sm:$0xff] %vm2963, %v4939
      %4972 = vst.msk [vmem:[%s271 + $0xf0] sm:$0xff] %vm2963, %v4940
      %4973 = vst.msk [vmem:[%s271 + $0xf8] sm:$0xff] %vm2963, %v4941
      %p4974 = scmp.lt.s32.totalorder %s17, 1
      %s4975 = scalar_select %p4974, %s17, 1
      %s4976 = smul.addr %s4975, 32
      %s4977 = smul.addr %s4976, 8
      %s4978 = scalar_lea.vmem %s6, %s4977
      // Predicated region
      $region49: #{tpu_custom_call.1} parent=43 // pred_check
        %p4979 = pneg %p171
      $region50: #{tpu_custom_call.1} parent=43 // pred_check_branch
        %4981 = sbr.rel (%p4979) target = $region52
      $region51: #{tpu_custom_call.1} parent=43 // pred_region
        _
      $region52: #{tpu_custom_call.1} parent=43 // pred_fallthru
        _
    $region44: #{tpu_custom_call.1} parent=5 // pred_fallthru
      _
    %p4982 = scmp.le.s32.totalorder 2, %s12
    // Predicated region
    $region53: #{tpu_custom_call.1} parent=5 // pred_check
      %p4983 = pneg %p4982
    $region54: #{tpu_custom_call.1} parent=5 // pred_check_branch
      %4985 = sbr.rel (%p4983) target = $region56
    $region55: #{tpu_custom_call.1} parent=5 // pred_region
      %s4986 = ssub.s32 %s12, 2
      // Predicated region
      $region57: #{tpu_custom_call.1} parent=55 // pred_check
        %p4987 = pneg %p177
      $region58: #{tpu_custom_call.1} parent=55 // pred_check_branch
        %4989 = sbr.rel (%p4987) target = $region60
      $region59: #{tpu_custom_call.1} parent=55 // pred_region
        %p4990 = scmp.lt.s32.totalorder %s18, 1
        %s4991 = scalar_select %p4990, %s18, 1
        %s4992 = smul.addr %s4991, 32
        %s4993 = smul.addr %s4992, 8
        %s4994 = scalar_lea.vmem %s6, %s4993
      $region60: #{tpu_custom_call.1} parent=55 // pred_fallthru
        _
    $region56: #{tpu_custom_call.1} parent=5 // pred_fallthru
      _
  $region6: #{tpu_custom_call.1} parent=0 // loop_footer
    %s16 = sadd.s32 1, %s12
  $region7: #{tpu_custom_call.1} parent=0 // loop_footer_branch
    %11 = sbr.rel target = $region3
  $region8: #{tpu_custom_call.1} parent=0 // loop_exit
    _

</llo_original>
